<compile_context>
chip_gen: v7x
topology: tpu7x:2x2x1
jax: 0.10.0
libtpu: 0.0.40
codegen_flags: <defaults>
</compile_context>

<pallas_src>
import numpy as np
import jax
import jax.numpy as jnp
from jax.experimental import pallas as pl
from jax.experimental.pallas import tpu as pltpu

# ----- small config consistent with NBeatsNet(default stacks) -----
STACK_TYPES = ("trend", "seasonality")
NB_BLOCKS_PER_STACK = 3
BACKCAST_LEN = 16          # backcast_length (small demo size)
FORECAST_LEN = 8           # forecast_length
TOTAL_LEN = BACKCAST_LEN + FORECAST_LEN
UNITS = 32                 # hidden_layer_units
THETAS_DIMS = (4, 8)       # trend thetas_dim must be <= 4; seasonality uses forecast_length
THETA_MAX = max(THETAS_DIMS[0], FORECAST_LEN)
NUM_BLOCKS = len(STACK_TYPES) * NB_BLOCKS_PER_STACK

BATCH = 512                # demo batch: 2 lane-dense tiles of 256
TILE_B = 256               # multiple of 128; keep <= ~512 with the fully-unrolled body


# ---------------- basis construction (host-side, deterministic) ----------------
def linspace_np(backcast_length, forecast_length):
    lin = np.linspace(-backcast_length, forecast_length, backcast_length + forecast_length)
    return lin[:backcast_length], lin[backcast_length:]


def trend_basis(t, p, theta_max):
    T = np.stack([t ** i for i in range(p)]).astype(np.float32)        # (p, len(t))
    out = np.zeros((theta_max, len(t)), np.float32)
    out[:p] = T
    return out


def seasonality_basis(t, p, theta_max):
    p1, p2 = (p // 2, p // 2) if p % 2 == 0 else (p // 2, p // 2 + 1)
    s1 = np.stack([np.cos(2 * np.pi * i * t) for i in range(p1)])
    s2 = np.stack([np.sin(2 * np.pi * i * t) for i in range(p2)])
    S = np.concatenate([s1, s2]).astype(np.float32)                    # (p, len(t))
    out = np.zeros((theta_max, len(t)), np.float32)
    out[:p] = S
    return out


# ---------------- deterministic synthetic parameters (raw, torch-like layout) ----------------
def init_params(key):
    b_ls, f_ls = linspace_np(BACKCAST_LEN, FORECAST_LEN)

    W1s, B1s, W2s, B2s, W3s, B3s, W4s, B4s, WTs, BBFs = ([] for _ in range(10))
    keys = jax.random.split(key, NUM_BLOCKS * 9)
    ki = 0

    def nrm(shape):
        nonlocal ki
        w = 0.05 * jax.random.normal(keys[ki], shape, dtype=jnp.float32)
        ki += 1
        return w

    for stack_id, stype in enumerate(STACK_TYPES):
        if stype == "trend":
            tdim = THETAS_DIMS[stack_id]
            bb = trend_basis(b_ls, tdim, THETA_MAX)
            bf = trend_basis(f_ls, tdim, THETA_MAX)
        else:  # seasonality (nb_harmonics=None => thetas_dim == forecast_length)
            tdim = FORECAST_LEN
            bb = seasonality_basis(b_ls, tdim, THETA_MAX)
            bf = seasonality_basis(f_ls, tdim, THETA_MAX)

        theta_mask = jnp.asarray((np.arange(THETA_MAX) < tdim).astype(np.float32))
        bbf = np.concatenate([bb, bf], axis=1).astype(np.float32)      # (THETA_MAX, Lb+Lf)

        for _ in range(NB_BLOCKS_PER_STACK):  # share_weights_in_stack=False -> fresh weights
            W1s.append(nrm((BACKCAST_LEN, UNITS))); B1s.append(nrm((UNITS,)))
            W2s.append(nrm((UNITS, UNITS)));        B2s.append(nrm((UNITS,)))
            W3s.append(nrm((UNITS, UNITS)));        B3s.append(nrm((UNITS,)))
            W4s.append(nrm((UNITS, UNITS)));        B4s.append(nrm((UNITS,)))
            # theta_b_fc == theta_f_fc (share_thetas=True), no bias; unused cols zeroed.
            WTs.append(nrm((UNITS, THETA_MAX)) * theta_mask[None, :])
            BBFs.append(jnp.asarray(bbf))

    stack = lambda lst: jnp.stack(lst, axis=0)
    return (stack(W1s), stack(B1s), stack(W2s), stack(B2s), stack(W3s), stack(B3s),
            stack(W4s), stack(B4s), stack(WTs), stack(BBFs))


# ---------------- host-side packing: fold WT@BBF (+sign), transpose, cast ----------------
def pack_params(raw):
    (W1, B1, W2, B2, W3, B3, W4, B4, WT, BBF) = raw
    # Transposed (out, in) weights for the batch-in-lanes layout, bf16 MXU operands.
    W1T = jnp.transpose(W1, (0, 2, 1)).astype(jnp.bfloat16)                    # (NB, U, Lb)
    W234T = jnp.stack([jnp.transpose(W2, (0, 2, 1)),
                       jnp.transpose(W3, (0, 2, 1)),
                       jnp.transpose(W4, (0, 2, 1))], axis=1).astype(jnp.bfloat16)  # (NB,3,U,U)
    BST = jnp.stack([B1, B2, B3, B4], axis=1)[..., None].astype(jnp.float32)   # (NB, 4, U, 1)
    # Exact algebraic fold: theta @ BBF == h @ (WT @ BBF). Also fold the backcast "-"
    # sign into the first Lb rows so the residual update is a single add.
    WBF = jnp.einsum("nut,ntl->nul", WT, BBF)                                  # (NB, U, Lb+Lf)
    sign = jnp.concatenate([-jnp.ones((BACKCAST_LEN,), jnp.float32),
                            jnp.ones((FORECAST_LEN,), jnp.float32)])
    WBFT = (jnp.transpose(WBF, (0, 2, 1)) * sign[None, :, None]).astype(jnp.bfloat16)  # (NB,Lb+Lf,U)
    return W1T, W234T, BST, WBFT


# ---------------- Pallas kernel: all N-BEATS blocks fused, one grid step per batch tile ----------------
def nbeats_kernel(x_ref, w1_ref, w234_ref, b_ref, wbf_ref, out_ref):
    # x_ref / out_ref: (Lb+Lf, tile_b) f32, batch mapped to lanes.
    # Rows [0:Lb] carry the residual backcast, rows [Lb:] the accumulated forecast
    # (forecast rows arrive pre-zeroed from the host-side padding).
    state = x_ref[...]

    # Statically unrolled over the 6 blocks; state and h live in vregs.
    for i in range(NUM_BLOCKS):
        h = jnp.dot(w1_ref[i], state[:BACKCAST_LEN, :].astype(jnp.bfloat16),
                    preferred_element_type=jnp.float32) + b_ref[i, 0]
        h = jnp.maximum(h, 0.0)
        for j in range(3):
            h = jnp.maximum(
                jnp.dot(w234_ref[i, j], h.astype(jnp.bfloat16),
                        preferred_element_type=jnp.float32) + b_ref[i, j + 1], 0.0)
        # Fused (backcast|forecast) projection; sign already folded into wbf.
        state = state + jnp.dot(wbf_ref[i], h.astype(jnp.bfloat16),
                                preferred_element_type=jnp.float32)

    out_ref[...] = state   # single lane-dense store; host splits/transposes


def nbeats_forward(x, packed, tile_b=TILE_B):
    W1T, W234T, BST, WBFT = packed
    B = x.shape[0]
    n_tiles = pl.cdiv(B, tile_b)
    B_pad = n_tiles * tile_b

    # Batch-in-lanes input, pre-padded with zero forecast rows (and zero tail columns
    # for ragged batches).
    xT = jnp.zeros((TOTAL_LEN, B_pad), jnp.float32)
    xT = xT.at[:BACKCAST_LEN, :B].set(x.T)

    def whole(arr):
        nd = arr.ndim
        # Full array as one block, constant index_map => fetched once, VMEM-resident.
        return pl.BlockSpec(arr.shape, lambda b, _nd=nd: (0,) * _nd)

    out = pl.pallas_call(
        nbeats_kernel,
        out_shape=jax.ShapeDtypeStruct((TOTAL_LEN, B_pad), jnp.float32),
        grid_spec=pltpu.PrefetchScalarGridSpec(
            num_scalar_prefetch=0,
            grid=(n_tiles,),
            in_specs=[pl.BlockSpec((TOTAL_LEN, tile_b), lambda b: (0, b)),
                      whole(W1T), whole(W234T), whole(BST), whole(WBFT)],
            out_specs=pl.BlockSpec((TOTAL_LEN, tile_b), lambda b: (0, b)),
        ),
        compiler_params=pltpu.CompilerParams(
            # Batch tiles are independent -> shards across the two TensorCores on v7x.
            dimension_semantics=("parallel",)),
    )(xT, W1T, W234T, BST, WBFT)

    return out[:BACKCAST_LEN, :B].T, out[BACKCAST_LEN:, :B].T


# ---------------- references ----------------
def nbeats_ref_f32(x, raw):
    """Pure-f32, unfused reference mirroring the PyTorch forward."""
    (W1, B1, W2, B2, W3, B3, W4, B4, WT, BBF) = raw
    backcast = x
    forecast = jnp.zeros((x.shape[0], FORECAST_LEN), jnp.float32)
    for i in range(NUM_BLOCKS):
        h = jax.nn.relu(backcast @ W1[i] + B1[i])
        h = jax.nn.relu(h @ W2[i] + B2[i])
        h = jax.nn.relu(h @ W3[i] + B3[i])
        h = jax.nn.relu(h @ W4[i] + B4[i])
        theta = h @ WT[i]
        bf = theta @ BBF[i]
        backcast = backcast - bf[:, :BACKCAST_LEN]
        forecast = forecast + bf[:, BACKCAST_LEN:]
    return backcast, forecast


def nbeats_ref_bf16(x, packed):
    """Mirror of the kernel math (folded basis, bf16 MXU operands, f32 accumulation)."""
    W1T, W234T, BST, WBFT = packed
    state = jnp.concatenate(
        [x, jnp.zeros((x.shape[0], FORECAST_LEN), jnp.float32)], axis=1)      # (B, Lb+Lf)
    for i in range(NUM_BLOCKS):
        h = jnp.dot(state[:, :BACKCAST_LEN].astype(jnp.bfloat16), W1T[i].T,
                    preferred_element_type=jnp.float32) + BST[i, 0, :, 0]
        h = jnp.maximum(h, 0.0)
        for j in range(3):
            h = jnp.maximum(
                jnp.dot(h.astype(jnp.bfloat16), W234T[i, j].T,
                        preferred_element_type=jnp.float32) + BST[i, j + 1, :, 0], 0.0)
        state = state + jnp.dot(h.astype(jnp.bfloat16), WBFT[i].T,
                                preferred_element_type=jnp.float32)
    return state[:, :BACKCAST_LEN], state[:, BACKCAST_LEN:]

# TODO(synk): GenericBlock path (relu'd thetas + separate backcast_fc/forecast_fc with bias)
# is not exercised by the default stack config (trend, seasonality) and is omitted.


if __name__ == "__main__":
    key = jax.random.PRNGKey(0)
    pkey, xkey = jax.random.split(key)
    raw = init_params(pkey)
    packed = pack_params(raw)
    x = jax.random.normal(xkey, (BATCH, BACKCAST_LEN), dtype=jnp.float32)

    b_out, f_out = nbeats_forward(x, packed, tile_b=TILE_B)
    b_out = jax.block_until_ready(b_out)
    f_out = jax.block_until_ready(f_out)

    mb, mf = nbeats_ref_bf16(x, packed)     # same math as kernel
    rb, rf = nbeats_ref_f32(x, raw)         # full-precision, unfused reference

    def rel_err(a, b):
        return float(jnp.max(jnp.abs(a - b)) / (jnp.max(jnp.abs(b)) + 1e-6))

    assert rel_err(b_out, mb) < 2e-3, "backcast mismatch vs bf16 mirror reference"
    assert rel_err(f_out, mf) < 2e-3, "forecast mismatch vs bf16 mirror reference"
    assert rel_err(b_out, rb) < 5e-2, "backcast drift vs f32 reference too large"
    assert rel_err(f_out, rf) < 5e-2, "forecast drift vs f32 reference too large"

    print("KERNEL_OK")
</pallas_src>

<mosaic_0001>
module attributes {stable_mosaic.version = 11 : i64} {
  func.func @nbeats_kernel(%arg0: i32, %arg1: memref<24x256xf32, #tpu.memory_space<vmem>>, %arg2: memref<6x32x16xbf16, #tpu.memory_space<vmem>>, %arg3: memref<6x3x32x32xbf16, #tpu.memory_space<vmem>>, %arg4: memref<6x4x32x1xf32, #tpu.memory_space<vmem>>, %arg5: memref<6x24x32xbf16, #tpu.memory_space<vmem>>, %arg6: memref<24x256xf32, #tpu.memory_space<vmem>>) attributes {dimension_semantics = [#tpu.dimension_semantics<parallel>], iteration_bounds = array<i64: 2>, scalar_prefetch = 0 : i64, scratch_operands = 0 : i64, tpu.core_type = #tpu.core_type<tc>, window_params = [{transform_indices = @transform_0, window_bounds = array<i64: 24, 256>}, {pipeline_mode = #tpu.pipeline_mode<synchronous>, transform_indices = @transform_1, window_bounds = array<i64: 6, 32, 16>}, {pipeline_mode = #tpu.pipeline_mode<synchronous>, transform_indices = @transform_2, window_bounds = array<i64: 6, 3, 32, 32>}, {pipeline_mode = #tpu.pipeline_mode<synchronous>, transform_indices = @transform_3, window_bounds = array<i64: 6, 4, 32, 1>}, {pipeline_mode = #tpu.pipeline_mode<synchronous>, transform_indices = @transform_4, window_bounds = array<i64: 6, 24, 32>}, {transform_indices = @transform_5, window_bounds = array<i64: 24, 256>}]} {
    %c0 = arith.constant 0 : index
    %c0_0 = arith.constant 0 : index
    %0 = vector.load %arg1[%c0, %c0_0] : memref<24x256xf32, #tpu.memory_space<vmem>>, vector<24x256xf32>
    %c0_1 = arith.constant 0 : index
    %c0_2 = arith.constant 0 : index
    %c0_3 = arith.constant 0 : index
    %1 = vector.load %arg2[%c0_1, %c0_2, %c0_3] : memref<6x32x16xbf16, #tpu.memory_space<vmem>>, vector<1x32x16xbf16>
    %2 = vector.shape_cast %1 : vector<1x32x16xbf16> to vector<32x16xbf16>
    %3 = vector.extract_strided_slice %0 {offsets = [0, 0], sizes = [16, 256], strides = [1, 1]} : vector<24x256xf32> to vector<16x256xf32>
    %4 = arith.truncf %3 : vector<16x256xf32> to vector<16x256xbf16>
    %cst = arith.constant dense<0.000000e+00> : vector<32x256xf32>
    %5 = tpu.matmul %2, %4, %cst {dimension_numbers = #tpu.dot_dimension_numbers<[1], [0], [0], [1], [0, 0, 1, 1], [], []>} : vector<32x16xbf16>, vector<16x256xbf16>, vector<32x256xf32> -> vector<32x256xf32>
    %c0_4 = arith.constant 0 : index
    %c0_5 = arith.constant 0 : index
    %c0_6 = arith.constant 0 : index
    %c0_7 = arith.constant 0 : index
    %6 = vector.load %arg4[%c0_4, %c0_5, %c0_6, %c0_7] : memref<6x4x32x1xf32, #tpu.memory_space<vmem>>, vector<1x1x32x1xf32>
    %7 = vector.shape_cast %6 : vector<1x1x32x1xf32> to vector<32x1xf32>
    %8 = vector.broadcast %7 : vector<32x1xf32> to vector<32x256xf32>
    %9 = arith.addf %5, %8 : vector<32x256xf32>
    %cst_8 = arith.constant 0.000000e+00 : f32
    %10 = vector.broadcast %cst_8 : f32 to vector<32x256xf32>
    %11 = arith.maximumf %9, %10 : vector<32x256xf32>
    %c0_9 = arith.constant 0 : index
    %c0_10 = arith.constant 0 : index
    %c0_11 = arith.constant 0 : index
    %c0_12 = arith.constant 0 : index
    %12 = vector.load %arg3[%c0_9, %c0_10, %c0_11, %c0_12] : memref<6x3x32x32xbf16, #tpu.memory_space<vmem>>, vector<1x1x32x32xbf16>
    %13 = vector.shape_cast %12 : vector<1x1x32x32xbf16> to vector<32x32xbf16>
    %14 = arith.truncf %11 : vector<32x256xf32> to vector<32x256xbf16>
    %cst_13 = arith.constant dense<0.000000e+00> : vector<32x256xf32>
    %15 = tpu.matmul %13, %14, %cst_13 {dimension_numbers = #tpu.dot_dimension_numbers<[1], [0], [0], [1], [0, 0, 1, 1], [], []>} : vector<32x32xbf16>, vector<32x256xbf16>, vector<32x256xf32> -> vector<32x256xf32>
    %c0_14 = arith.constant 0 : index
    %c1 = arith.constant 1 : index
    %c0_15 = arith.constant 0 : index
    %c0_16 = arith.constant 0 : index
    %16 = vector.load %arg4[%c0_14, %c1, %c0_15, %c0_16] : memref<6x4x32x1xf32, #tpu.memory_space<vmem>>, vector<1x1x32x1xf32>
    %17 = vector.shape_cast %16 : vector<1x1x32x1xf32> to vector<32x1xf32>
    %18 = vector.broadcast %17 : vector<32x1xf32> to vector<32x256xf32>
    %19 = arith.addf %15, %18 : vector<32x256xf32>
    %cst_17 = arith.constant 0.000000e+00 : f32
    %20 = vector.broadcast %cst_17 : f32 to vector<32x256xf32>
    %21 = arith.maximumf %19, %20 : vector<32x256xf32>
    %c0_18 = arith.constant 0 : index
    %c1_19 = arith.constant 1 : index
    %c0_20 = arith.constant 0 : index
    %c0_21 = arith.constant 0 : index
    %22 = vector.load %arg3[%c0_18, %c1_19, %c0_20, %c0_21] : memref<6x3x32x32xbf16, #tpu.memory_space<vmem>>, vector<1x1x32x32xbf16>
    %23 = vector.shape_cast %22 : vector<1x1x32x32xbf16> to vector<32x32xbf16>
    %24 = arith.truncf %21 : vector<32x256xf32> to vector<32x256xbf16>
    %cst_22 = arith.constant dense<0.000000e+00> : vector<32x256xf32>
    %25 = tpu.matmul %23, %24, %cst_22 {dimension_numbers = #tpu.dot_dimension_numbers<[1], [0], [0], [1], [0, 0, 1, 1], [], []>} : vector<32x32xbf16>, vector<32x256xbf16>, vector<32x256xf32> -> vector<32x256xf32>
    %c0_23 = arith.constant 0 : index
    %c2 = arith.constant 2 : index
    %c0_24 = arith.constant 0 : index
    %c0_25 = arith.constant 0 : index
    %26 = vector.load %arg4[%c0_23, %c2, %c0_24, %c0_25] : memref<6x4x32x1xf32, #tpu.memory_space<vmem>>, vector<1x1x32x1xf32>
    %27 = vector.shape_cast %26 : vector<1x1x32x1xf32> to vector<32x1xf32>
    %28 = vector.broadcast %27 : vector<32x1xf32> to vector<32x256xf32>
    %29 = arith.addf %25, %28 : vector<32x256xf32>
    %cst_26 = arith.constant 0.000000e+00 : f32
    %30 = vector.broadcast %cst_26 : f32 to vector<32x256xf32>
    %31 = arith.maximumf %29, %30 : vector<32x256xf32>
    %c0_27 = arith.constant 0 : index
    %c2_28 = arith.constant 2 : index
    %c0_29 = arith.constant 0 : index
    %c0_30 = arith.constant 0 : index
    %32 = vector.load %arg3[%c0_27, %c2_28, %c0_29, %c0_30] : memref<6x3x32x32xbf16, #tpu.memory_space<vmem>>, vector<1x1x32x32xbf16>
    %33 = vector.shape_cast %32 : vector<1x1x32x32xbf16> to vector<32x32xbf16>
    %34 = arith.truncf %31 : vector<32x256xf32> to vector<32x256xbf16>
    %cst_31 = arith.constant dense<0.000000e+00> : vector<32x256xf32>
    %35 = tpu.matmul %33, %34, %cst_31 {dimension_numbers = #tpu.dot_dimension_numbers<[1], [0], [0], [1], [0, 0, 1, 1], [], []>} : vector<32x32xbf16>, vector<32x256xbf16>, vector<32x256xf32> -> vector<32x256xf32>
    %c0_32 = arith.constant 0 : index
    %c3 = arith.constant 3 : index
    %c0_33 = arith.constant 0 : index
    %c0_34 = arith.constant 0 : index
    %36 = vector.load %arg4[%c0_32, %c3, %c0_33, %c0_34] : memref<6x4x32x1xf32, #tpu.memory_space<vmem>>, vector<1x1x32x1xf32>
    %37 = vector.shape_cast %36 : vector<1x1x32x1xf32> to vector<32x1xf32>
    %38 = vector.broadcast %37 : vector<32x1xf32> to vector<32x256xf32>
    %39 = arith.addf %35, %38 : vector<32x256xf32>
    %cst_35 = arith.constant 0.000000e+00 : f32
    %40 = vector.broadcast %cst_35 : f32 to vector<32x256xf32>
    %41 = arith.maximumf %39, %40 : vector<32x256xf32>
    %c0_36 = arith.constant 0 : index
    %c0_37 = arith.constant 0 : index
    %c0_38 = arith.constant 0 : index
    %42 = vector.load %arg5[%c0_36, %c0_37, %c0_38] : memref<6x24x32xbf16, #tpu.memory_space<vmem>>, vector<1x24x32xbf16>
    %43 = vector.shape_cast %42 : vector<1x24x32xbf16> to vector<24x32xbf16>
    %44 = arith.truncf %41 : vector<32x256xf32> to vector<32x256xbf16>
    %cst_39 = arith.constant dense<0.000000e+00> : vector<24x256xf32>
    %45 = tpu.matmul %43, %44, %cst_39 {dimension_numbers = #tpu.dot_dimension_numbers<[1], [0], [0], [1], [0, 0, 1, 1], [], []>} : vector<24x32xbf16>, vector<32x256xbf16>, vector<24x256xf32> -> vector<24x256xf32>
    %46 = arith.addf %0, %45 : vector<24x256xf32>
    %c1_40 = arith.constant 1 : index
    %c0_41 = arith.constant 0 : index
    %c0_42 = arith.constant 0 : index
    %47 = vector.load %arg2[%c1_40, %c0_41, %c0_42] : memref<6x32x16xbf16, #tpu.memory_space<vmem>>, vector<1x32x16xbf16>
    %48 = vector.shape_cast %47 : vector<1x32x16xbf16> to vector<32x16xbf16>
    %49 = vector.extract_strided_slice %46 {offsets = [0, 0], sizes = [16, 256], strides = [1, 1]} : vector<24x256xf32> to vector<16x256xf32>
    %50 = arith.truncf %49 : vector<16x256xf32> to vector<16x256xbf16>
    %cst_43 = arith.constant dense<0.000000e+00> : vector<32x256xf32>
    %51 = tpu.matmul %48, %50, %cst_43 {dimension_numbers = #tpu.dot_dimension_numbers<[1], [0], [0], [1], [0, 0, 1, 1], [], []>} : vector<32x16xbf16>, vector<16x256xbf16>, vector<32x256xf32> -> vector<32x256xf32>
    %c1_44 = arith.constant 1 : index
    %c0_45 = arith.constant 0 : index
    %c0_46 = arith.constant 0 : index
    %c0_47 = arith.constant 0 : index
    %52 = vector.load %arg4[%c1_44, %c0_45, %c0_46, %c0_47] : memref<6x4x32x1xf32, #tpu.memory_space<vmem>>, vector<1x1x32x1xf32>
    %53 = vector.shape_cast %52 : vector<1x1x32x1xf32> to vector<32x1xf32>
    %54 = vector.broadcast %53 : vector<32x1xf32> to vector<32x256xf32>
    %55 = arith.addf %51, %54 : vector<32x256xf32>
    %cst_48 = arith.constant 0.000000e+00 : f32
    %56 = vector.broadcast %cst_48 : f32 to vector<32x256xf32>
    %57 = arith.maximumf %55, %56 : vector<32x256xf32>
    %c1_49 = arith.constant 1 : index
    %c0_50 = arith.constant 0 : index
    %c0_51 = arith.constant 0 : index
    %c0_52 = arith.constant 0 : index
    %58 = vector.load %arg3[%c1_49, %c0_50, %c0_51, %c0_52] : memref<6x3x32x32xbf16, #tpu.memory_space<vmem>>, vector<1x1x32x32xbf16>
    %59 = vector.shape_cast %58 : vector<1x1x32x32xbf16> to vector<32x32xbf16>
    %60 = arith.truncf %57 : vector<32x256xf32> to vector<32x256xbf16>
    %cst_53 = arith.constant dense<0.000000e+00> : vector<32x256xf32>
    %61 = tpu.matmul %59, %60, %cst_53 {dimension_numbers = #tpu.dot_dimension_numbers<[1], [0], [0], [1], [0, 0, 1, 1], [], []>} : vector<32x32xbf16>, vector<32x256xbf16>, vector<32x256xf32> -> vector<32x256xf32>
    %c1_54 = arith.constant 1 : index
    %c1_55 = arith.constant 1 : index
    %c0_56 = arith.constant 0 : index
    %c0_57 = arith.constant 0 : index
    %62 = vector.load %arg4[%c1_54, %c1_55, %c0_56, %c0_57] : memref<6x4x32x1xf32, #tpu.memory_space<vmem>>, vector<1x1x32x1xf32>
    %63 = vector.shape_cast %62 : vector<1x1x32x1xf32> to vector<32x1xf32>
    %64 = vector.broadcast %63 : vector<32x1xf32> to vector<32x256xf32>
    %65 = arith.addf %61, %64 : vector<32x256xf32>
    %cst_58 = arith.constant 0.000000e+00 : f32
    %66 = vector.broadcast %cst_58 : f32 to vector<32x256xf32>
    %67 = arith.maximumf %65, %66 : vector<32x256xf32>
    %c1_59 = arith.constant 1 : index
    %c1_60 = arith.constant 1 : index
    %c0_61 = arith.constant 0 : index
    %c0_62 = arith.constant 0 : index
    %68 = vector.load %arg3[%c1_59, %c1_60, %c0_61, %c0_62] : memref<6x3x32x32xbf16, #tpu.memory_space<vmem>>, vector<1x1x32x32xbf16>
    %69 = vector.shape_cast %68 : vector<1x1x32x32xbf16> to vector<32x32xbf16>
    %70 = arith.truncf %67 : vector<32x256xf32> to vector<32x256xbf16>
    %cst_63 = arith.constant dense<0.000000e+00> : vector<32x256xf32>
    %71 = tpu.matmul %69, %70, %cst_63 {dimension_numbers = #tpu.dot_dimension_numbers<[1], [0], [0], [1], [0, 0, 1, 1], [], []>} : vector<32x32xbf16>, vector<32x256xbf16>, vector<32x256xf32> -> vector<32x256xf32>
    %c1_64 = arith.constant 1 : index
    %c2_65 = arith.constant 2 : index
    %c0_66 = arith.constant 0 : index
    %c0_67 = arith.constant 0 : index
    %72 = vector.load %arg4[%c1_64, %c2_65, %c0_66, %c0_67] : memref<6x4x32x1xf32, #tpu.memory_space<vmem>>, vector<1x1x32x1xf32>
    %73 = vector.shape_cast %72 : vector<1x1x32x1xf32> to vector<32x1xf32>
    %74 = vector.broadcast %73 : vector<32x1xf32> to vector<32x256xf32>
    %75 = arith.addf %71, %74 : vector<32x256xf32>
    %cst_68 = arith.constant 0.000000e+00 : f32
    %76 = vector.broadcast %cst_68 : f32 to vector<32x256xf32>
    %77 = arith.maximumf %75, %76 : vector<32x256xf32>
    %c1_69 = arith.constant 1 : index
    %c2_70 = arith.constant 2 : index
    %c0_71 = arith.constant 0 : index
    %c0_72 = arith.constant 0 : index
    %78 = vector.load %arg3[%c1_69, %c2_70, %c0_71, %c0_72] : memref<6x3x32x32xbf16, #tpu.memory_space<vmem>>, vector<1x1x32x32xbf16>
    %79 = vector.shape_cast %78 : vector<1x1x32x32xbf16> to vector<32x32xbf16>
    %80 = arith.truncf %77 : vector<32x256xf32> to vector<32x256xbf16>
    %cst_73 = arith.constant dense<0.000000e+00> : vector<32x256xf32>
    %81 = tpu.matmul %79, %80, %cst_73 {dimension_numbers = #tpu.dot_dimension_numbers<[1], [0], [0], [1], [0, 0, 1, 1], [], []>} : vector<32x32xbf16>, vector<32x256xbf16>, vector<32x256xf32> -> vector<32x256xf32>
    %c1_74 = arith.constant 1 : index
    %c3_75 = arith.constant 3 : index
    %c0_76 = arith.constant 0 : index
    %c0_77 = arith.constant 0 : index
    %82 = vector.load %arg4[%c1_74, %c3_75, %c0_76, %c0_77] : memref<6x4x32x1xf32, #tpu.memory_space<vmem>>, vector<1x1x32x1xf32>
    %83 = vector.shape_cast %82 : vector<1x1x32x1xf32> to vector<32x1xf32>
    %84 = vector.broadcast %83 : vector<32x1xf32> to vector<32x256xf32>
    %85 = arith.addf %81, %84 : vector<32x256xf32>
    %cst_78 = arith.constant 0.000000e+00 : f32
    %86 = vector.broadcast %cst_78 : f32 to vector<32x256xf32>
    %87 = arith.maximumf %85, %86 : vector<32x256xf32>
    %c1_79 = arith.constant 1 : index
    %c0_80 = arith.constant 0 : index
    %c0_81 = arith.constant 0 : index
    %88 = vector.load %arg5[%c1_79, %c0_80, %c0_81] : memref<6x24x32xbf16, #tpu.memory_space<vmem>>, vector<1x24x32xbf16>
    %89 = vector.shape_cast %88 : vector<1x24x32xbf16> to vector<24x32xbf16>
    %90 = arith.truncf %87 : vector<32x256xf32> to vector<32x256xbf16>
    %cst_82 = arith.constant dense<0.000000e+00> : vector<24x256xf32>
    %91 = tpu.matmul %89, %90, %cst_82 {dimension_numbers = #tpu.dot_dimension_numbers<[1], [0], [0], [1], [0, 0, 1, 1], [], []>} : vector<24x32xbf16>, vector<32x256xbf16>, vector<24x256xf32> -> vector<24x256xf32>
    %92 = arith.addf %46, %91 : vector<24x256xf32>
    %c2_83 = arith.constant 2 : index
    %c0_84 = arith.constant 0 : index
    %c0_85 = arith.constant 0 : index
    %93 = vector.load %arg2[%c2_83, %c0_84, %c0_85] : memref<6x32x16xbf16, #tpu.memory_space<vmem>>, vector<1x32x16xbf16>
    %94 = vector.shape_cast %93 : vector<1x32x16xbf16> to vector<32x16xbf16>
    %95 = vector.extract_strided_slice %92 {offsets = [0, 0], sizes = [16, 256], strides = [1, 1]} : vector<24x256xf32> to vector<16x256xf32>
    %96 = arith.truncf %95 : vector<16x256xf32> to vector<16x256xbf16>
    %cst_86 = arith.constant dense<0.000000e+00> : vector<32x256xf32>
    %97 = tpu.matmul %94, %96, %cst_86 {dimension_numbers = #tpu.dot_dimension_numbers<[1], [0], [0], [1], [0, 0, 1, 1], [], []>} : vector<32x16xbf16>, vector<16x256xbf16>, vector<32x256xf32> -> vector<32x256xf32>
    %c2_87 = arith.constant 2 : index
    %c0_88 = arith.constant 0 : index
    %c0_89 = arith.constant 0 : index
    %c0_90 = arith.constant 0 : index
    %98 = vector.load %arg4[%c2_87, %c0_88, %c0_89, %c0_90] : memref<6x4x32x1xf32, #tpu.memory_space<vmem>>, vector<1x1x32x1xf32>
    %99 = vector.shape_cast %98 : vector<1x1x32x1xf32> to vector<32x1xf32>
    %100 = vector.broadcast %99 : vector<32x1xf32> to vector<32x256xf32>
    %101 = arith.addf %97, %100 : vector<32x256xf32>
    %cst_91 = arith.constant 0.000000e+00 : f32
    %102 = vector.broadcast %cst_91 : f32 to vector<32x256xf32>
    %103 = arith.maximumf %101, %102 : vector<32x256xf32>
    %c2_92 = arith.constant 2 : index
    %c0_93 = arith.constant 0 : index
    %c0_94 = arith.constant 0 : index
    %c0_95 = arith.constant 0 : index
    %104 = vector.load %arg3[%c2_92, %c0_93, %c0_94, %c0_95] : memref<6x3x32x32xbf16, #tpu.memory_space<vmem>>, vector<1x1x32x32xbf16>
    %105 = vector.shape_cast %104 : vector<1x1x32x32xbf16> to vector<32x32xbf16>
    %106 = arith.truncf %103 : vector<32x256xf32> to vector<32x256xbf16>
    %cst_96 = arith.constant dense<0.000000e+00> : vector<32x256xf32>
    %107 = tpu.matmul %105, %106, %cst_96 {dimension_numbers = #tpu.dot_dimension_numbers<[1], [0], [0], [1], [0, 0, 1, 1], [], []>} : vector<32x32xbf16>, vector<32x256xbf16>, vector<32x256xf32> -> vector<32x256xf32>
    %c2_97 = arith.constant 2 : index
    %c1_98 = arith.constant 1 : index
    %c0_99 = arith.constant 0 : index
    %c0_100 = arith.constant 0 : index
    %108 = vector.load %arg4[%c2_97, %c1_98, %c0_99, %c0_100] : memref<6x4x32x1xf32, #tpu.memory_space<vmem>>, vector<1x1x32x1xf32>
    %109 = vector.shape_cast %108 : vector<1x1x32x1xf32> to vector<32x1xf32>
    %110 = vector.broadcast %109 : vector<32x1xf32> to vector<32x256xf32>
    %111 = arith.addf %107, %110 : vector<32x256xf32>
    %cst_101 = arith.constant 0.000000e+00 : f32
    %112 = vector.broadcast %cst_101 : f32 to vector<32x256xf32>
    %113 = arith.maximumf %111, %112 : vector<32x256xf32>
    %c2_102 = arith.constant 2 : index
    %c1_103 = arith.constant 1 : index
    %c0_104 = arith.constant 0 : index
    %c0_105 = arith.constant 0 : index
    %114 = vector.load %arg3[%c2_102, %c1_103, %c0_104, %c0_105] : memref<6x3x32x32xbf16, #tpu.memory_space<vmem>>, vector<1x1x32x32xbf16>
    %115 = vector.shape_cast %114 : vector<1x1x32x32xbf16> to vector<32x32xbf16>
    %116 = arith.truncf %113 : vector<32x256xf32> to vector<32x256xbf16>
    %cst_106 = arith.constant dense<0.000000e+00> : vector<32x256xf32>
    %117 = tpu.matmul %115, %116, %cst_106 {dimension_numbers = #tpu.dot_dimension_numbers<[1], [0], [0], [1], [0, 0, 1, 1], [], []>} : vector<32x32xbf16>, vector<32x256xbf16>, vector<32x256xf32> -> vector<32x256xf32>
    %c2_107 = arith.constant 2 : index
    %c2_108 = arith.constant 2 : index
    %c0_109 = arith.constant 0 : index
    %c0_110 = arith.constant 0 : index
    %118 = vector.load %arg4[%c2_107, %c2_108, %c0_109, %c0_110] : memref<6x4x32x1xf32, #tpu.memory_space<vmem>>, vector<1x1x32x1xf32>
    %119 = vector.shape_cast %118 : vector<1x1x32x1xf32> to vector<32x1xf32>
    %120 = vector.broadcast %119 : vector<32x1xf32> to vector<32x256xf32>
    %121 = arith.addf %117, %120 : vector<32x256xf32>
    %cst_111 = arith.constant 0.000000e+00 : f32
    %122 = vector.broadcast %cst_111 : f32 to vector<32x256xf32>
    %123 = arith.maximumf %121, %122 : vector<32x256xf32>
    %c2_112 = arith.constant 2 : index
    %c2_113 = arith.constant 2 : index
    %c0_114 = arith.constant 0 : index
    %c0_115 = arith.constant 0 : index
    %124 = vector.load %arg3[%c2_112, %c2_113, %c0_114, %c0_115] : memref<6x3x32x32xbf16, #tpu.memory_space<vmem>>, vector<1x1x32x32xbf16>
    %125 = vector.shape_cast %124 : vector<1x1x32x32xbf16> to vector<32x32xbf16>
    %126 = arith.truncf %123 : vector<32x256xf32> to vector<32x256xbf16>
    %cst_116 = arith.constant dense<0.000000e+00> : vector<32x256xf32>
    %127 = tpu.matmul %125, %126, %cst_116 {dimension_numbers = #tpu.dot_dimension_numbers<[1], [0], [0], [1], [0, 0, 1, 1], [], []>} : vector<32x32xbf16>, vector<32x256xbf16>, vector<32x256xf32> -> vector<32x256xf32>
    %c2_117 = arith.constant 2 : index
    %c3_118 = arith.constant 3 : index
    %c0_119 = arith.constant 0 : index
    %c0_120 = arith.constant 0 : index
    %128 = vector.load %arg4[%c2_117, %c3_118, %c0_119, %c0_120] : memref<6x4x32x1xf32, #tpu.memory_space<vmem>>, vector<1x1x32x1xf32>
    %129 = vector.shape_cast %128 : vector<1x1x32x1xf32> to vector<32x1xf32>
    %130 = vector.broadcast %129 : vector<32x1xf32> to vector<32x256xf32>
    %131 = arith.addf %127, %130 : vector<32x256xf32>
    %cst_121 = arith.constant 0.000000e+00 : f32
    %132 = vector.broadcast %cst_121 : f32 to vector<32x256xf32>
    %133 = arith.maximumf %131, %132 : vector<32x256xf32>
    %c2_122 = arith.constant 2 : index
    %c0_123 = arith.constant 0 : index
    %c0_124 = arith.constant 0 : index
    %134 = vector.load %arg5[%c2_122, %c0_123, %c0_124] : memref<6x24x32xbf16, #tpu.memory_space<vmem>>, vector<1x24x32xbf16>
    %135 = vector.shape_cast %134 : vector<1x24x32xbf16> to vector<24x32xbf16>
    %136 = arith.truncf %133 : vector<32x256xf32> to vector<32x256xbf16>
    %cst_125 = arith.constant dense<0.000000e+00> : vector<24x256xf32>
    %137 = tpu.matmul %135, %136, %cst_125 {dimension_numbers = #tpu.dot_dimension_numbers<[1], [0], [0], [1], [0, 0, 1, 1], [], []>} : vector<24x32xbf16>, vector<32x256xbf16>, vector<24x256xf32> -> vector<24x256xf32>
    %138 = arith.addf %92, %137 : vector<24x256xf32>
    %c3_126 = arith.constant 3 : index
    %c0_127 = arith.constant 0 : index
    %c0_128 = arith.constant 0 : index
    %139 = vector.load %arg2[%c3_126, %c0_127, %c0_128] : memref<6x32x16xbf16, #tpu.memory_space<vmem>>, vector<1x32x16xbf16>
    %140 = vector.shape_cast %139 : vector<1x32x16xbf16> to vector<32x16xbf16>
    %141 = vector.extract_strided_slice %138 {offsets = [0, 0], sizes = [16, 256], strides = [1, 1]} : vector<24x256xf32> to vector<16x256xf32>
    %142 = arith.truncf %141 : vector<16x256xf32> to vector<16x256xbf16>
    %cst_129 = arith.constant dense<0.000000e+00> : vector<32x256xf32>
    %143 = tpu.matmul %140, %142, %cst_129 {dimension_numbers = #tpu.dot_dimension_numbers<[1], [0], [0], [1], [0, 0, 1, 1], [], []>} : vector<32x16xbf16>, vector<16x256xbf16>, vector<32x256xf32> -> vector<32x256xf32>
    %c3_130 = arith.constant 3 : index
    %c0_131 = arith.constant 0 : index
    %c0_132 = arith.constant 0 : index
    %c0_133 = arith.constant 0 : index
    %144 = vector.load %arg4[%c3_130, %c0_131, %c0_132, %c0_133] : memref<6x4x32x1xf32, #tpu.memory_space<vmem>>, vector<1x1x32x1xf32>
    %145 = vector.shape_cast %144 : vector<1x1x32x1xf32> to vector<32x1xf32>
    %146 = vector.broadcast %145 : vector<32x1xf32> to vector<32x256xf32>
    %147 = arith.addf %143, %146 : vector<32x256xf32>
    %cst_134 = arith.constant 0.000000e+00 : f32
    %148 = vector.broadcast %cst_134 : f32 to vector<32x256xf32>
    %149 = arith.maximumf %147, %148 : vector<32x256xf32>
    %c3_135 = arith.constant 3 : index
    %c0_136 = arith.constant 0 : index
    %c0_137 = arith.constant 0 : index
    %c0_138 = arith.constant 0 : index
    %150 = vector.load %arg3[%c3_135, %c0_136, %c0_137, %c0_138] : memref<6x3x32x32xbf16, #tpu.memory_space<vmem>>, vector<1x1x32x32xbf16>
    %151 = vector.shape_cast %150 : vector<1x1x32x32xbf16> to vector<32x32xbf16>
    %152 = arith.truncf %149 : vector<32x256xf32> to vector<32x256xbf16>
    %cst_139 = arith.constant dense<0.000000e+00> : vector<32x256xf32>
    %153 = tpu.matmul %151, %152, %cst_139 {dimension_numbers = #tpu.dot_dimension_numbers<[1], [0], [0], [1], [0, 0, 1, 1], [], []>} : vector<32x32xbf16>, vector<32x256xbf16>, vector<32x256xf32> -> vector<32x256xf32>
    %c3_140 = arith.constant 3 : index
    %c1_141 = arith.constant 1 : index
    %c0_142 = arith.constant 0 : index
    %c0_143 = arith.constant 0 : index
    %154 = vector.load %arg4[%c3_140, %c1_141, %c0_142, %c0_143] : memref<6x4x32x1xf32, #tpu.memory_space<vmem>>, vector<1x1x32x1xf32>
    %155 = vector.shape_cast %154 : vector<1x1x32x1xf32> to vector<32x1xf32>
    %156 = vector.broadcast %155 : vector<32x1xf32> to vector<32x256xf32>
    %157 = arith.addf %153, %156 : vector<32x256xf32>
    %cst_144 = arith.constant 0.000000e+00 : f32
    %158 = vector.broadcast %cst_144 : f32 to vector<32x256xf32>
    %159 = arith.maximumf %157, %158 : vector<32x256xf32>
    %c3_145 = arith.constant 3 : index
    %c1_146 = arith.constant 1 : index
    %c0_147 = arith.constant 0 : index
    %c0_148 = arith.constant 0 : index
    %160 = vector.load %arg3[%c3_145, %c1_146, %c0_147, %c0_148] : memref<6x3x32x32xbf16, #tpu.memory_space<vmem>>, vector<1x1x32x32xbf16>
    %161 = vector.shape_cast %160 : vector<1x1x32x32xbf16> to vector<32x32xbf16>
    %162 = arith.truncf %159 : vector<32x256xf32> to vector<32x256xbf16>
    %cst_149 = arith.constant dense<0.000000e+00> : vector<32x256xf32>
    %163 = tpu.matmul %161, %162, %cst_149 {dimension_numbers = #tpu.dot_dimension_numbers<[1], [0], [0], [1], [0, 0, 1, 1], [], []>} : vector<32x32xbf16>, vector<32x256xbf16>, vector<32x256xf32> -> vector<32x256xf32>
    %c3_150 = arith.constant 3 : index
    %c2_151 = arith.constant 2 : index
    %c0_152 = arith.constant 0 : index
    %c0_153 = arith.constant 0 : index
    %164 = vector.load %arg4[%c3_150, %c2_151, %c0_152, %c0_153] : memref<6x4x32x1xf32, #tpu.memory_space<vmem>>, vector<1x1x32x1xf32>
    %165 = vector.shape_cast %164 : vector<1x1x32x1xf32> to vector<32x1xf32>
    %166 = vector.broadcast %165 : vector<32x1xf32> to vector<32x256xf32>
    %167 = arith.addf %163, %166 : vector<32x256xf32>
    %cst_154 = arith.constant 0.000000e+00 : f32
    %168 = vector.broadcast %cst_154 : f32 to vector<32x256xf32>
    %169 = arith.maximumf %167, %168 : vector<32x256xf32>
    %c3_155 = arith.constant 3 : index
    %c2_156 = arith.constant 2 : index
    %c0_157 = arith.constant 0 : index
    %c0_158 = arith.constant 0 : index
    %170 = vector.load %arg3[%c3_155, %c2_156, %c0_157, %c0_158] : memref<6x3x32x32xbf16, #tpu.memory_space<vmem>>, vector<1x1x32x32xbf16>
    %171 = vector.shape_cast %170 : vector<1x1x32x32xbf16> to vector<32x32xbf16>
    %172 = arith.truncf %169 : vector<32x256xf32> to vector<32x256xbf16>
    %cst_159 = arith.constant dense<0.000000e+00> : vector<32x256xf32>
    %173 = tpu.matmul %171, %172, %cst_159 {dimension_numbers = #tpu.dot_dimension_numbers<[1], [0], [0], [1], [0, 0, 1, 1], [], []>} : vector<32x32xbf16>, vector<32x256xbf16>, vector<32x256xf32> -> vector<32x256xf32>
    %c3_160 = arith.constant 3 : index
    %c3_161 = arith.constant 3 : index
    %c0_162 = arith.constant 0 : index
    %c0_163 = arith.constant 0 : index
    %174 = vector.load %arg4[%c3_160, %c3_161, %c0_162, %c0_163] : memref<6x4x32x1xf32, #tpu.memory_space<vmem>>, vector<1x1x32x1xf32>
    %175 = vector.shape_cast %174 : vector<1x1x32x1xf32> to vector<32x1xf32>
    %176 = vector.broadcast %175 : vector<32x1xf32> to vector<32x256xf32>
    %177 = arith.addf %173, %176 : vector<32x256xf32>
    %cst_164 = arith.constant 0.000000e+00 : f32
    %178 = vector.broadcast %cst_164 : f32 to vector<32x256xf32>
    %179 = arith.maximumf %177, %178 : vector<32x256xf32>
    %c3_165 = arith.constant 3 : index
    %c0_166 = arith.constant 0 : index
    %c0_167 = arith.constant 0 : index
    %180 = vector.load %arg5[%c3_165, %c0_166, %c0_167] : memref<6x24x32xbf16, #tpu.memory_space<vmem>>, vector<1x24x32xbf16>
    %181 = vector.shape_cast %180 : vector<1x24x32xbf16> to vector<24x32xbf16>
    %182 = arith.truncf %179 : vector<32x256xf32> to vector<32x256xbf16>
    %cst_168 = arith.constant dense<0.000000e+00> : vector<24x256xf32>
    %183 = tpu.matmul %181, %182, %cst_168 {dimension_numbers = #tpu.dot_dimension_numbers<[1], [0], [0], [1], [0, 0, 1, 1], [], []>} : vector<24x32xbf16>, vector<32x256xbf16>, vector<24x256xf32> -> vector<24x256xf32>
    %184 = arith.addf %138, %183 : vector<24x256xf32>
    %c4 = arith.constant 4 : index
    %c0_169 = arith.constant 0 : index
    %c0_170 = arith.constant 0 : index
    %185 = vector.load %arg2[%c4, %c0_169, %c0_170] : memref<6x32x16xbf16, #tpu.memory_space<vmem>>, vector<1x32x16xbf16>
    %186 = vector.shape_cast %185 : vector<1x32x16xbf16> to vector<32x16xbf16>
    %187 = vector.extract_strided_slice %184 {offsets = [0, 0], sizes = [16, 256], strides = [1, 1]} : vector<24x256xf32> to vector<16x256xf32>
    %188 = arith.truncf %187 : vector<16x256xf32> to vector<16x256xbf16>
    %cst_171 = arith.constant dense<0.000000e+00> : vector<32x256xf32>
    %189 = tpu.matmul %186, %188, %cst_171 {dimension_numbers = #tpu.dot_dimension_numbers<[1], [0], [0], [1], [0, 0, 1, 1], [], []>} : vector<32x16xbf16>, vector<16x256xbf16>, vector<32x256xf32> -> vector<32x256xf32>
    %c4_172 = arith.constant 4 : index
    %c0_173 = arith.constant 0 : index
    %c0_174 = arith.constant 0 : index
    %c0_175 = arith.constant 0 : index
    %190 = vector.load %arg4[%c4_172, %c0_173, %c0_174, %c0_175] : memref<6x4x32x1xf32, #tpu.memory_space<vmem>>, vector<1x1x32x1xf32>
    %191 = vector.shape_cast %190 : vector<1x1x32x1xf32> to vector<32x1xf32>
    %192 = vector.broadcast %191 : vector<32x1xf32> to vector<32x256xf32>
    %193 = arith.addf %189, %192 : vector<32x256xf32>
    %cst_176 = arith.constant 0.000000e+00 : f32
    %194 = vector.broadcast %cst_176 : f32 to vector<32x256xf32>
    %195 = arith.maximumf %193, %194 : vector<32x256xf32>
    %c4_177 = arith.constant 4 : index
    %c0_178 = arith.constant 0 : index
    %c0_179 = arith.constant 0 : index
    %c0_180 = arith.constant 0 : index
    %196 = vector.load %arg3[%c4_177, %c0_178, %c0_179, %c0_180] : memref<6x3x32x32xbf16, #tpu.memory_space<vmem>>, vector<1x1x32x32xbf16>
    %197 = vector.shape_cast %196 : vector<1x1x32x32xbf16> to vector<32x32xbf16>
    %198 = arith.truncf %195 : vector<32x256xf32> to vector<32x256xbf16>
    %cst_181 = arith.constant dense<0.000000e+00> : vector<32x256xf32>
    %199 = tpu.matmul %197, %198, %cst_181 {dimension_numbers = #tpu.dot_dimension_numbers<[1], [0], [0], [1], [0, 0, 1, 1], [], []>} : vector<32x32xbf16>, vector<32x256xbf16>, vector<32x256xf32> -> vector<32x256xf32>
    %c4_182 = arith.constant 4 : index
    %c1_183 = arith.constant 1 : index
    %c0_184 = arith.constant 0 : index
    %c0_185 = arith.constant 0 : index
    %200 = vector.load %arg4[%c4_182, %c1_183, %c0_184, %c0_185] : memref<6x4x32x1xf32, #tpu.memory_space<vmem>>, vector<1x1x32x1xf32>
    %201 = vector.shape_cast %200 : vector<1x1x32x1xf32> to vector<32x1xf32>
    %202 = vector.broadcast %201 : vector<32x1xf32> to vector<32x256xf32>
    %203 = arith.addf %199, %202 : vector<32x256xf32>
    %cst_186 = arith.constant 0.000000e+00 : f32
    %204 = vector.broadcast %cst_186 : f32 to vector<32x256xf32>
    %205 = arith.maximumf %203, %204 : vector<32x256xf32>
    %c4_187 = arith.constant 4 : index
    %c1_188 = arith.constant 1 : index
    %c0_189 = arith.constant 0 : index
    %c0_190 = arith.constant 0 : index
    %206 = vector.load %arg3[%c4_187, %c1_188, %c0_189, %c0_190] : memref<6x3x32x32xbf16, #tpu.memory_space<vmem>>, vector<1x1x32x32xbf16>
    %207 = vector.shape_cast %206 : vector<1x1x32x32xbf16> to vector<32x32xbf16>
    %208 = arith.truncf %205 : vector<32x256xf32> to vector<32x256xbf16>
    %cst_191 = arith.constant dense<0.000000e+00> : vector<32x256xf32>
    %209 = tpu.matmul %207, %208, %cst_191 {dimension_numbers = #tpu.dot_dimension_numbers<[1], [0], [0], [1], [0, 0, 1, 1], [], []>} : vector<32x32xbf16>, vector<32x256xbf16>, vector<32x256xf32> -> vector<32x256xf32>
    %c4_192 = arith.constant 4 : index
    %c2_193 = arith.constant 2 : index
    %c0_194 = arith.constant 0 : index
    %c0_195 = arith.constant 0 : index
    %210 = vector.load %arg4[%c4_192, %c2_193, %c0_194, %c0_195] : memref<6x4x32x1xf32, #tpu.memory_space<vmem>>, vector<1x1x32x1xf32>
    %211 = vector.shape_cast %210 : vector<1x1x32x1xf32> to vector<32x1xf32>
    %212 = vector.broadcast %211 : vector<32x1xf32> to vector<32x256xf32>
    %213 = arith.addf %209, %212 : vector<32x256xf32>
    %cst_196 = arith.constant 0.000000e+00 : f32
    %214 = vector.broadcast %cst_196 : f32 to vector<32x256xf32>
    %215 = arith.maximumf %213, %214 : vector<32x256xf32>
    %c4_197 = arith.constant 4 : index
    %c2_198 = arith.constant 2 : index
    %c0_199 = arith.constant 0 : index
    %c0_200 = arith.constant 0 : index
    %216 = vector.load %arg3[%c4_197, %c2_198, %c0_199, %c0_200] : memref<6x3x32x32xbf16, #tpu.memory_space<vmem>>, vector<1x1x32x32xbf16>
    %217 = vector.shape_cast %216 : vector<1x1x32x32xbf16> to vector<32x32xbf16>
    %218 = arith.truncf %215 : vector<32x256xf32> to vector<32x256xbf16>
    %cst_201 = arith.constant dense<0.000000e+00> : vector<32x256xf32>
    %219 = tpu.matmul %217, %218, %cst_201 {dimension_numbers = #tpu.dot_dimension_numbers<[1], [0], [0], [1], [0, 0, 1, 1], [], []>} : vector<32x32xbf16>, vector<32x256xbf16>, vector<32x256xf32> -> vector<32x256xf32>
    %c4_202 = arith.constant 4 : index
    %c3_203 = arith.constant 3 : index
    %c0_204 = arith.constant 0 : index
    %c0_205 = arith.constant 0 : index
    %220 = vector.load %arg4[%c4_202, %c3_203, %c0_204, %c0_205] : memref<6x4x32x1xf32, #tpu.memory_space<vmem>>, vector<1x1x32x1xf32>
    %221 = vector.shape_cast %220 : vector<1x1x32x1xf32> to vector<32x1xf32>
    %222 = vector.broadcast %221 : vector<32x1xf32> to vector<32x256xf32>
    %223 = arith.addf %219, %222 : vector<32x256xf32>
    %cst_206 = arith.constant 0.000000e+00 : f32
    %224 = vector.broadcast %cst_206 : f32 to vector<32x256xf32>
    %225 = arith.maximumf %223, %224 : vector<32x256xf32>
    %c4_207 = arith.constant 4 : index
    %c0_208 = arith.constant 0 : index
    %c0_209 = arith.constant 0 : index
    %226 = vector.load %arg5[%c4_207, %c0_208, %c0_209] : memref<6x24x32xbf16, #tpu.memory_space<vmem>>, vector<1x24x32xbf16>
    %227 = vector.shape_cast %226 : vector<1x24x32xbf16> to vector<24x32xbf16>
    %228 = arith.truncf %225 : vector<32x256xf32> to vector<32x256xbf16>
    %cst_210 = arith.constant dense<0.000000e+00> : vector<24x256xf32>
    %229 = tpu.matmul %227, %228, %cst_210 {dimension_numbers = #tpu.dot_dimension_numbers<[1], [0], [0], [1], [0, 0, 1, 1], [], []>} : vector<24x32xbf16>, vector<32x256xbf16>, vector<24x256xf32> -> vector<24x256xf32>
    %230 = arith.addf %184, %229 : vector<24x256xf32>
    %c5 = arith.constant 5 : index
    %c0_211 = arith.constant 0 : index
    %c0_212 = arith.constant 0 : index
    %231 = vector.load %arg2[%c5, %c0_211, %c0_212] : memref<6x32x16xbf16, #tpu.memory_space<vmem>>, vector<1x32x16xbf16>
    %232 = vector.shape_cast %231 : vector<1x32x16xbf16> to vector<32x16xbf16>
    %233 = vector.extract_strided_slice %230 {offsets = [0, 0], sizes = [16, 256], strides = [1, 1]} : vector<24x256xf32> to vector<16x256xf32>
    %234 = arith.truncf %233 : vector<16x256xf32> to vector<16x256xbf16>
    %cst_213 = arith.constant dense<0.000000e+00> : vector<32x256xf32>
    %235 = tpu.matmul %232, %234, %cst_213 {dimension_numbers = #tpu.dot_dimension_numbers<[1], [0], [0], [1], [0, 0, 1, 1], [], []>} : vector<32x16xbf16>, vector<16x256xbf16>, vector<32x256xf32> -> vector<32x256xf32>
    %c5_214 = arith.constant 5 : index
    %c0_215 = arith.constant 0 : index
    %c0_216 = arith.constant 0 : index
    %c0_217 = arith.constant 0 : index
    %236 = vector.load %arg4[%c5_214, %c0_215, %c0_216, %c0_217] : memref<6x4x32x1xf32, #tpu.memory_space<vmem>>, vector<1x1x32x1xf32>
    %237 = vector.shape_cast %236 : vector<1x1x32x1xf32> to vector<32x1xf32>
    %238 = vector.broadcast %237 : vector<32x1xf32> to vector<32x256xf32>
    %239 = arith.addf %235, %238 : vector<32x256xf32>
    %cst_218 = arith.constant 0.000000e+00 : f32
    %240 = vector.broadcast %cst_218 : f32 to vector<32x256xf32>
    %241 = arith.maximumf %239, %240 : vector<32x256xf32>
    %c5_219 = arith.constant 5 : index
    %c0_220 = arith.constant 0 : index
    %c0_221 = arith.constant 0 : index
    %c0_222 = arith.constant 0 : index
    %242 = vector.load %arg3[%c5_219, %c0_220, %c0_221, %c0_222] : memref<6x3x32x32xbf16, #tpu.memory_space<vmem>>, vector<1x1x32x32xbf16>
    %243 = vector.shape_cast %242 : vector<1x1x32x32xbf16> to vector<32x32xbf16>
    %244 = arith.truncf %241 : vector<32x256xf32> to vector<32x256xbf16>
    %cst_223 = arith.constant dense<0.000000e+00> : vector<32x256xf32>
    %245 = tpu.matmul %243, %244, %cst_223 {dimension_numbers = #tpu.dot_dimension_numbers<[1], [0], [0], [1], [0, 0, 1, 1], [], []>} : vector<32x32xbf16>, vector<32x256xbf16>, vector<32x256xf32> -> vector<32x256xf32>
    %c5_224 = arith.constant 5 : index
    %c1_225 = arith.constant 1 : index
    %c0_226 = arith.constant 0 : index
    %c0_227 = arith.constant 0 : index
    %246 = vector.load %arg4[%c5_224, %c1_225, %c0_226, %c0_227] : memref<6x4x32x1xf32, #tpu.memory_space<vmem>>, vector<1x1x32x1xf32>
    %247 = vector.shape_cast %246 : vector<1x1x32x1xf32> to vector<32x1xf32>
    %248 = vector.broadcast %247 : vector<32x1xf32> to vector<32x256xf32>
    %249 = arith.addf %245, %248 : vector<32x256xf32>
    %cst_228 = arith.constant 0.000000e+00 : f32
    %250 = vector.broadcast %cst_228 : f32 to vector<32x256xf32>
    %251 = arith.maximumf %249, %250 : vector<32x256xf32>
    %c5_229 = arith.constant 5 : index
    %c1_230 = arith.constant 1 : index
    %c0_231 = arith.constant 0 : index
    %c0_232 = arith.constant 0 : index
    %252 = vector.load %arg3[%c5_229, %c1_230, %c0_231, %c0_232] : memref<6x3x32x32xbf16, #tpu.memory_space<vmem>>, vector<1x1x32x32xbf16>
    %253 = vector.shape_cast %252 : vector<1x1x32x32xbf16> to vector<32x32xbf16>
    %254 = arith.truncf %251 : vector<32x256xf32> to vector<32x256xbf16>
    %cst_233 = arith.constant dense<0.000000e+00> : vector<32x256xf32>
    %255 = tpu.matmul %253, %254, %cst_233 {dimension_numbers = #tpu.dot_dimension_numbers<[1], [0], [0], [1], [0, 0, 1, 1], [], []>} : vector<32x32xbf16>, vector<32x256xbf16>, vector<32x256xf32> -> vector<32x256xf32>
    %c5_234 = arith.constant 5 : index
    %c2_235 = arith.constant 2 : index
    %c0_236 = arith.constant 0 : index
    %c0_237 = arith.constant 0 : index
    %256 = vector.load %arg4[%c5_234, %c2_235, %c0_236, %c0_237] : memref<6x4x32x1xf32, #tpu.memory_space<vmem>>, vector<1x1x32x1xf32>
    %257 = vector.shape_cast %256 : vector<1x1x32x1xf32> to vector<32x1xf32>
    %258 = vector.broadcast %257 : vector<32x1xf32> to vector<32x256xf32>
    %259 = arith.addf %255, %258 : vector<32x256xf32>
    %cst_238 = arith.constant 0.000000e+00 : f32
    %260 = vector.broadcast %cst_238 : f32 to vector<32x256xf32>
    %261 = arith.maximumf %259, %260 : vector<32x256xf32>
    %c5_239 = arith.constant 5 : index
    %c2_240 = arith.constant 2 : index
    %c0_241 = arith.constant 0 : index
    %c0_242 = arith.constant 0 : index
    %262 = vector.load %arg3[%c5_239, %c2_240, %c0_241, %c0_242] : memref<6x3x32x32xbf16, #tpu.memory_space<vmem>>, vector<1x1x32x32xbf16>
    %263 = vector.shape_cast %262 : vector<1x1x32x32xbf16> to vector<32x32xbf16>
    %264 = arith.truncf %261 : vector<32x256xf32> to vector<32x256xbf16>
    %cst_243 = arith.constant dense<0.000000e+00> : vector<32x256xf32>
    %265 = tpu.matmul %263, %264, %cst_243 {dimension_numbers = #tpu.dot_dimension_numbers<[1], [0], [0], [1], [0, 0, 1, 1], [], []>} : vector<32x32xbf16>, vector<32x256xbf16>, vector<32x256xf32> -> vector<32x256xf32>
    %c5_244 = arith.constant 5 : index
    %c3_245 = arith.constant 3 : index
    %c0_246 = arith.constant 0 : index
    %c0_247 = arith.constant 0 : index
    %266 = vector.load %arg4[%c5_244, %c3_245, %c0_246, %c0_247] : memref<6x4x32x1xf32, #tpu.memory_space<vmem>>, vector<1x1x32x1xf32>
    %267 = vector.shape_cast %266 : vector<1x1x32x1xf32> to vector<32x1xf32>
    %268 = vector.broadcast %267 : vector<32x1xf32> to vector<32x256xf32>
    %269 = arith.addf %265, %268 : vector<32x256xf32>
    %cst_248 = arith.constant 0.000000e+00 : f32
    %270 = vector.broadcast %cst_248 : f32 to vector<32x256xf32>
    %271 = arith.maximumf %269, %270 : vector<32x256xf32>
    %c5_249 = arith.constant 5 : index
    %c0_250 = arith.constant 0 : index
    %c0_251 = arith.constant 0 : index
    %272 = vector.load %arg5[%c5_249, %c0_250, %c0_251] : memref<6x24x32xbf16, #tpu.memory_space<vmem>>, vector<1x24x32xbf16>
    %273 = vector.shape_cast %272 : vector<1x24x32xbf16> to vector<24x32xbf16>
    %274 = arith.truncf %271 : vector<32x256xf32> to vector<32x256xbf16>
    %cst_252 = arith.constant dense<0.000000e+00> : vector<24x256xf32>
    %275 = tpu.matmul %273, %274, %cst_252 {dimension_numbers = #tpu.dot_dimension_numbers<[1], [0], [0], [1], [0, 0, 1, 1], [], []>} : vector<24x32xbf16>, vector<32x256xbf16>, vector<24x256xf32> -> vector<24x256xf32>
    %276 = arith.addf %230, %275 : vector<24x256xf32>
    %c0_253 = arith.constant 0 : index
    %c0_254 = arith.constant 0 : index
    %277 = vector.load %arg6[%c0_253, %c0_254] : memref<24x256xf32, #tpu.memory_space<vmem>>, vector<24x256xf32>
    tpu.vector_store %arg6[%c0_253, %c0_254], %276 {strides = array<i32>} : memref<24x256xf32, #tpu.memory_space<vmem>>, vector<24x256xf32>,
    return
  }
  func.func @transform_0(%arg0: i32) -> (i32, i32) {
    %c0_i32 = arith.constant 0 : i32
    %c0_i32_0 = arith.constant 0 : i32
    return %c0_i32, %arg0 : i32, i32
  }
  func.func @transform_1(%arg0: i32) -> (i32, i32, i32) {
    %c0_i32 = arith.constant 0 : i32
    %c0_i32_0 = arith.constant 0 : i32
    %c0_i32_1 = arith.constant 0 : i32
    %c0_i32_2 = arith.constant 0 : i32
    return %c0_i32, %c0_i32_0, %c0_i32_1 : i32, i32, i32
  }
  func.func @transform_2(%arg0: i32) -> (i32, i32, i32, i32) {
    %c0_i32 = arith.constant 0 : i32
    %c0_i32_0 = arith.constant 0 : i32
    %c0_i32_1 = arith.constant 0 : i32
    %c0_i32_2 = arith.constant 0 : i32
    %c0_i32_3 = arith.constant 0 : i32
    return %c0_i32, %c0_i32_0, %c0_i32_1, %c0_i32_2 : i32, i32, i32, i32
  }
  func.func @transform_3(%arg0: i32) -> (i32, i32, i32, i32) {
    %c0_i32 = arith.constant 0 : i32
    %c0_i32_0 = arith.constant 0 : i32
    %c0_i32_1 = arith.constant 0 : i32
    %c0_i32_2 = arith.constant 0 : i32
    %c0_i32_3 = arith.constant 0 : i32
    return %c0_i32, %c0_i32_0, %c0_i32_1, %c0_i32_2 : i32, i32, i32, i32
  }
  func.func @transform_4(%arg0: i32) -> (i32, i32, i32) {
    %c0_i32 = arith.constant 0 : i32
    %c0_i32_0 = arith.constant 0 : i32
    %c0_i32_1 = arith.constant 0 : i32
    %c0_i32_2 = arith.constant 0 : i32
    return %c0_i32, %c0_i32_0, %c0_i32_1 : i32, i32, i32
  }
  func.func @transform_5(%arg0: i32) -> (i32, i32) {
    %c0_i32 = arith.constant 0 : i32
    %c0_i32_0 = arith.constant 0 : i32
    return %c0_i32, %arg0 : i32, i32
  }
}

</mosaic_0001>

<llo_original>
// kernel: tpu_custom_call.1
$region0: #{tpu_custom_call.1}
  #allocation0 [shape = 'u32[]', space=smem, size = 0x4, offset = 0x4, fixed_abs, tag = 'smem constant byte address 0x4 - core index']
  #allocation1 [shape = 'u32[144,128]{1,0:T(1,128)}', space=vmem, size = 0x12000, scoped, tag = 'internal scratch']
  %s0 = inlined_call_operand.vmem [shape: f32[24,512], index: 0, kind: input, shape index: {}]
  %s1 = inlined_call_operand.vmem [shape: bf16[6,32,16], index: 1, kind: input, shape index: {}]
  %s2 = inlined_call_operand.vmem [shape: bf16[6,3,32,32], index: 2, kind: input, shape index: {}]
  %s3 = inlined_call_operand.vmem [shape: f32[6,4,32,1], index: 3, kind: input, shape index: {}]
  %s4 = inlined_call_operand.vmem [shape: bf16[6,24,32], index: 4, kind: input, shape index: {}]
  %s5 = inlined_call_operand.hbm [shape: f32[24,512], index: 5, kind: output, shape index: {}]
  %s6 = sld [smem:[#allocation0]]
  $region76: #{tpu_custom_call.1} parent=0
    _
  %s8 = ssub.s32 1, %s6
  %s9 = scalar_select 0, %s8, %s6
  $region1: #{tpu_custom_call.1} parent=0
    #allocation2 [shape = 'u8[49152]{0}', space=vmem, size = 0xc000, scoped, tag = 'input window, operand 0']
    #allocation3 [shape = 'u8[49152]{0}', space=vmem, size = 0xc000, scoped, tag = 'output window, operand 0']
    #allocation4 [shape = 's32[2]{0}', space=sflag, size = 0x8, scoped, tag = 'scoped memory for tpu_custom_call.1']
    %10 = vsyncpa [#allocation4], 0
    %s11 = scalar_lea.sflag [#allocation4], 1
    %12 = vsyncpa %s11, 0
    loop: start=0, step=1, limit=4
    $region2: #{tpu_custom_call.1} parent=1 // loop_pre_header
      _
    $region3: #{tpu_custom_call.1} parent=1 // loop_header
      %s14 = sphi 0, %s18
      %p15 = scmp.ge.s32.totalorder %s14, 4
      %s24 = sphi 0, %s26
      %s27 = sphi 0, %s24
      %s28 = sphi 0, %s27
      %s44 = sphi 0, %s28
      %s48 = sphi 0, %s48
      %s50 = sphi 0, %s48
      %s51 = sphi 0, %s50
      %s65 = sphi 0, %s51
      %s69 = sphi 0, %s69
      %s71 = sphi 0, %s69
      %s72 = sphi 0, %s71
      %s86 = sphi 0, %s72
      %s90 = sphi 0, %s90
      %s92 = sphi 0, %s90
      %s93 = sphi 0, %s92
      %s107 = sphi 0, %s93
      %s111 = sphi 0, %s111
      %s113 = sphi 0, %s111
      %s114 = sphi 0, %s113
      %s128 = sphi 0, %s114
      %s134 = sphi 0, %s136
      %s137 = sphi 0, %s134
      %s138 = sphi 0, %s137
      %s154 = sphi 0, %s138
    $region4: #{tpu_custom_call.1} parent=1 // loop_header_branch
      %17 = sbr.rel (%p15) target = $region8
    $region5: #{tpu_custom_call.1} parent=1 // loop_body
      %s19 = ssub.s32 %s14, 1
      %s20 = ssub.s32 %s14, 2
      %s21 = sadd.s32 %s14, 1
      %s22 = ssub.s32 %s14, %s21
      %p23 = scmp.eq.s32.totalorder %s22, 0
      %s25 = sadd.s32 %s24, 1
      %s26 = scalar_select %p23, %s24, %s25
      %p29 = pneg %p23
      %p30 = scmp.eq.s32.totalorder %s14, 1
      %p31 = por %p29, %p30
      %p32 = scmp.ne.s32.totalorder %s24, %s27
      %p33 = scmp.eq.s32.totalorder %s14, 0
      %p34 = por %p32, %p33
      %p35 = scmp.ne.s32.totalorder %s24, %s27
      %p36 = scmp.eq.s32.totalorder %s19, 1
      %p37 = por %p35, %p36
      %p38 = scmp.ne.s32.totalorder %s27, %s28
      %p39 = scmp.eq.s32.totalorder %s19, 0
      %p40 = por %p38, %p39
      %p41 = scmp.ne.s32.totalorder %s27, %s28
      %p42 = scmp.eq.s32.totalorder %s20, 1
      %p43 = por %p41, %p42
      %p45 = scmp.ne.s32.totalorder %s28, %s44
      %p46 = scmp.eq.s32.totalorder %s20, 0
      %p47 = por %p45, %p46
      %s49 = sadd.s32 %s48, 1
      %p52 = scmp.eq.s32.totalorder %s14, 1
      %p53 = scmp.ne.s32.totalorder %s48, %s50
      %p54 = scmp.eq.s32.totalorder %s14, 0
      %p55 = por %p53, %p54
      %p56 = scmp.ne.s32.totalorder %s48, %s50
      %p57 = scmp.eq.s32.totalorder %s19, 1
      %p58 = por %p56, %p57
      %p59 = scmp.ne.s32.totalorder %s50, %s51
      %p60 = scmp.eq.s32.totalorder %s19, 0
      %p61 = por %p59, %p60
      %p62 = scmp.ne.s32.totalorder %s50, %s51
      %p63 = scmp.eq.s32.totalorder %s20, 1
      %p64 = por %p62, %p63
      %p66 = scmp.ne.s32.totalorder %s51, %s65
      %p67 = scmp.eq.s32.totalorder %s20, 0
      %p68 = por %p66, %p67
      %s70 = sadd.s32 %s69, 1
      %p73 = scmp.eq.s32.totalorder %s14, 1
      %p74 = scmp.ne.s32.totalorder %s69, %s71
      %p75 = scmp.eq.s32.totalorder %s14, 0
      %p76 = por %p74, %p75
      %p77 = scmp.ne.s32.totalorder %s69, %s71
      %p78 = scmp.eq.s32.totalorder %s19, 1
      %p79 = por %p77, %p78
      %p80 = scmp.ne.s32.totalorder %s71, %s72
      %p81 = scmp.eq.s32.totalorder %s19, 0
      %p82 = por %p80, %p81
      %p83 = scmp.ne.s32.totalorder %s71, %s72
      %p84 = scmp.eq.s32.totalorder %s20, 1
      %p85 = por %p83, %p84
      %p87 = scmp.ne.s32.totalorder %s72, %s86
      %p88 = scmp.eq.s32.totalorder %s20, 0
      %p89 = por %p87, %p88
      %s91 = sadd.s32 %s90, 1
      %p94 = scmp.eq.s32.totalorder %s14, 1
      %p95 = scmp.ne.s32.totalorder %s90, %s92
      %p96 = scmp.eq.s32.totalorder %s14, 0
      %p97 = por %p95, %p96
      %p98 = scmp.ne.s32.totalorder %s90, %s92
      %p99 = scmp.eq.s32.totalorder %s19, 1
      %p100 = por %p98, %p99
      %p101 = scmp.ne.s32.totalorder %s92, %s93
      %p102 = scmp.eq.s32.totalorder %s19, 0
      %p103 = por %p101, %p102
      %p104 = scmp.ne.s32.totalorder %s92, %s93
      %p105 = scmp.eq.s32.totalorder %s20, 1
      %p106 = por %p104, %p105
      %p108 = scmp.ne.s32.totalorder %s93, %s107
      %p109 = scmp.eq.s32.totalorder %s20, 0
      %p110 = por %p108, %p109
      %s112 = sadd.s32 %s111, 1
      %p115 = scmp.eq.s32.totalorder %s14, 1
      %p116 = scmp.ne.s32.totalorder %s111, %s113
      %p117 = scmp.eq.s32.totalorder %s14, 0
      %p118 = por %p116, %p117
      %p119 = scmp.ne.s32.totalorder %s111, %s113
      %p120 = scmp.eq.s32.totalorder %s19, 1
      %p121 = por %p119, %p120
      %p122 = scmp.ne.s32.totalorder %s113, %s114
      %p123 = scmp.eq.s32.totalorder %s19, 0
      %p124 = por %p122, %p123
      %p125 = scmp.ne.s32.totalorder %s113, %s114
      %p126 = scmp.eq.s32.totalorder %s20, 1
      %p127 = por %p125, %p126
      %p129 = scmp.ne.s32.totalorder %s114, %s128
      %p130 = scmp.eq.s32.totalorder %s20, 0
      %p131 = por %p129, %p130
      %s132 = ssub.s32 %s14, %s21
      %p133 = scmp.eq.s32.totalorder %s132, 0
      %s135 = sadd.s32 %s134, 1
      %s136 = scalar_select %p133, %s134, %s135
      %p139 = pneg %p133
      %p140 = scmp.eq.s32.totalorder %s14, 1
      %p141 = por %p139, %p140
      %p142 = scmp.ne.s32.totalorder %s134, %s137
      %p143 = scmp.eq.s32.totalorder %s14, 0
      %p144 = por %p142, %p143
      %p145 = scmp.ne.s32.totalorder %s134, %s137
      %p146 = scmp.eq.s32.totalorder %s19, 1
      %p147 = por %p145, %p146
      %p148 = scmp.ne.s32.totalorder %s137, %s138
      %p149 = scmp.eq.s32.totalorder %s19, 0
      %p150 = por %p148, %p149
      %p151 = scmp.ne.s32.totalorder %s137, %s138
      %p152 = scmp.eq.s32.totalorder %s20, 1
      %p153 = por %p151, %p152
      %p155 = scmp.ne.s32.totalorder %s138, %s154
      %p156 = scmp.eq.s32.totalorder %s20, 0
      %p157 = por %p155, %p156
      %p158 = scmp.le.s32.totalorder 1, %s14
      %p159 = scmp.lt.s32.totalorder %s14, 3
      %p160 = pnand %p158, %p159
      %p161 = pneg %p160
      // Predicated region
      $region9: #{tpu_custom_call.1} parent=5 // pred_check
        _
      $region10: #{tpu_custom_call.1} parent=5 // pred_check_branch
        %163 = sbr.rel (%p160) target = $region12
      $region11: #{tpu_custom_call.1} parent=5 // pred_region
        %s164 = ssub.s32 %s14, 1
        // Predicated region
        $region13: #{tpu_custom_call.1} parent=11 // pred_check
          %p165 = pneg %p61
        $region14: #{tpu_custom_call.1} parent=11 // pred_check_branch
          %167 = sbr.rel (%p165) target = $region16
        $region15: #{tpu_custom_call.1} parent=11 // pred_region
          _
        $region16: #{tpu_custom_call.1} parent=11 // pred_fallthru
          _
        // Predicated region
        $region17: #{tpu_custom_call.1} parent=11 // pred_check
          %p168 = pneg %p82
        $region18: #{tpu_custom_call.1} parent=11 // pred_check_branch
          %170 = sbr.rel (%p168) target = $region20
        $region19: #{tpu_custom_call.1} parent=11 // pred_region
          _
        $region20: #{tpu_custom_call.1} parent=11 // pred_fallthru
          _
        // Predicated region
        $region21: #{tpu_custom_call.1} parent=11 // pred_check
          %p171 = pneg %p103
        $region22: #{tpu_custom_call.1} parent=11 // pred_check_branch
          %173 = sbr.rel (%p171) target = $region24
        $region23: #{tpu_custom_call.1} parent=11 // pred_region
          _
        $region24: #{tpu_custom_call.1} parent=11 // pred_fallthru
          _
        // Predicated region
        $region25: #{tpu_custom_call.1} parent=11 // pred_check
          %p174 = pneg %p124
        $region26: #{tpu_custom_call.1} parent=11 // pred_check_branch
          %176 = sbr.rel (%p174) target = $region28
        $region27: #{tpu_custom_call.1} parent=11 // pred_region
          _
        $region28: #{tpu_custom_call.1} parent=11 // pred_fallthru
          _
      $region12: #{tpu_custom_call.1} parent=5 // pred_fallthru
        _
      %p177 = scmp.lt.s32.totalorder %s14, 2
      // Predicated region
      $region29: #{tpu_custom_call.1} parent=5 // pred_check
        %p178 = pneg %p177
      $region30: #{tpu_custom_call.1} parent=5 // pred_check_branch
        %180 = sbr.rel (%p178) target = $region32
      $region31: #{tpu_custom_call.1} parent=5 // pred_region
        // Predicated region
        $region33: #{tpu_custom_call.1} parent=31 // pred_check
          %p181 = pneg %p34
        $region34: #{tpu_custom_call.1} parent=31 // pred_check_branch
          %183 = sbr.rel (%p181) target = $region36
        $region35: #{tpu_custom_call.1} parent=31 // pred_region
          %s184 = sand.u32 %s24, 1
          %s185 = sand.u32 %s24, 1
          %s186 = smul.addr %s185, 48
          %s187 = scalar_lea.vmem [#allocation2], %s186
          %s188 = smul.u32 2, %s14
          %s189 = smul.addr %s188, 8
          %s190 = scalar_lea.vmem %s0, %s189
          // Predicated region
          $region37: #{tpu_custom_call.1} parent=35 // pred_check
            _
          $region38: #{tpu_custom_call.1} parent=35 // pred_check_branch
            %192 = sbr.rel (0) target = $region40
          $region39: #{tpu_custom_call.1} parent=35 // pred_region
            // Predicated region
            $region41: #{tpu_custom_call.1} parent=39 // pred_check
              _
            $region42: #{tpu_custom_call.1} parent=39 // pred_check_branch
              %194 = sbr.rel (0) target = $region44
            $region43: #{tpu_custom_call.1} parent=39 // pred_region
              loop: start=0, step=1, limit=1
              $region45: #{tpu_custom_call.1} parent=43 // loop_pre_header
                _
              $region46: #{tpu_custom_call.1} parent=43 // loop_header
                %s196 = sphi 0, %s200
                %p197 = scmp.ge.s32.totalorder %s196, 1
                %s201 = sphi %s190, %s190
                %s202 = sphi %s187, %s187
              $region47: #{tpu_custom_call.1} parent=43 // loop_header_branch
                %199 = sbr.rel (%p197) target = $region51
              $region48: #{tpu_custom_call.1} parent=43 // loop_body
                %v203 = vld [vmem:[%s201] sm:$0xff]
                %204 = vst [vmem:[%s202] sm:$0xff] %v203
                %v205 = vld [vmem:[%s201 + $0x8] sm:$0xff]
                %206 = vst [vmem:[%s202 + $0x8] sm:$0xff] %v205
                %v207 = vld [vmem:[%s201 + $0x20] sm:$0xff]
                %208 = vst [vmem:[%s202 + $0x10] sm:$0xff] %v207
                %v209 = vld [vmem:[%s201 + $0x28] sm:$0xff]
                %210 = vst [vmem:[%s202 + $0x18] sm:$0xff] %v209
                %v211 = vld [vmem:[%s201 + $0x40] sm:$0xff]
                %212 = vst [vmem:[%s202 + $0x20] sm:$0xff] %v211
                %v213 = vld [vmem:[%s201 + $0x48] sm:$0xff]
                %214 = vst [vmem:[%s202 + $0x28] sm:$0xff] %v213
              $region49: #{tpu_custom_call.1} parent=43 // loop_footer
                %s200 = sadd.s32 1, %s196
              $region50: #{tpu_custom_call.1} parent=43 // loop_footer_branch
                %195 = sbr.rel target = $region46
              $region51: #{tpu_custom_call.1} parent=43 // loop_exit
                _
            $region44: #{tpu_custom_call.1} parent=39 // pred_fallthru
              _
            // Predicated region
            $region52: #{tpu_custom_call.1} parent=39 // pred_check
              _
            $region53: #{tpu_custom_call.1} parent=39 // pred_check_branch
              %216 = sbr.rel target = $region55
            $region54: #{tpu_custom_call.1} parent=39 // pred_region
              _
            $region55: #{tpu_custom_call.1} parent=39 // pred_fallthru
              _
          $region40: #{tpu_custom_call.1} parent=35 // pred_fallthru
            _
          %217 = vnop
        $region36: #{tpu_custom_call.1} parent=31 // pred_fallthru
          _
      $region32: #{tpu_custom_call.1} parent=5 // pred_fallthru
        _
      %p218 = scmp.le.s32.totalorder 1, %s14
      %p219 = scmp.lt.s32.totalorder %s14, 3
      %p220 = pnand %p218, %p219
      %p221 = pneg %p220
      // Predicated region
      $region56: #{tpu_custom_call.1} parent=5 // pred_check
        _
      $region57: #{tpu_custom_call.1} parent=5 // pred_check_branch
        %223 = sbr.rel (%p220) target = $region59
      $region58: #{tpu_custom_call.1} parent=5 // pred_region
        %s224 = ssub.s32 %s14, 1
        %s225 = sand.u32 %s27, 1
        %s226 = sand.u32 %s27, 1
        %s227 = smul.addr %s226, 48
        %s228 = scalar_lea.vmem [#allocation2], %s227
        // Predicated region
        $region60: #{tpu_custom_call.1} parent=58 // pred_check
          %p229 = pneg %p40
        $region61: #{tpu_custom_call.1} parent=58 // pred_check_branch
          %231 = sbr.rel (%p229) target = $region63
        $region62: #{tpu_custom_call.1} parent=58 // pred_region
          _
        $region63: #{tpu_custom_call.1} parent=58 // pred_fallthru
          _
        %s232 = sand.u32 %s27, 1
        %s233 = sand.u32 %s27, 1
        %s234 = smul.addr %s233, 48
        %s235 = scalar_lea.vmem [#allocation2], %s234
        %p236 = pneg %p40
        %p237 = pneg %p37
        %p238 = pneg %p61
        %p239 = pneg %p58
        %p240 = pneg %p82
        %p241 = pneg %p79
        %p242 = pneg %p103
        %p243 = pneg %p100
        %p244 = pneg %p124
        %p245 = pneg %p121
        %p246 = pneg %p150
        %p247 = pneg %p147
        %s248 = sand.u32 %s137, 1
        %s249 = scalar_lea.sflag [#allocation4], %s248
        %s250 = sand.u32 %s137, 1
        %s251 = smul.addr %s250, 48
        %s252 = scalar_lea.vmem [#allocation3], %s251
        %s253 = smul.u32 2, %s19
        %s254 = smul.u32 2, %s19
        %v256 = vld [vmem:[%s228] sm:$0xff]
        %v257 = vld [vmem:[%s228 + $0x8] sm:$0xff]
        %v258 = vld [vmem:[%s228 + $0x10] sm:$0xff]
        %v259 = vld [vmem:[%s228 + $0x18] sm:$0xff]
        %v260 = vld [vmem:[%s228 + $0x20] sm:$0xff]
        %v261 = vld [vmem:[%s228 + $0x28] sm:$0xff]
        %v262 = vld [vmem:[%s1] sm:$0xf]
        %v263 = vld [vmem:[%s1 + $0x4] sm:$0xf]
        %v264 = vld [vmem:[%s1 + $0x8] sm:$0xf]
        %v265 = vld [vmem:[%s1 + $0xc] sm:$0xf]
        %v266 = vpack.c.bf16 %v258, %v256
        %v267 = vpack.c.bf16 %v259, %v257
        %v268 = vld [vmem:[%s3] sm:$0xff]
        %v269 = vld [vmem:[%s3 + $0x8] sm:$0xff]
        %v270 = vld [vmem:[%s3 + $0x10] sm:$0xff]
        %v271 = vld [vmem:[%s3 + $0x18] sm:$0xff]
        %273 = vset.pattern.permute.xlu0 0
        %274 = vperm.xlu0 %273, %v268
        %v275 = vpop.permute.xlu0 %274
        %278 = vset.pattern.permute.xlu0 0
        %279 = vperm.xlu0 %278, %v269
        %v280 = vpop.permute.xlu0 %279
        %283 = vset.pattern.permute.xlu0 0
        %284 = vperm.xlu0 %283, %v270
        %v285 = vpop.permute.xlu0 %284
        %288 = vset.pattern.permute.xlu0 0
        %289 = vperm.xlu0 %288, %v271
        %v290 = vpop.permute.xlu0 %289
        %v296 = vunpack.c.l.b16 %v262
        %v297 = vunpack.c.l.b16 %v263
        %v298 = vunpack.c.l.b16 %v264
        %v299 = vunpack.c.l.b16 %v265
        %v300 = vpack.c.b16 %v297, %v296
        %v301 = vpack.c.b16 %v299, %v298
        %vm302 = vcmask 130048
        %v304 = vsel %vm302, %v300, 0
        %v307 = vsel %vm302, %v301, 0
        %309 = vmatprep.subr.bf16.mxu0 %v267
        %310 = vmatpush1.bf16.msra.mxu0 %v266
        %311 = vmatprep.subr.bf16.mxu0 0
        %312 = vmatpush1.bf16.msra.mxu0 0
        %313 = vmatprep.subr.bf16.mxu0 0
        %314 = vmatpush1.bf16.msra.mxu0 0
        %315 = vmatprep.subr.bf16.mxu0 0
        %316 = vmatpush1.bf16.msra.mxu0 0
        %317 = vmatprep.subr.bf16.mxu0 0
        %318 = vmatpush1.bf16.msra.mxu0 0
        %319 = vmatprep.subr.bf16.mxu0 0
        %320 = vmatpush1.bf16.msra.mxu0 0
        %321 = vmatprep.subr.bf16.mxu0 0
        %322 = vmatpush1.bf16.msra.mxu0 0
        %323 = vmatprep.subr.bf16.mxu0 0
        %324 = vmatpush1.bf16.msra.mxu0 0
        %325 = vmatprep.subr.bf16.mxu0 0
        %326 = vmatpush1.bf16.msra.mxu0 0
        %327 = vmatprep.subr.bf16.mxu0 0
        %328 = vmatpush1.bf16.msra.mxu0 0
        %329 = vmatprep.subr.bf16.mxu0 0
        %330 = vmatpush1.bf16.msra.mxu0 0
        %331 = vmatprep.subr.bf16.mxu0 0
        %332 = vmatpush1.bf16.msra.mxu0 0
        %333 = vmatprep.subr.bf16.mxu0 0
        %334 = vmatpush1.bf16.msra.mxu0 0
        %335 = vmatprep.subr.bf16.mxu0 0
        %336 = vmatpush1.bf16.msra.mxu0 0
        %337 = vmatprep.subr.bf16.mxu0 0
        %338 = vmatpush1.bf16.msra.mxu0 0
        %339 = vmatprep.subr.bf16.mxu0 0
        %340 = vmatpush1.bf16.msra.mxu0 0
        %341 = vmatprep.mubr.bf16.mxu0 0
        %342 = vmatmul.mubr.bf16.gmra.mrb[0].mxu0 %v304
        %v343 = vpop.f32.mrb[0].mxu0
        %v344 = vadd.f32 %v275, %v343
        %v345 = vpop.f32.mrb[0].mxu0
        %v346 = vadd.f32 %v275, %v345
        %v347 = vpop.f32.mrb[0].mxu0
        %v348 = vadd.f32 %v280, %v347
        %v349 = vpop.f32.mrb[0].mxu0
        %v350 = vadd.f32 %v280, %v349
        %351 = vmatprep.mubr.bf16.mxu0 0
        %352 = vmatmul.mubr.bf16.gmra.mrb[0].mxu0 %v307
        %v353 = vpop.f32.mrb[0].mxu0
        %v354 = vadd.f32 %v285, %v353
        %v355 = vpop.f32.mrb[0].mxu0
        %v356 = vadd.f32 %v285, %v355
        %v357 = vpop.f32.mrb[0].mxu0
        %v358 = vadd.f32 %v290, %v357
        %v359 = vpop.f32.mrb[0].mxu0
        %v360 = vadd.f32 %v290, %v359
        %361 = vdwg.mxu0
        %v362 = vmax.f32 %v344, 0.0
        %v363 = vmax.f32 %v346, 0.0
        %v364 = vmax.f32 %v348, 0.0
        %v365 = vmax.f32 %v350, 0.0
        %v366 = vmax.f32 %v354, 0.0
        %v367 = vmax.f32 %v356, 0.0
        %v368 = vmax.f32 %v358, 0.0
        %v369 = vmax.f32 %v360, 0.0
        %v370 = vld [vmem:[%s2] sm:$0xf]
        %v371 = vld [vmem:[%s2 + $0x4] sm:$0xf]
        %v372 = vld [vmem:[%s2 + $0x8] sm:$0xf]
        %v373 = vld [vmem:[%s2 + $0xc] sm:$0xf]
        %v374 = vpack.c.bf16 %v364, %v362
        %v375 = vpack.c.bf16 %v365, %v363
        %v376 = vpack.c.bf16 %v368, %v366
        %v377 = vpack.c.bf16 %v369, %v367
        %s378 = scalar_lea.vmem %s3, 32
        %v379 = vld [vmem:[%s378] sm:$0xff]
        %v380 = vld [vmem:[%s378 + $0x8] sm:$0xff]
        %v381 = vld [vmem:[%s378 + $0x10] sm:$0xff]
        %v382 = vld [vmem:[%s378 + $0x18] sm:$0xff]
        %384 = vset.pattern.permute.xlu0 0
        %385 = vperm.xlu0 %384, %v379
        %v386 = vpop.permute.xlu0 %385
        %389 = vset.pattern.permute.xlu0 0
        %390 = vperm.xlu0 %389, %v380
        %v391 = vpop.permute.xlu0 %390
        %394 = vset.pattern.permute.xlu0 0
        %395 = vperm.xlu0 %394, %v381
        %v396 = vpop.permute.xlu0 %395
        %399 = vset.pattern.permute.xlu0 0
        %400 = vperm.xlu0 %399, %v382
        %v401 = vpop.permute.xlu0 %400
        %v407 = vunpack.c.l.b16 %v370
        %v408 = vunpack.c.l.b16 %v371
        %v409 = vunpack.c.l.b16 %v372
        %v410 = vunpack.c.l.b16 %v373
        %v411 = vpack.c.b16 %v408, %v407
        %v412 = vpack.c.b16 %v410, %v409
        %vm413 = vcmask 261120
        %v415 = vsel %vm413, %v411, 0
        %v418 = vsel %vm413, %v412, 0
        %420 = vmatprep.subr.bf16.mxu0 %v375
        %421 = vmatpush1.bf16.msra.mxu0 %v374
        %422 = vmatprep.subr.bf16.mxu0 %v377
        %423 = vmatpush1.bf16.msra.mxu0 %v376
        %424 = vmatprep.subr.bf16.mxu0 0
        %425 = vmatpush1.bf16.msra.mxu0 0
        %426 = vmatprep.subr.bf16.mxu0 0
        %427 = vmatpush1.bf16.msra.mxu0 0
        %428 = vmatprep.subr.bf16.mxu0 0
        %429 = vmatpush1.bf16.msra.mxu0 0
        %430 = vmatprep.subr.bf16.mxu0 0
        %431 = vmatpush1.bf16.msra.mxu0 0
        %432 = vmatprep.subr.bf16.mxu0 0
        %433 = vmatpush1.bf16.msra.mxu0 0
        %434 = vmatprep.subr.bf16.mxu0 0
        %435 = vmatpush1.bf16.msra.mxu0 0
        %436 = vmatprep.subr.bf16.mxu0 0
        %437 = vmatpush1.bf16.msra.mxu0 0
        %438 = vmatprep.subr.bf16.mxu0 0
        %439 = vmatpush1.bf16.msra.mxu0 0
        %440 = vmatprep.subr.bf16.mxu0 0
        %441 = vmatpush1.bf16.msra.mxu0 0
        %442 = vmatprep.subr.bf16.mxu0 0
        %443 = vmatpush1.bf16.msra.mxu0 0
        %444 = vmatprep.subr.bf16.mxu0 0
        %445 = vmatpush1.bf16.msra.mxu0 0
        %446 = vmatprep.subr.bf16.mxu0 0
        %447 = vmatpush1.bf16.msra.mxu0 0
        %448 = vmatprep.subr.bf16.mxu0 0
        %449 = vmatpush1.bf16.msra.mxu0 0
        %450 = vmatprep.subr.bf16.mxu0 0
        %451 = vmatpush1.bf16.msra.mxu0 0
        %452 = vmatprep.mubr.bf16.mxu0 0
        %453 = vmatmul.mubr.bf16.gmra.mrb[0].mxu0 %v415
        %v454 = vpop.f32.mrb[0].mxu0
        %v455 = vadd.f32 %v386, %v454
        %v456 = vpop.f32.mrb[0].mxu0
        %v457 = vadd.f32 %v386, %v456
        %v458 = vpop.f32.mrb[0].mxu0
        %v459 = vadd.f32 %v391, %v458
        %v460 = vpop.f32.mrb[0].mxu0
        %v461 = vadd.f32 %v391, %v460
        %462 = vmatprep.mubr.bf16.mxu0 0
        %463 = vmatmul.mubr.bf16.gmra.mrb[0].mxu0 %v418
        %v464 = vpop.f32.mrb[0].mxu0
        %v465 = vadd.f32 %v396, %v464
        %v466 = vpop.f32.mrb[0].mxu0
        %v467 = vadd.f32 %v396, %v466
        %v468 = vpop.f32.mrb[0].mxu0
        %v469 = vadd.f32 %v401, %v468
        %v470 = vpop.f32.mrb[0].mxu0
        %v471 = vadd.f32 %v401, %v470
        %472 = vdwg.mxu0
        %v473 = vmax.f32 %v455, 0.0
        %v474 = vmax.f32 %v457, 0.0
        %v475 = vmax.f32 %v459, 0.0
        %v476 = vmax.f32 %v461, 0.0
        %v477 = vmax.f32 %v465, 0.0
        %v478 = vmax.f32 %v467, 0.0
        %v479 = vmax.f32 %v469, 0.0
        %v480 = vmax.f32 %v471, 0.0
        %s481 = scalar_lea.vmem %s2, 16
        %v482 = vld [vmem:[%s481] sm:$0xf]
        %v483 = vld [vmem:[%s481 + $0x4] sm:$0xf]
        %v484 = vld [vmem:[%s481 + $0x8] sm:$0xf]
        %v485 = vld [vmem:[%s481 + $0xc] sm:$0xf]
        %v486 = vpack.c.bf16 %v475, %v473
        %v487 = vpack.c.bf16 %v476, %v474
        %v488 = vpack.c.bf16 %v479, %v477
        %v489 = vpack.c.bf16 %v480, %v478
        %s490 = scalar_lea.vmem %s3, 64
        %v491 = vld [vmem:[%s490] sm:$0xff]
        %v492 = vld [vmem:[%s490 + $0x8] sm:$0xff]
        %v493 = vld [vmem:[%s490 + $0x10] sm:$0xff]
        %v494 = vld [vmem:[%s490 + $0x18] sm:$0xff]
        %496 = vset.pattern.permute.xlu0 0
        %497 = vperm.xlu0 %496, %v491
        %v498 = vpop.permute.xlu0 %497
        %501 = vset.pattern.permute.xlu0 0
        %502 = vperm.xlu0 %501, %v492
        %v503 = vpop.permute.xlu0 %502
        %506 = vset.pattern.permute.xlu0 0
        %507 = vperm.xlu0 %506, %v493
        %v508 = vpop.permute.xlu0 %507
        %511 = vset.pattern.permute.xlu0 0
        %512 = vperm.xlu0 %511, %v494
        %v513 = vpop.permute.xlu0 %512
        %v519 = vunpack.c.l.b16 %v482
        %v520 = vunpack.c.l.b16 %v483
        %v521 = vunpack.c.l.b16 %v484
        %v522 = vunpack.c.l.b16 %v485
        %v523 = vpack.c.b16 %v520, %v519
        %v524 = vpack.c.b16 %v522, %v521
        %v526 = vsel %vm413, %v523, 0
        %v529 = vsel %vm413, %v524, 0
        %531 = vmatprep.subr.bf16.mxu0 %v487
        %532 = vmatpush1.bf16.msra.mxu0 %v486
        %533 = vmatprep.subr.bf16.mxu0 %v489
        %534 = vmatpush1.bf16.msra.mxu0 %v488
        %535 = vmatprep.subr.bf16.mxu0 0
        %536 = vmatpush1.bf16.msra.mxu0 0
        %537 = vmatprep.subr.bf16.mxu0 0
        %538 = vmatpush1.bf16.msra.mxu0 0
        %539 = vmatprep.subr.bf16.mxu0 0
        %540 = vmatpush1.bf16.msra.mxu0 0
        %541 = vmatprep.subr.bf16.mxu0 0
        %542 = vmatpush1.bf16.msra.mxu0 0
        %543 = vmatprep.subr.bf16.mxu0 0
        %544 = vmatpush1.bf16.msra.mxu0 0
        %545 = vmatprep.subr.bf16.mxu0 0
        %546 = vmatpush1.bf16.msra.mxu0 0
        %547 = vmatprep.subr.bf16.mxu0 0
        %548 = vmatpush1.bf16.msra.mxu0 0
        %549 = vmatprep.subr.bf16.mxu0 0
        %550 = vmatpush1.bf16.msra.mxu0 0
        %551 = vmatprep.subr.bf16.mxu0 0
        %552 = vmatpush1.bf16.msra.mxu0 0
        %553 = vmatprep.subr.bf16.mxu0 0
        %554 = vmatpush1.bf16.msra.mxu0 0
        %555 = vmatprep.subr.bf16.mxu0 0
        %556 = vmatpush1.bf16.msra.mxu0 0
        %557 = vmatprep.subr.bf16.mxu0 0
        %558 = vmatpush1.bf16.msra.mxu0 0
        %559 = vmatprep.subr.bf16.mxu0 0
        %560 = vmatpush1.bf16.msra.mxu0 0
        %561 = vmatprep.subr.bf16.mxu0 0
        %562 = vmatpush1.bf16.msra.mxu0 0
        %563 = vmatprep.mubr.bf16.mxu0 0
        %564 = vmatmul.mubr.bf16.gmra.mrb[0].mxu0 %v526
        %v565 = vpop.f32.mrb[0].mxu0
        %v566 = vadd.f32 %v498, %v565
        %v567 = vpop.f32.mrb[0].mxu0
        %v568 = vadd.f32 %v498, %v567
        %v569 = vpop.f32.mrb[0].mxu0
        %v570 = vadd.f32 %v503, %v569
        %v571 = vpop.f32.mrb[0].mxu0
        %v572 = vadd.f32 %v503, %v571
        %573 = vmatprep.mubr.bf16.mxu0 0
        %574 = vmatmul.mubr.bf16.gmra.mrb[0].mxu0 %v529
        %v575 = vpop.f32.mrb[0].mxu0
        %v576 = vadd.f32 %v508, %v575
        %v577 = vpop.f32.mrb[0].mxu0
        %v578 = vadd.f32 %v508, %v577
        %v579 = vpop.f32.mrb[0].mxu0
        %v580 = vadd.f32 %v513, %v579
        %v581 = vpop.f32.mrb[0].mxu0
        %v582 = vadd.f32 %v513, %v581
        %583 = vdwg.mxu0
        %v584 = vmax.f32 %v566, 0.0
        %v585 = vmax.f32 %v568, 0.0
        %v586 = vmax.f32 %v570, 0.0
        %v587 = vmax.f32 %v572, 0.0
        %v588 = vmax.f32 %v576, 0.0
        %v589 = vmax.f32 %v578, 0.0
        %v590 = vmax.f32 %v580, 0.0
        %v591 = vmax.f32 %v582, 0.0
        %s592 = scalar_lea.vmem %s2, 32
        %v593 = vld [vmem:[%s592] sm:$0xf]
        %v594 = vld [vmem:[%s592 + $0x4] sm:$0xf]
        %v595 = vld [vmem:[%s592 + $0x8] sm:$0xf]
        %v596 = vld [vmem:[%s592 + $0xc] sm:$0xf]
        %v597 = vpack.c.bf16 %v586, %v584
        %v598 = vpack.c.bf16 %v587, %v585
        %v599 = vpack.c.bf16 %v590, %v588
        %v600 = vpack.c.bf16 %v591, %v589
        %s601 = scalar_lea.vmem %s3, 96
        %v602 = vld [vmem:[%s601] sm:$0xff]
        %v603 = vld [vmem:[%s601 + $0x8] sm:$0xff]
        %v604 = vld [vmem:[%s601 + $0x10] sm:$0xff]
        %v605 = vld [vmem:[%s601 + $0x18] sm:$0xff]
        %607 = vset.pattern.permute.xlu0 0
        %608 = vperm.xlu0 %607, %v602
        %v609 = vpop.permute.xlu0 %608
        %612 = vset.pattern.permute.xlu0 0
        %613 = vperm.xlu0 %612, %v603
        %v614 = vpop.permute.xlu0 %613
        %617 = vset.pattern.permute.xlu0 0
        %618 = vperm.xlu0 %617, %v604
        %v619 = vpop.permute.xlu0 %618
        %622 = vset.pattern.permute.xlu0 0
        %623 = vperm.xlu0 %622, %v605
        %v624 = vpop.permute.xlu0 %623
        %v630 = vunpack.c.l.b16 %v593
        %v631 = vunpack.c.l.b16 %v594
        %v632 = vunpack.c.l.b16 %v595
        %v633 = vunpack.c.l.b16 %v596
        %v634 = vpack.c.b16 %v631, %v630
        %v635 = vpack.c.b16 %v633, %v632
        %v637 = vsel %vm413, %v634, 0
        %v640 = vsel %vm413, %v635, 0
        %642 = vmatprep.subr.bf16.mxu0 %v598
        %643 = vmatpush1.bf16.msra.mxu0 %v597
        %644 = vmatprep.subr.bf16.mxu0 %v600
        %645 = vmatpush1.bf16.msra.mxu0 %v599
        %646 = vmatprep.subr.bf16.mxu0 0
        %647 = vmatpush1.bf16.msra.mxu0 0
        %648 = vmatprep.subr.bf16.mxu0 0
        %649 = vmatpush1.bf16.msra.mxu0 0
        %650 = vmatprep.subr.bf16.mxu0 0
        %651 = vmatpush1.bf16.msra.mxu0 0
        %652 = vmatprep.subr.bf16.mxu0 0
        %653 = vmatpush1.bf16.msra.mxu0 0
        %654 = vmatprep.subr.bf16.mxu0 0
        %655 = vmatpush1.bf16.msra.mxu0 0
        %656 = vmatprep.subr.bf16.mxu0 0
        %657 = vmatpush1.bf16.msra.mxu0 0
        %658 = vmatprep.subr.bf16.mxu0 0
        %659 = vmatpush1.bf16.msra.mxu0 0
        %660 = vmatprep.subr.bf16.mxu0 0
        %661 = vmatpush1.bf16.msra.mxu0 0
        %662 = vmatprep.subr.bf16.mxu0 0
        %663 = vmatpush1.bf16.msra.mxu0 0
        %664 = vmatprep.subr.bf16.mxu0 0
        %665 = vmatpush1.bf16.msra.mxu0 0
        %666 = vmatprep.subr.bf16.mxu0 0
        %667 = vmatpush1.bf16.msra.mxu0 0
        %668 = vmatprep.subr.bf16.mxu0 0
        %669 = vmatpush1.bf16.msra.mxu0 0
        %670 = vmatprep.subr.bf16.mxu0 0
        %671 = vmatpush1.bf16.msra.mxu0 0
        %672 = vmatprep.subr.bf16.mxu0 0
        %673 = vmatpush1.bf16.msra.mxu0 0
        %674 = vmatprep.mubr.bf16.mxu0 0
        %675 = vmatmul.mubr.bf16.gmra.mrb[0].mxu0 %v637
        %v676 = vpop.f32.mrb[0].mxu0
        %v677 = vadd.f32 %v609, %v676
        %v678 = vpop.f32.mrb[0].mxu0
        %v679 = vadd.f32 %v609, %v678
        %v680 = vpop.f32.mrb[0].mxu0
        %v681 = vadd.f32 %v614, %v680
        %v682 = vpop.f32.mrb[0].mxu0
        %v683 = vadd.f32 %v614, %v682
        %684 = vmatprep.mubr.bf16.mxu0 0
        %685 = vmatmul.mubr.bf16.gmra.mrb[0].mxu0 %v640
        %v686 = vpop.f32.mrb[0].mxu0
        %v687 = vadd.f32 %v619, %v686
        %v688 = vpop.f32.mrb[0].mxu0
        %v689 = vadd.f32 %v619, %v688
        %v690 = vpop.f32.mrb[0].mxu0
        %v691 = vadd.f32 %v624, %v690
        %v692 = vpop.f32.mrb[0].mxu0
        %v693 = vadd.f32 %v624, %v692
        %694 = vdwg.mxu0
        %v695 = vmax.f32 %v677, 0.0
        %v696 = vmax.f32 %v679, 0.0
        %v697 = vmax.f32 %v681, 0.0
        %v698 = vmax.f32 %v683, 0.0
        %v699 = vmax.f32 %v687, 0.0
        %v700 = vmax.f32 %v689, 0.0
        %v701 = vmax.f32 %v691, 0.0
        %v702 = vmax.f32 %v693, 0.0
        %v703 = vld [vmem:[%s4] sm:$0xf]
        %v704 = vld [vmem:[%s4 + $0x4] sm:$0xf]
        %v705 = vld [vmem:[%s4 + $0x8] sm:$0xf]
        %v706 = vpack.c.bf16 %v697, %v695
        %v707 = vpack.c.bf16 %v698, %v696
        %v708 = vpack.c.bf16 %v701, %v699
        %v709 = vpack.c.bf16 %v702, %v700
        %v713 = vunpack.c.l.b16 %v703
        %v714 = vunpack.c.l.b16 %v704
        %v715 = vunpack.c.l.b16 %v705
        %v716 = vpack.c.b16 %v714, %v713
        %v717 = vpack.c.b16 %v715, %v715
        %v719 = vsel %vm413, %v716, 0
        %v722 = vsel %vm413, %v717, 0
        %724 = vmatprep.subr.bf16.mxu0 %v707
        %725 = vmatpush1.bf16.msra.mxu0 %v706
        %726 = vmatprep.subr.bf16.mxu0 %v709
        %727 = vmatpush1.bf16.msra.mxu0 %v708
        %728 = vmatprep.subr.bf16.mxu0 0
        %729 = vmatpush1.bf16.msra.mxu0 0
        %730 = vmatprep.subr.bf16.mxu0 0
        %731 = vmatpush1.bf16.msra.mxu0 0
        %732 = vmatprep.subr.bf16.mxu0 0
        %733 = vmatpush1.bf16.msra.mxu0 0
        %734 = vmatprep.subr.bf16.mxu0 0
        %735 = vmatpush1.bf16.msra.mxu0 0
        %736 = vmatprep.subr.bf16.mxu0 0
        %737 = vmatpush1.bf16.msra.mxu0 0
        %738 = vmatprep.subr.bf16.mxu0 0
        %739 = vmatpush1.bf16.msra.mxu0 0
        %740 = vmatprep.subr.bf16.mxu0 0
        %741 = vmatpush1.bf16.msra.mxu0 0
        %742 = vmatprep.subr.bf16.mxu0 0
        %743 = vmatpush1.bf16.msra.mxu0 0
        %744 = vmatprep.subr.bf16.mxu0 0
        %745 = vmatpush1.bf16.msra.mxu0 0
        %746 = vmatprep.subr.bf16.mxu0 0
        %747 = vmatpush1.bf16.msra.mxu0 0
        %748 = vmatprep.subr.bf16.mxu0 0
        %749 = vmatpush1.bf16.msra.mxu0 0
        %750 = vmatprep.subr.bf16.mxu0 0
        %751 = vmatpush1.bf16.msra.mxu0 0
        %752 = vmatprep.subr.bf16.mxu0 0
        %753 = vmatpush1.bf16.msra.mxu0 0
        %754 = vmatprep.subr.bf16.mxu0 0
        %755 = vmatpush1.bf16.msra.mxu0 0
        %756 = vmatprep.mubr.bf16.mxu0 0
        %757 = vmatmul.mubr.bf16.gmra.mrb[0].mxu0 %v719
        %v758 = vpop.f32.mrb[0].mxu0
        %v759 = vadd.f32 0.0, %v758
        %v760 = vpop.f32.mrb[0].mxu0
        %v761 = vadd.f32 0.0, %v760
        %v762 = vpop.f32.mrb[0].mxu0
        %v763 = vadd.f32 0.0, %v762
        %v764 = vpop.f32.mrb[0].mxu0
        %v765 = vadd.f32 0.0, %v764
        %766 = vmatprep.mubr.bf16.mxu0 0
        %767 = vmatmul.mubr.bf16.gmra.mrb[0].mxu0 %v722
        %v768 = vpop.f32.mrb[0].mxu0
        %v769 = vadd.f32 0.0, %v768
        %v770 = vpop.f32.mrb[0].mxu0
        %v771 = vadd.f32 0.0, %v770
        %v772 = vpop.f32.mrb[0].mxu0
        %v773 = vpop.f32.mrb[0].mxu0
        %774 = vdwg.mxu0
        %v775 = vadd.f32 %v256, %v759
        %v776 = vadd.f32 %v257, %v761
        %v777 = vadd.f32 %v258, %v763
        %v778 = vadd.f32 %v259, %v765
        %v779 = vadd.f32 %v260, %v769
        %v780 = vadd.f32 %v261, %v771
        %s781 = scalar_lea.vmem %s1, 16
        %v782 = vld [vmem:[%s781] sm:$0xf]
        %v783 = vld [vmem:[%s781 + $0x4] sm:$0xf]
        %v784 = vld [vmem:[%s781 + $0x8] sm:$0xf]
        %v785 = vld [vmem:[%s781 + $0xc] sm:$0xf]
        %v786 = vpack.c.bf16 %v777, %v775
        %v787 = vpack.c.bf16 %v778, %v776
        %s788 = scalar_lea.vmem %s3, 128
        %v789 = vld [vmem:[%s788] sm:$0xff]
        %v790 = vld [vmem:[%s788 + $0x8] sm:$0xff]
        %v791 = vld [vmem:[%s788 + $0x10] sm:$0xff]
        %v792 = vld [vmem:[%s788 + $0x18] sm:$0xff]
        %794 = vset.pattern.permute.xlu0 0
        %795 = vperm.xlu0 %794, %v789
        %v796 = vpop.permute.xlu0 %795
        %799 = vset.pattern.permute.xlu0 0
        %800 = vperm.xlu0 %799, %v790
        %v801 = vpop.permute.xlu0 %800
        %804 = vset.pattern.permute.xlu0 0
        %805 = vperm.xlu0 %804, %v791
        %v806 = vpop.permute.xlu0 %805
        %809 = vset.pattern.permute.xlu0 0
        %810 = vperm.xlu0 %809, %v792
        %v811 = vpop.permute.xlu0 %810
        %v817 = vunpack.c.l.b16 %v782
        %v818 = vunpack.c.l.b16 %v783
        %v819 = vunpack.c.l.b16 %v784
        %v820 = vunpack.c.l.b16 %v785
        %v821 = vpack.c.b16 %v818, %v817
        %v822 = vpack.c.b16 %v820, %v819
        %v824 = vsel %vm302, %v821, 0
        %v827 = vsel %vm302, %v822, 0
        %829 = vmatprep.subr.bf16.mxu0 %v787
        %830 = vmatpush1.bf16.msra.mxu0 %v786
        %831 = vmatprep.subr.bf16.mxu0 0
        %832 = vmatpush1.bf16.msra.mxu0 0
        %833 = vmatprep.subr.bf16.mxu0 0
        %834 = vmatpush1.bf16.msra.mxu0 0
        %835 = vmatprep.subr.bf16.mxu0 0
        %836 = vmatpush1.bf16.msra.mxu0 0
        %837 = vmatprep.subr.bf16.mxu0 0
        %838 = vmatpush1.bf16.msra.mxu0 0
        %839 = vmatprep.subr.bf16.mxu0 0
        %840 = vmatpush1.bf16.msra.mxu0 0
        %841 = vmatprep.subr.bf16.mxu0 0
        %842 = vmatpush1.bf16.msra.mxu0 0
        %843 = vmatprep.subr.bf16.mxu0 0
        %844 = vmatpush1.bf16.msra.mxu0 0
        %845 = vmatprep.subr.bf16.mxu0 0
        %846 = vmatpush1.bf16.msra.mxu0 0
        %847 = vmatprep.subr.bf16.mxu0 0
        %848 = vmatpush1.bf16.msra.mxu0 0
        %849 = vmatprep.subr.bf16.mxu0 0
        %850 = vmatpush1.bf16.msra.mxu0 0
        %851 = vmatprep.subr.bf16.mxu0 0
        %852 = vmatpush1.bf16.msra.mxu0 0
        %853 = vmatprep.subr.bf16.mxu0 0
        %854 = vmatpush1.bf16.msra.mxu0 0
        %855 = vmatprep.subr.bf16.mxu0 0
        %856 = vmatpush1.bf16.msra.mxu0 0
        %857 = vmatprep.subr.bf16.mxu0 0
        %858 = vmatpush1.bf16.msra.mxu0 0
        %859 = vmatprep.subr.bf16.mxu0 0
        %860 = vmatpush1.bf16.msra.mxu0 0
        %861 = vmatprep.mubr.bf16.mxu0 0
        %862 = vmatmul.mubr.bf16.gmra.mrb[0].mxu0 %v824
        %v863 = vpop.f32.mrb[0].mxu0
        %v864 = vadd.f32 %v796, %v863
        %v865 = vpop.f32.mrb[0].mxu0
        %v866 = vadd.f32 %v796, %v865
        %v867 = vpop.f32.mrb[0].mxu0
        %v868 = vadd.f32 %v801, %v867
        %v869 = vpop.f32.mrb[0].mxu0
        %v870 = vadd.f32 %v801, %v869
        %871 = vmatprep.mubr.bf16.mxu0 0
        %872 = vmatmul.mubr.bf16.gmra.mrb[0].mxu0 %v827
        %v873 = vpop.f32.mrb[0].mxu0
        %v874 = vadd.f32 %v806, %v873
        %v875 = vpop.f32.mrb[0].mxu0
        %v876 = vadd.f32 %v806, %v875
        %v877 = vpop.f32.mrb[0].mxu0
        %v878 = vadd.f32 %v811, %v877
        %v879 = vpop.f32.mrb[0].mxu0
        %v880 = vadd.f32 %v811, %v879
        %881 = vdwg.mxu0
        %v882 = vmax.f32 %v864, 0.0
        %v883 = vmax.f32 %v866, 0.0
        %v884 = vmax.f32 %v868, 0.0
        %v885 = vmax.f32 %v870, 0.0
        %v886 = vmax.f32 %v874, 0.0
        %v887 = vmax.f32 %v876, 0.0
        %v888 = vmax.f32 %v878, 0.0
        %v889 = vmax.f32 %v880, 0.0
        %s890 = scalar_lea.vmem %s2, 48
        %v891 = vld [vmem:[%s890] sm:$0xf]
        %v892 = vld [vmem:[%s890 + $0x4] sm:$0xf]
        %v893 = vld [vmem:[%s890 + $0x8] sm:$0xf]
        %v894 = vld [vmem:[%s890 + $0xc] sm:$0xf]
        %v895 = vpack.c.bf16 %v884, %v882
        %v896 = vpack.c.bf16 %v885, %v883
        %v897 = vpack.c.bf16 %v888, %v886
        %v898 = vpack.c.bf16 %v889, %v887
        %s899 = scalar_lea.vmem %s3, 160
        %v900 = vld [vmem:[%s899] sm:$0xff]
        %v901 = vld [vmem:[%s899 + $0x8] sm:$0xff]
        %v902 = vld [vmem:[%s899 + $0x10] sm:$0xff]
        %v903 = vld [vmem:[%s899 + $0x18] sm:$0xff]
        %905 = vset.pattern.permute.xlu0 0
        %906 = vperm.xlu0 %905, %v900
        %v907 = vpop.permute.xlu0 %906
        %910 = vset.pattern.permute.xlu0 0
        %911 = vperm.xlu0 %910, %v901
        %v912 = vpop.permute.xlu0 %911
        %915 = vset.pattern.permute.xlu0 0
        %916 = vperm.xlu0 %915, %v902
        %v917 = vpop.permute.xlu0 %916
        %920 = vset.pattern.permute.xlu0 0
        %921 = vperm.xlu0 %920, %v903
        %v922 = vpop.permute.xlu0 %921
        %v928 = vunpack.c.l.b16 %v891
        %v929 = vunpack.c.l.b16 %v892
        %v930 = vunpack.c.l.b16 %v893
        %v931 = vunpack.c.l.b16 %v894
        %v932 = vpack.c.b16 %v929, %v928
        %v933 = vpack.c.b16 %v931, %v930
        %v935 = vsel %vm413, %v932, 0
        %v938 = vsel %vm413, %v933, 0
        %940 = vmatprep.subr.bf16.mxu0 %v896
        %941 = vmatpush1.bf16.msra.mxu0 %v895
        %942 = vmatprep.subr.bf16.mxu0 %v898
        %943 = vmatpush1.bf16.msra.mxu0 %v897
        %944 = vmatprep.subr.bf16.mxu0 0
        %945 = vmatpush1.bf16.msra.mxu0 0
        %946 = vmatprep.subr.bf16.mxu0 0
        %947 = vmatpush1.bf16.msra.mxu0 0
        %948 = vmatprep.subr.bf16.mxu0 0
        %949 = vmatpush1.bf16.msra.mxu0 0
        %950 = vmatprep.subr.bf16.mxu0 0
        %951 = vmatpush1.bf16.msra.mxu0 0
        %952 = vmatprep.subr.bf16.mxu0 0
        %953 = vmatpush1.bf16.msra.mxu0 0
        %954 = vmatprep.subr.bf16.mxu0 0
        %955 = vmatpush1.bf16.msra.mxu0 0
        %956 = vmatprep.subr.bf16.mxu0 0
        %957 = vmatpush1.bf16.msra.mxu0 0
        %958 = vmatprep.subr.bf16.mxu0 0
        %959 = vmatpush1.bf16.msra.mxu0 0
        %960 = vmatprep.subr.bf16.mxu0 0
        %961 = vmatpush1.bf16.msra.mxu0 0
        %962 = vmatprep.subr.bf16.mxu0 0
        %963 = vmatpush1.bf16.msra.mxu0 0
        %964 = vmatprep.subr.bf16.mxu0 0
        %965 = vmatpush1.bf16.msra.mxu0 0
        %966 = vmatprep.subr.bf16.mxu0 0
        %967 = vmatpush1.bf16.msra.mxu0 0
        %968 = vmatprep.subr.bf16.mxu0 0
        %969 = vmatpush1.bf16.msra.mxu0 0
        %970 = vmatprep.subr.bf16.mxu0 0
        %971 = vmatpush1.bf16.msra.mxu0 0
        %972 = vmatprep.mubr.bf16.mxu0 0
        %973 = vmatmul.mubr.bf16.gmra.mrb[0].mxu0 %v935
        %v974 = vpop.f32.mrb[0].mxu0
        %v975 = vadd.f32 %v907, %v974
        %v976 = vpop.f32.mrb[0].mxu0
        %v977 = vadd.f32 %v907, %v976
        %v978 = vpop.f32.mrb[0].mxu0
        %v979 = vadd.f32 %v912, %v978
        %v980 = vpop.f32.mrb[0].mxu0
        %v981 = vadd.f32 %v912, %v980
        %982 = vmatprep.mubr.bf16.mxu0 0
        %983 = vmatmul.mubr.bf16.gmra.mrb[0].mxu0 %v938
        %v984 = vpop.f32.mrb[0].mxu0
        %v985 = vadd.f32 %v917, %v984
        %v986 = vpop.f32.mrb[0].mxu0
        %v987 = vadd.f32 %v917, %v986
        %v988 = vpop.f32.mrb[0].mxu0
        %v989 = vadd.f32 %v922, %v988
        %v990 = vpop.f32.mrb[0].mxu0
        %v991 = vadd.f32 %v922, %v990
        %992 = vdwg.mxu0
        %v993 = vmax.f32 %v975, 0.0
        %v994 = vmax.f32 %v977, 0.0
        %v995 = vmax.f32 %v979, 0.0
        %v996 = vmax.f32 %v981, 0.0
        %v997 = vmax.f32 %v985, 0.0
        %v998 = vmax.f32 %v987, 0.0
        %v999 = vmax.f32 %v989, 0.0
        %v1000 = vmax.f32 %v991, 0.0
        %s1001 = scalar_lea.vmem %s2, 64
        %v1002 = vld [vmem:[%s1001] sm:$0xf]
        %v1003 = vld [vmem:[%s1001 + $0x4] sm:$0xf]
        %v1004 = vld [vmem:[%s1001 + $0x8] sm:$0xf]
        %v1005 = vld [vmem:[%s1001 + $0xc] sm:$0xf]
        %v1006 = vpack.c.bf16 %v995, %v993
        %v1007 = vpack.c.bf16 %v996, %v994
        %v1008 = vpack.c.bf16 %v999, %v997
        %v1009 = vpack.c.bf16 %v1000, %v998
        %s1010 = scalar_lea.vmem %s3, 192
        %v1011 = vld [vmem:[%s1010] sm:$0xff]
        %v1012 = vld [vmem:[%s1010 + $0x8] sm:$0xff]
        %v1013 = vld [vmem:[%s1010 + $0x10] sm:$0xff]
        %v1014 = vld [vmem:[%s1010 + $0x18] sm:$0xff]
        %1016 = vset.pattern.permute.xlu0 0
        %1017 = vperm.xlu0 %1016, %v1011
        %v1018 = vpop.permute.xlu0 %1017
        %1021 = vset.pattern.permute.xlu0 0
        %1022 = vperm.xlu0 %1021, %v1012
        %v1023 = vpop.permute.xlu0 %1022
        %1026 = vset.pattern.permute.xlu0 0
        %1027 = vperm.xlu0 %1026, %v1013
        %v1028 = vpop.permute.xlu0 %1027
        %1031 = vset.pattern.permute.xlu0 0
        %1032 = vperm.xlu0 %1031, %v1014
        %v1033 = vpop.permute.xlu0 %1032
        %v1039 = vunpack.c.l.b16 %v1002
        %v1040 = vunpack.c.l.b16 %v1003
        %v1041 = vunpack.c.l.b16 %v1004
        %v1042 = vunpack.c.l.b16 %v1005
        %v1043 = vpack.c.b16 %v1040, %v1039
        %v1044 = vpack.c.b16 %v1042, %v1041
        %v1046 = vsel %vm413, %v1043, 0
        %v1049 = vsel %vm413, %v1044, 0
        %1051 = vmatprep.subr.bf16.mxu0 %v1007
        %1052 = vmatpush1.bf16.msra.mxu0 %v1006
        %1053 = vmatprep.subr.bf16.mxu0 %v1009
        %1054 = vmatpush1.bf16.msra.mxu0 %v1008
        %1055 = vmatprep.subr.bf16.mxu0 0
        %1056 = vmatpush1.bf16.msra.mxu0 0
        %1057 = vmatprep.subr.bf16.mxu0 0
        %1058 = vmatpush1.bf16.msra.mxu0 0
        %1059 = vmatprep.subr.bf16.mxu0 0
        %1060 = vmatpush1.bf16.msra.mxu0 0
        %1061 = vmatprep.subr.bf16.mxu0 0
        %1062 = vmatpush1.bf16.msra.mxu0 0
        %1063 = vmatprep.subr.bf16.mxu0 0
        %1064 = vmatpush1.bf16.msra.mxu0 0
        %1065 = vmatprep.subr.bf16.mxu0 0
        %1066 = vmatpush1.bf16.msra.mxu0 0
        %1067 = vmatprep.subr.bf16.mxu0 0
        %1068 = vmatpush1.bf16.msra.mxu0 0
        %1069 = vmatprep.subr.bf16.mxu0 0
        %1070 = vmatpush1.bf16.msra.mxu0 0
        %1071 = vmatprep.subr.bf16.mxu0 0
        %1072 = vmatpush1.bf16.msra.mxu0 0
        %1073 = vmatprep.subr.bf16.mxu0 0
        %1074 = vmatpush1.bf16.msra.mxu0 0
        %1075 = vmatprep.subr.bf16.mxu0 0
        %1076 = vmatpush1.bf16.msra.mxu0 0
        %1077 = vmatprep.subr.bf16.mxu0 0
        %1078 = vmatpush1.bf16.msra.mxu0 0
        %1079 = vmatprep.subr.bf16.mxu0 0
        %1080 = vmatpush1.bf16.msra.mxu0 0
        %1081 = vmatprep.subr.bf16.mxu0 0
        %1082 = vmatpush1.bf16.msra.mxu0 0
        %1083 = vmatprep.mubr.bf16.mxu0 0
        %1084 = vmatmul.mubr.bf16.gmra.mrb[0].mxu0 %v1046
        %v1085 = vpop.f32.mrb[0].mxu0
        %v1086 = vadd.f32 %v1018, %v1085
        %v1087 = vpop.f32.mrb[0].mxu0
        %v1088 = vadd.f32 %v1018, %v1087
        %v1089 = vpop.f32.mrb[0].mxu0
        %v1090 = vadd.f32 %v1023, %v1089
        %v1091 = vpop.f32.mrb[0].mxu0
        %v1092 = vadd.f32 %v1023, %v1091
        %1093 = vmatprep.mubr.bf16.mxu0 0
        %1094 = vmatmul.mubr.bf16.gmra.mrb[0].mxu0 %v1049
        %v1095 = vpop.f32.mrb[0].mxu0
        %v1096 = vadd.f32 %v1028, %v1095
        %v1097 = vpop.f32.mrb[0].mxu0
        %v1098 = vadd.f32 %v1028, %v1097
        %v1099 = vpop.f32.mrb[0].mxu0
        %v1100 = vadd.f32 %v1033, %v1099
        %v1101 = vpop.f32.mrb[0].mxu0
        %v1102 = vadd.f32 %v1033, %v1101
        %1103 = vdwg.mxu0
        %v1104 = vmax.f32 %v1086, 0.0
        %v1105 = vmax.f32 %v1088, 0.0
        %v1106 = vmax.f32 %v1090, 0.0
        %v1107 = vmax.f32 %v1092, 0.0
        %v1108 = vmax.f32 %v1096, 0.0
        %v1109 = vmax.f32 %v1098, 0.0
        %v1110 = vmax.f32 %v1100, 0.0
        %v1111 = vmax.f32 %v1102, 0.0
        %s1112 = scalar_lea.vmem %s2, 80
        %v1113 = vld [vmem:[%s1112] sm:$0xf]
        %v1114 = vld [vmem:[%s1112 + $0x4] sm:$0xf]
        %v1115 = vld [vmem:[%s1112 + $0x8] sm:$0xf]
        %v1116 = vld [vmem:[%s1112 + $0xc] sm:$0xf]
        %v1117 = vpack.c.bf16 %v1106, %v1104
        %v1118 = vpack.c.bf16 %v1107, %v1105
        %v1119 = vpack.c.bf16 %v1110, %v1108
        %v1120 = vpack.c.bf16 %v1111, %v1109
        %s1121 = scalar_lea.vmem %s3, 224
        %v1122 = vld [vmem:[%s1121] sm:$0xff]
        %v1123 = vld [vmem:[%s1121 + $0x8] sm:$0xff]
        %v1124 = vld [vmem:[%s1121 + $0x10] sm:$0xff]
        %v1125 = vld [vmem:[%s1121 + $0x18] sm:$0xff]
        %1127 = vset.pattern.permute.xlu0 0
        %1128 = vperm.xlu0 %1127, %v1122
        %v1129 = vpop.permute.xlu0 %1128
        %1132 = vset.pattern.permute.xlu0 0
        %1133 = vperm.xlu0 %1132, %v1123
        %v1134 = vpop.permute.xlu0 %1133
        %1137 = vset.pattern.permute.xlu0 0
        %1138 = vperm.xlu0 %1137, %v1124
        %v1139 = vpop.permute.xlu0 %1138
        %1142 = vset.pattern.permute.xlu0 0
        %1143 = vperm.xlu0 %1142, %v1125
        %v1144 = vpop.permute.xlu0 %1143
        %v1150 = vunpack.c.l.b16 %v1113
        %v1151 = vunpack.c.l.b16 %v1114
        %v1152 = vunpack.c.l.b16 %v1115
        %v1153 = vunpack.c.l.b16 %v1116
        %v1154 = vpack.c.b16 %v1151, %v1150
        %v1155 = vpack.c.b16 %v1153, %v1152
        %v1157 = vsel %vm413, %v1154, 0
        %v1160 = vsel %vm413, %v1155, 0
        %1162 = vmatprep.subr.bf16.mxu0 %v1118
        %1163 = vmatpush1.bf16.msra.mxu0 %v1117
        %1164 = vmatprep.subr.bf16.mxu0 %v1120
        %1165 = vmatpush1.bf16.msra.mxu0 %v1119
        %1166 = vmatprep.subr.bf16.mxu0 0
        %1167 = vmatpush1.bf16.msra.mxu0 0
        %1168 = vmatprep.subr.bf16.mxu0 0
        %1169 = vmatpush1.bf16.msra.mxu0 0
        %1170 = vmatprep.subr.bf16.mxu0 0
        %1171 = vmatpush1.bf16.msra.mxu0 0
        %1172 = vmatprep.subr.bf16.mxu0 0
        %1173 = vmatpush1.bf16.msra.mxu0 0
        %1174 = vmatprep.subr.bf16.mxu0 0
        %1175 = vmatpush1.bf16.msra.mxu0 0
        %1176 = vmatprep.subr.bf16.mxu0 0
        %1177 = vmatpush1.bf16.msra.mxu0 0
        %1178 = vmatprep.subr.bf16.mxu0 0
        %1179 = vmatpush1.bf16.msra.mxu0 0
        %1180 = vmatprep.subr.bf16.mxu0 0
        %1181 = vmatpush1.bf16.msra.mxu0 0
        %1182 = vmatprep.subr.bf16.mxu0 0
        %1183 = vmatpush1.bf16.msra.mxu0 0
        %1184 = vmatprep.subr.bf16.mxu0 0
        %1185 = vmatpush1.bf16.msra.mxu0 0
        %1186 = vmatprep.subr.bf16.mxu0 0
        %1187 = vmatpush1.bf16.msra.mxu0 0
        %1188 = vmatprep.subr.bf16.mxu0 0
        %1189 = vmatpush1.bf16.msra.mxu0 0
        %1190 = vmatprep.subr.bf16.mxu0 0
        %1191 = vmatpush1.bf16.msra.mxu0 0
        %1192 = vmatprep.subr.bf16.mxu0 0
        %1193 = vmatpush1.bf16.msra.mxu0 0
        %1194 = vmatprep.mubr.bf16.mxu0 0
        %1195 = vmatmul.mubr.bf16.gmra.mrb[0].mxu0 %v1157
        %v1196 = vpop.f32.mrb[0].mxu0
        %v1197 = vadd.f32 %v1129, %v1196
        %v1198 = vpop.f32.mrb[0].mxu0
        %v1199 = vadd.f32 %v1129, %v1198
        %v1200 = vpop.f32.mrb[0].mxu0
        %v1201 = vadd.f32 %v1134, %v1200
        %v1202 = vpop.f32.mrb[0].mxu0
        %v1203 = vadd.f32 %v1134, %v1202
        %1204 = vmatprep.mubr.bf16.mxu0 0
        %1205 = vmatmul.mubr.bf16.gmra.mrb[0].mxu0 %v1160
        %v1206 = vpop.f32.mrb[0].mxu0
        %v1207 = vadd.f32 %v1139, %v1206
        %v1208 = vpop.f32.mrb[0].mxu0
        %v1209 = vadd.f32 %v1139, %v1208
        %v1210 = vpop.f32.mrb[0].mxu0
        %v1211 = vadd.f32 %v1144, %v1210
        %v1212 = vpop.f32.mrb[0].mxu0
        %v1213 = vadd.f32 %v1144, %v1212
        %1214 = vdwg.mxu0
        %v1215 = vmax.f32 %v1197, 0.0
        %v1216 = vmax.f32 %v1199, 0.0
        %v1217 = vmax.f32 %v1201, 0.0
        %v1218 = vmax.f32 %v1203, 0.0
        %v1219 = vmax.f32 %v1207, 0.0
        %v1220 = vmax.f32 %v1209, 0.0
        %v1221 = vmax.f32 %v1211, 0.0
        %v1222 = vmax.f32 %v1213, 0.0
        %s1223 = scalar_lea.vmem %s4, 12
        %v1224 = vld [vmem:[%s1223] sm:$0xf]
        %v1225 = vld [vmem:[%s1223 + $0x4] sm:$0xf]
        %v1226 = vld [vmem:[%s1223 + $0x8] sm:$0xf]
        %v1227 = vpack.c.bf16 %v1217, %v1215
        %v1228 = vpack.c.bf16 %v1218, %v1216
        %v1229 = vpack.c.bf16 %v1221, %v1219
        %v1230 = vpack.c.bf16 %v1222, %v1220
        %v1234 = vunpack.c.l.b16 %v1224
        %v1235 = vunpack.c.l.b16 %v1225
        %v1236 = vunpack.c.l.b16 %v1226
        %v1237 = vpack.c.b16 %v1235, %v1234
        %v1238 = vpack.c.b16 %v1236, %v1236
        %v1240 = vsel %vm413, %v1237, 0
        %v1243 = vsel %vm413, %v1238, 0
        %1245 = vmatprep.subr.bf16.mxu0 %v1228
        %1246 = vmatpush1.bf16.msra.mxu0 %v1227
        %1247 = vmatprep.subr.bf16.mxu0 %v1230
        %1248 = vmatpush1.bf16.msra.mxu0 %v1229
        %1249 = vmatprep.subr.bf16.mxu0 0
        %1250 = vmatpush1.bf16.msra.mxu0 0
        %1251 = vmatprep.subr.bf16.mxu0 0
        %1252 = vmatpush1.bf16.msra.mxu0 0
        %1253 = vmatprep.subr.bf16.mxu0 0
        %1254 = vmatpush1.bf16.msra.mxu0 0
        %1255 = vmatprep.subr.bf16.mxu0 0
        %1256 = vmatpush1.bf16.msra.mxu0 0
        %1257 = vmatprep.subr.bf16.mxu0 0
        %1258 = vmatpush1.bf16.msra.mxu0 0
        %1259 = vmatprep.subr.bf16.mxu0 0
        %1260 = vmatpush1.bf16.msra.mxu0 0
        %1261 = vmatprep.subr.bf16.mxu0 0
        %1262 = vmatpush1.bf16.msra.mxu0 0
        %1263 = vmatprep.subr.bf16.mxu0 0
        %1264 = vmatpush1.bf16.msra.mxu0 0
        %1265 = vmatprep.subr.bf16.mxu0 0
        %1266 = vmatpush1.bf16.msra.mxu0 0
        %1267 = vmatprep.subr.bf16.mxu0 0
        %1268 = vmatpush1.bf16.msra.mxu0 0
        %1269 = vmatprep.subr.bf16.mxu0 0
        %1270 = vmatpush1.bf16.msra.mxu0 0
        %1271 = vmatprep.subr.bf16.mxu0 0
        %1272 = vmatpush1.bf16.msra.mxu0 0
        %1273 = vmatprep.subr.bf16.mxu0 0
        %1274 = vmatpush1.bf16.msra.mxu0 0
        %1275 = vmatprep.subr.bf16.mxu0 0
        %1276 = vmatpush1.bf16.msra.mxu0 0
        %1277 = vmatprep.mubr.bf16.mxu0 0
        %1278 = vmatmul.mubr.bf16.gmra.mrb[0].mxu0 %v1240
        %v1279 = vpop.f32.mrb[0].mxu0
        %v1280 = vadd.f32 0.0, %v1279
        %v1281 = vpop.f32.mrb[0].mxu0
        %v1282 = vadd.f32 0.0, %v1281
        %v1283 = vpop.f32.mrb[0].mxu0
        %v1284 = vadd.f32 0.0, %v1283
        %v1285 = vpop.f32.mrb[0].mxu0
        %v1286 = vadd.f32 0.0, %v1285
        %1287 = vmatprep.mubr.bf16.mxu0 0
        %1288 = vmatmul.mubr.bf16.gmra.mrb[0].mxu0 %v1243
        %v1289 = vpop.f32.mrb[0].mxu0
        %v1290 = vadd.f32 0.0, %v1289
        %v1291 = vpop.f32.mrb[0].mxu0
        %v1292 = vadd.f32 0.0, %v1291
        %v1293 = vpop.f32.mrb[0].mxu0
        %v1294 = vpop.f32.mrb[0].mxu0
        %1295 = vdwg.mxu0
        %v1296 = vadd.f32 %v775, %v1280
        %v1297 = vadd.f32 %v776, %v1282
        %v1298 = vadd.f32 %v777, %v1284
        %v1299 = vadd.f32 %v778, %v1286
        %v1300 = vadd.f32 %v779, %v1290
        %v1301 = vadd.f32 %v780, %v1292
        %s1302 = scalar_lea.vmem %s1, 32
        %v1303 = vld [vmem:[%s1302] sm:$0xf]
        %v1304 = vld [vmem:[%s1302 + $0x4] sm:$0xf]
        %v1305 = vld [vmem:[%s1302 + $0x8] sm:$0xf]
        %v1306 = vld [vmem:[%s1302 + $0xc] sm:$0xf]
        %v1307 = vpack.c.bf16 %v1298, %v1296
        %v1308 = vpack.c.bf16 %v1299, %v1297
        %s1309 = scalar_lea.vmem %s3, 256
        %v1310 = vld [vmem:[%s1309] sm:$0xff]
        %v1311 = vld [vmem:[%s1309 + $0x8] sm:$0xff]
        %v1312 = vld [vmem:[%s1309 + $0x10] sm:$0xff]
        %v1313 = vld [vmem:[%s1309 + $0x18] sm:$0xff]
        %1315 = vset.pattern.permute.xlu0 0
        %1316 = vperm.xlu0 %1315, %v1310
        %v1317 = vpop.permute.xlu0 %1316
        %1320 = vset.pattern.permute.xlu0 0
        %1321 = vperm.xlu0 %1320, %v1311
        %v1322 = vpop.permute.xlu0 %1321
        %1325 = vset.pattern.permute.xlu0 0
        %1326 = vperm.xlu0 %1325, %v1312
        %v1327 = vpop.permute.xlu0 %1326
        %1330 = vset.pattern.permute.xlu0 0
        %1331 = vperm.xlu0 %1330, %v1313
        %v1332 = vpop.permute.xlu0 %1331
        %v1338 = vunpack.c.l.b16 %v1303
        %v1339 = vunpack.c.l.b16 %v1304
        %v1340 = vunpack.c.l.b16 %v1305
        %v1341 = vunpack.c.l.b16 %v1306
        %v1342 = vpack.c.b16 %v1339, %v1338
        %v1343 = vpack.c.b16 %v1341, %v1340
        %v1345 = vsel %vm302, %v1342, 0
        %v1348 = vsel %vm302, %v1343, 0
        %1350 = vmatprep.subr.bf16.mxu0 %v1308
        %1351 = vmatpush1.bf16.msra.mxu0 %v1307
        %1352 = vmatprep.subr.bf16.mxu0 0
        %1353 = vmatpush1.bf16.msra.mxu0 0
        %1354 = vmatprep.subr.bf16.mxu0 0
        %1355 = vmatpush1.bf16.msra.mxu0 0
        %1356 = vmatprep.subr.bf16.mxu0 0
        %1357 = vmatpush1.bf16.msra.mxu0 0
        %1358 = vmatprep.subr.bf16.mxu0 0
        %1359 = vmatpush1.bf16.msra.mxu0 0
        %1360 = vmatprep.subr.bf16.mxu0 0
        %1361 = vmatpush1.bf16.msra.mxu0 0
        %1362 = vmatprep.subr.bf16.mxu0 0
        %1363 = vmatpush1.bf16.msra.mxu0 0
        %1364 = vmatprep.subr.bf16.mxu0 0
        %1365 = vmatpush1.bf16.msra.mxu0 0
        %1366 = vmatprep.subr.bf16.mxu0 0
        %1367 = vmatpush1.bf16.msra.mxu0 0
        %1368 = vmatprep.subr.bf16.mxu0 0
        %1369 = vmatpush1.bf16.msra.mxu0 0
        %1370 = vmatprep.subr.bf16.mxu0 0
        %1371 = vmatpush1.bf16.msra.mxu0 0
        %1372 = vmatprep.subr.bf16.mxu0 0
        %1373 = vmatpush1.bf16.msra.mxu0 0
        %1374 = vmatprep.subr.bf16.mxu0 0
        %1375 = vmatpush1.bf16.msra.mxu0 0
        %1376 = vmatprep.subr.bf16.mxu0 0
        %1377 = vmatpush1.bf16.msra.mxu0 0
        %1378 = vmatprep.subr.bf16.mxu0 0
        %1379 = vmatpush1.bf16.msra.mxu0 0
        %1380 = vmatprep.subr.bf16.mxu0 0
        %1381 = vmatpush1.bf16.msra.mxu0 0
        %1382 = vmatprep.mubr.bf16.mxu0 0
        %1383 = vmatmul.mubr.bf16.gmra.mrb[0].mxu0 %v1345
        %v1384 = vpop.f32.mrb[0].mxu0
        %v1385 = vadd.f32 %v1317, %v1384
        %v1386 = vpop.f32.mrb[0].mxu0
        %v1387 = vadd.f32 %v1317, %v1386
        %v1388 = vpop.f32.mrb[0].mxu0
        %v1389 = vadd.f32 %v1322, %v1388
        %v1390 = vpop.f32.mrb[0].mxu0
        %v1391 = vadd.f32 %v1322, %v1390
        %1392 = vmatprep.mubr.bf16.mxu0 0
        %1393 = vmatmul.mubr.bf16.gmra.mrb[0].mxu0 %v1348
        %v1394 = vpop.f32.mrb[0].mxu0
        %v1395 = vadd.f32 %v1327, %v1394
        %v1396 = vpop.f32.mrb[0].mxu0
        %v1397 = vadd.f32 %v1327, %v1396
        %v1398 = vpop.f32.mrb[0].mxu0
        %v1399 = vadd.f32 %v1332, %v1398
        %v1400 = vpop.f32.mrb[0].mxu0
        %v1401 = vadd.f32 %v1332, %v1400
        %1402 = vdwg.mxu0
        %v1403 = vmax.f32 %v1385, 0.0
        %v1404 = vmax.f32 %v1387, 0.0
        %v1405 = vmax.f32 %v1389, 0.0
        %v1406 = vmax.f32 %v1391, 0.0
        %v1407 = vmax.f32 %v1395, 0.0
        %v1408 = vmax.f32 %v1397, 0.0
        %v1409 = vmax.f32 %v1399, 0.0
        %v1410 = vmax.f32 %v1401, 0.0
        %s1411 = scalar_lea.vmem %s2, 96
        %v1412 = vld [vmem:[%s1411] sm:$0xf]
        %v1413 = vld [vmem:[%s1411 + $0x4] sm:$0xf]
        %v1414 = vld [vmem:[%s1411 + $0x8] sm:$0xf]
        %v1415 = vld [vmem:[%s1411 + $0xc] sm:$0xf]
        %v1416 = vpack.c.bf16 %v1405, %v1403
        %v1417 = vpack.c.bf16 %v1406, %v1404
        %v1418 = vpack.c.bf16 %v1409, %v1407
        %v1419 = vpack.c.bf16 %v1410, %v1408
        %s1420 = scalar_lea.vmem %s3, 288
        %v1421 = vld [vmem:[%s1420] sm:$0xff]
        %v1422 = vld [vmem:[%s1420 + $0x8] sm:$0xff]
        %v1423 = vld [vmem:[%s1420 + $0x10] sm:$0xff]
        %v1424 = vld [vmem:[%s1420 + $0x18] sm:$0xff]
        %1426 = vset.pattern.permute.xlu0 0
        %1427 = vperm.xlu0 %1426, %v1421
        %v1428 = vpop.permute.xlu0 %1427
        %1431 = vset.pattern.permute.xlu0 0
        %1432 = vperm.xlu0 %1431, %v1422
        %v1433 = vpop.permute.xlu0 %1432
        %1436 = vset.pattern.permute.xlu0 0
        %1437 = vperm.xlu0 %1436, %v1423
        %v1438 = vpop.permute.xlu0 %1437
        %1441 = vset.pattern.permute.xlu0 0
        %1442 = vperm.xlu0 %1441, %v1424
        %v1443 = vpop.permute.xlu0 %1442
        %v1449 = vunpack.c.l.b16 %v1412
        %v1450 = vunpack.c.l.b16 %v1413
        %v1451 = vunpack.c.l.b16 %v1414
        %v1452 = vunpack.c.l.b16 %v1415
        %v1453 = vpack.c.b16 %v1450, %v1449
        %v1454 = vpack.c.b16 %v1452, %v1451
        %v1456 = vsel %vm413, %v1453, 0
        %v1459 = vsel %vm413, %v1454, 0
        %1461 = vmatprep.subr.bf16.mxu0 %v1417
        %1462 = vmatpush1.bf16.msra.mxu0 %v1416
        %1463 = vmatprep.subr.bf16.mxu0 %v1419
        %1464 = vmatpush1.bf16.msra.mxu0 %v1418
        %1465 = vmatprep.subr.bf16.mxu0 0
        %1466 = vmatpush1.bf16.msra.mxu0 0
        %1467 = vmatprep.subr.bf16.mxu0 0
        %1468 = vmatpush1.bf16.msra.mxu0 0
        %1469 = vmatprep.subr.bf16.mxu0 0
        %1470 = vmatpush1.bf16.msra.mxu0 0
        %1471 = vmatprep.subr.bf16.mxu0 0
        %1472 = vmatpush1.bf16.msra.mxu0 0
        %1473 = vmatprep.subr.bf16.mxu0 0
        %1474 = vmatpush1.bf16.msra.mxu0 0
        %1475 = vmatprep.subr.bf16.mxu0 0
        %1476 = vmatpush1.bf16.msra.mxu0 0
        %1477 = vmatprep.subr.bf16.mxu0 0
        %1478 = vmatpush1.bf16.msra.mxu0 0
        %1479 = vmatprep.subr.bf16.mxu0 0
        %1480 = vmatpush1.bf16.msra.mxu0 0
        %1481 = vmatprep.subr.bf16.mxu0 0
        %1482 = vmatpush1.bf16.msra.mxu0 0
        %1483 = vmatprep.subr.bf16.mxu0 0
        %1484 = vmatpush1.bf16.msra.mxu0 0
        %1485 = vmatprep.subr.bf16.mxu0 0
        %1486 = vmatpush1.bf16.msra.mxu0 0
        %1487 = vmatprep.subr.bf16.mxu0 0
        %1488 = vmatpush1.bf16.msra.mxu0 0
        %1489 = vmatprep.subr.bf16.mxu0 0
        %1490 = vmatpush1.bf16.msra.mxu0 0
        %1491 = vmatprep.subr.bf16.mxu0 0
        %1492 = vmatpush1.bf16.msra.mxu0 0
        %1493 = vmatprep.mubr.bf16.mxu0 0
        %1494 = vmatmul.mubr.bf16.gmra.mrb[0].mxu0 %v1456
        %v1495 = vpop.f32.mrb[0].mxu0
        %v1496 = vadd.f32 %v1428, %v1495
        %v1497 = vpop.f32.mrb[0].mxu0
        %v1498 = vadd.f32 %v1428, %v1497
        %v1499 = vpop.f32.mrb[0].mxu0
        %v1500 = vadd.f32 %v1433, %v1499
        %v1501 = vpop.f32.mrb[0].mxu0
        %v1502 = vadd.f32 %v1433, %v1501
        %1503 = vmatprep.mubr.bf16.mxu0 0
        %1504 = vmatmul.mubr.bf16.gmra.mrb[0].mxu0 %v1459
        %v1505 = vpop.f32.mrb[0].mxu0
        %v1506 = vadd.f32 %v1438, %v1505
        %v1507 = vpop.f32.mrb[0].mxu0
        %v1508 = vadd.f32 %v1438, %v1507
        %v1509 = vpop.f32.mrb[0].mxu0
        %v1510 = vadd.f32 %v1443, %v1509
        %v1511 = vpop.f32.mrb[0].mxu0
        %v1512 = vadd.f32 %v1443, %v1511
        %1513 = vdwg.mxu0
        %v1514 = vmax.f32 %v1496, 0.0
        %v1515 = vmax.f32 %v1498, 0.0
        %v1516 = vmax.f32 %v1500, 0.0
        %v1517 = vmax.f32 %v1502, 0.0
        %v1518 = vmax.f32 %v1506, 0.0
        %v1519 = vmax.f32 %v1508, 0.0
        %v1520 = vmax.f32 %v1510, 0.0
        %v1521 = vmax.f32 %v1512, 0.0
        %s1522 = scalar_lea.vmem %s2, 112
        %v1523 = vld [vmem:[%s1522] sm:$0xf]
        %v1524 = vld [vmem:[%s1522 + $0x4] sm:$0xf]
        %v1525 = vld [vmem:[%s1522 + $0x8] sm:$0xf]
        %v1526 = vld [vmem:[%s1522 + $0xc] sm:$0xf]
        %v1527 = vpack.c.bf16 %v1516, %v1514
        %v1528 = vpack.c.bf16 %v1517, %v1515
        %v1529 = vpack.c.bf16 %v1520, %v1518
        %v1530 = vpack.c.bf16 %v1521, %v1519
        %s1531 = scalar_lea.vmem %s3, 320
        %v1532 = vld [vmem:[%s1531] sm:$0xff]
        %v1533 = vld [vmem:[%s1531 + $0x8] sm:$0xff]
        %v1534 = vld [vmem:[%s1531 + $0x10] sm:$0xff]
        %v1535 = vld [vmem:[%s1531 + $0x18] sm:$0xff]
        %1537 = vset.pattern.permute.xlu0 0
        %1538 = vperm.xlu0 %1537, %v1532
        %v1539 = vpop.permute.xlu0 %1538
        %1542 = vset.pattern.permute.xlu0 0
        %1543 = vperm.xlu0 %1542, %v1533
        %v1544 = vpop.permute.xlu0 %1543
        %1547 = vset.pattern.permute.xlu0 0
        %1548 = vperm.xlu0 %1547, %v1534
        %v1549 = vpop.permute.xlu0 %1548
        %1552 = vset.pattern.permute.xlu0 0
        %1553 = vperm.xlu0 %1552, %v1535
        %v1554 = vpop.permute.xlu0 %1553
        %v1560 = vunpack.c.l.b16 %v1523
        %v1561 = vunpack.c.l.b16 %v1524
        %v1562 = vunpack.c.l.b16 %v1525
        %v1563 = vunpack.c.l.b16 %v1526
        %v1564 = vpack.c.b16 %v1561, %v1560
        %v1565 = vpack.c.b16 %v1563, %v1562
        %v1567 = vsel %vm413, %v1564, 0
        %v1570 = vsel %vm413, %v1565, 0
        %1572 = vmatprep.subr.bf16.mxu0 %v1528
        %1573 = vmatpush1.bf16.msra.mxu0 %v1527
        %1574 = vmatprep.subr.bf16.mxu0 %v1530
        %1575 = vmatpush1.bf16.msra.mxu0 %v1529
        %1576 = vmatprep.subr.bf16.mxu0 0
        %1577 = vmatpush1.bf16.msra.mxu0 0
        %1578 = vmatprep.subr.bf16.mxu0 0
        %1579 = vmatpush1.bf16.msra.mxu0 0
        %1580 = vmatprep.subr.bf16.mxu0 0
        %1581 = vmatpush1.bf16.msra.mxu0 0
        %1582 = vmatprep.subr.bf16.mxu0 0
        %1583 = vmatpush1.bf16.msra.mxu0 0
        %1584 = vmatprep.subr.bf16.mxu0 0
        %1585 = vmatpush1.bf16.msra.mxu0 0
        %1586 = vmatprep.subr.bf16.mxu0 0
        %1587 = vmatpush1.bf16.msra.mxu0 0
        %1588 = vmatprep.subr.bf16.mxu0 0
        %1589 = vmatpush1.bf16.msra.mxu0 0
        %1590 = vmatprep.subr.bf16.mxu0 0
        %1591 = vmatpush1.bf16.msra.mxu0 0
        %1592 = vmatprep.subr.bf16.mxu0 0
        %1593 = vmatpush1.bf16.msra.mxu0 0
        %1594 = vmatprep.subr.bf16.mxu0 0
        %1595 = vmatpush1.bf16.msra.mxu0 0
        %1596 = vmatprep.subr.bf16.mxu0 0
        %1597 = vmatpush1.bf16.msra.mxu0 0
        %1598 = vmatprep.subr.bf16.mxu0 0
        %1599 = vmatpush1.bf16.msra.mxu0 0
        %1600 = vmatprep.subr.bf16.mxu0 0
        %1601 = vmatpush1.bf16.msra.mxu0 0
        %1602 = vmatprep.subr.bf16.mxu0 0
        %1603 = vmatpush1.bf16.msra.mxu0 0
        %1604 = vmatprep.mubr.bf16.mxu0 0
        %1605 = vmatmul.mubr.bf16.gmra.mrb[0].mxu0 %v1567
        %v1606 = vpop.f32.mrb[0].mxu0
        %v1607 = vadd.f32 %v1539, %v1606
        %v1608 = vpop.f32.mrb[0].mxu0
        %v1609 = vadd.f32 %v1539, %v1608
        %v1610 = vpop.f32.mrb[0].mxu0
        %v1611 = vadd.f32 %v1544, %v1610
        %v1612 = vpop.f32.mrb[0].mxu0
        %v1613 = vadd.f32 %v1544, %v1612
        %1614 = vmatprep.mubr.bf16.mxu0 0
        %1615 = vmatmul.mubr.bf16.gmra.mrb[0].mxu0 %v1570
        %v1616 = vpop.f32.mrb[0].mxu0
        %v1617 = vadd.f32 %v1549, %v1616
        %v1618 = vpop.f32.mrb[0].mxu0
        %v1619 = vadd.f32 %v1549, %v1618
        %v1620 = vpop.f32.mrb[0].mxu0
        %v1621 = vadd.f32 %v1554, %v1620
        %v1622 = vpop.f32.mrb[0].mxu0
        %v1623 = vadd.f32 %v1554, %v1622
        %1624 = vdwg.mxu0
        %v1625 = vmax.f32 %v1607, 0.0
        %v1626 = vmax.f32 %v1609, 0.0
        %v1627 = vmax.f32 %v1611, 0.0
        %v1628 = vmax.f32 %v1613, 0.0
        %v1629 = vmax.f32 %v1617, 0.0
        %v1630 = vmax.f32 %v1619, 0.0
        %v1631 = vmax.f32 %v1621, 0.0
        %v1632 = vmax.f32 %v1623, 0.0
        %s1633 = scalar_lea.vmem %s2, 128
        %v1634 = vld [vmem:[%s1633] sm:$0xf]
        %v1635 = vld [vmem:[%s1633 + $0x4] sm:$0xf]
        %v1636 = vld [vmem:[%s1633 + $0x8] sm:$0xf]
        %v1637 = vld [vmem:[%s1633 + $0xc] sm:$0xf]
        %v1638 = vpack.c.bf16 %v1627, %v1625
        %v1639 = vpack.c.bf16 %v1628, %v1626
        %v1640 = vpack.c.bf16 %v1631, %v1629
        %v1641 = vpack.c.bf16 %v1632, %v1630
        %s1642 = scalar_lea.vmem %s3, 352
        %v1643 = vld [vmem:[%s1642] sm:$0xff]
        %v1644 = vld [vmem:[%s1642 + $0x8] sm:$0xff]
        %v1645 = vld [vmem:[%s1642 + $0x10] sm:$0xff]
        %v1646 = vld [vmem:[%s1642 + $0x18] sm:$0xff]
        %1648 = vset.pattern.permute.xlu0 0
        %1649 = vperm.xlu0 %1648, %v1643
        %v1650 = vpop.permute.xlu0 %1649
        %1653 = vset.pattern.permute.xlu0 0
        %1654 = vperm.xlu0 %1653, %v1644
        %v1655 = vpop.permute.xlu0 %1654
        %1658 = vset.pattern.permute.xlu0 0
        %1659 = vperm.xlu0 %1658, %v1645
        %v1660 = vpop.permute.xlu0 %1659
        %1663 = vset.pattern.permute.xlu0 0
        %1664 = vperm.xlu0 %1663, %v1646
        %v1665 = vpop.permute.xlu0 %1664
        %v1671 = vunpack.c.l.b16 %v1634
        %v1672 = vunpack.c.l.b16 %v1635
        %v1673 = vunpack.c.l.b16 %v1636
        %v1674 = vunpack.c.l.b16 %v1637
        %v1675 = vpack.c.b16 %v1672, %v1671
        %v1676 = vpack.c.b16 %v1674, %v1673
        %v1678 = vsel %vm413, %v1675, 0
        %v1681 = vsel %vm413, %v1676, 0
        %1683 = vmatprep.subr.bf16.mxu0 %v1639
        %1684 = vmatpush1.bf16.msra.mxu0 %v1638
        %1685 = vmatprep.subr.bf16.mxu0 %v1641
        %1686 = vmatpush1.bf16.msra.mxu0 %v1640
        %1687 = vmatprep.subr.bf16.mxu0 0
        %1688 = vmatpush1.bf16.msra.mxu0 0
        %1689 = vmatprep.subr.bf16.mxu0 0
        %1690 = vmatpush1.bf16.msra.mxu0 0
        %1691 = vmatprep.subr.bf16.mxu0 0
        %1692 = vmatpush1.bf16.msra.mxu0 0
        %1693 = vmatprep.subr.bf16.mxu0 0
        %1694 = vmatpush1.bf16.msra.mxu0 0
        %1695 = vmatprep.subr.bf16.mxu0 0
        %1696 = vmatpush1.bf16.msra.mxu0 0
        %1697 = vmatprep.subr.bf16.mxu0 0
        %1698 = vmatpush1.bf16.msra.mxu0 0
        %1699 = vmatprep.subr.bf16.mxu0 0
        %1700 = vmatpush1.bf16.msra.mxu0 0
        %1701 = vmatprep.subr.bf16.mxu0 0
        %1702 = vmatpush1.bf16.msra.mxu0 0
        %1703 = vmatprep.subr.bf16.mxu0 0
        %1704 = vmatpush1.bf16.msra.mxu0 0
        %1705 = vmatprep.subr.bf16.mxu0 0
        %1706 = vmatpush1.bf16.msra.mxu0 0
        %1707 = vmatprep.subr.bf16.mxu0 0
        %1708 = vmatpush1.bf16.msra.mxu0 0
        %1709 = vmatprep.subr.bf16.mxu0 0
        %1710 = vmatpush1.bf16.msra.mxu0 0
        %1711 = vmatprep.subr.bf16.mxu0 0
        %1712 = vmatpush1.bf16.msra.mxu0 0
        %1713 = vmatprep.subr.bf16.mxu0 0
        %1714 = vmatpush1.bf16.msra.mxu0 0
        %1715 = vmatprep.mubr.bf16.mxu0 0
        %1716 = vmatmul.mubr.bf16.gmra.mrb[0].mxu0 %v1678
        %v1717 = vpop.f32.mrb[0].mxu0
        %v1718 = vadd.f32 %v1650, %v1717
        %v1719 = vpop.f32.mrb[0].mxu0
        %v1720 = vadd.f32 %v1650, %v1719
        %v1721 = vpop.f32.mrb[0].mxu0
        %v1722 = vadd.f32 %v1655, %v1721
        %v1723 = vpop.f32.mrb[0].mxu0
        %v1724 = vadd.f32 %v1655, %v1723
        %1725 = vmatprep.mubr.bf16.mxu0 0
        %1726 = vmatmul.mubr.bf16.gmra.mrb[0].mxu0 %v1681
        %v1727 = vpop.f32.mrb[0].mxu0
        %v1728 = vadd.f32 %v1660, %v1727
        %v1729 = vpop.f32.mrb[0].mxu0
        %v1730 = vadd.f32 %v1660, %v1729
        %v1731 = vpop.f32.mrb[0].mxu0
        %v1732 = vadd.f32 %v1665, %v1731
        %v1733 = vpop.f32.mrb[0].mxu0
        %v1734 = vadd.f32 %v1665, %v1733
        %1735 = vdwg.mxu0
        %v1736 = vmax.f32 %v1718, 0.0
        %v1737 = vmax.f32 %v1720, 0.0
        %v1738 = vmax.f32 %v1722, 0.0
        %v1739 = vmax.f32 %v1724, 0.0
        %v1740 = vmax.f32 %v1728, 0.0
        %v1741 = vmax.f32 %v1730, 0.0
        %v1742 = vmax.f32 %v1732, 0.0
        %v1743 = vmax.f32 %v1734, 0.0
        %s1744 = scalar_lea.vmem %s4, 24
        %v1745 = vld [vmem:[%s1744] sm:$0xf]
        %v1746 = vld [vmem:[%s1744 + $0x4] sm:$0xf]
        %v1747 = vld [vmem:[%s1744 + $0x8] sm:$0xf]
        %v1748 = vpack.c.bf16 %v1738, %v1736
        %v1749 = vpack.c.bf16 %v1739, %v1737
        %v1750 = vpack.c.bf16 %v1742, %v1740
        %v1751 = vpack.c.bf16 %v1743, %v1741
        %v1755 = vunpack.c.l.b16 %v1745
        %v1756 = vunpack.c.l.b16 %v1746
        %v1757 = vunpack.c.l.b16 %v1747
        %v1758 = vpack.c.b16 %v1756, %v1755
        %v1759 = vpack.c.b16 %v1757, %v1757
        %v1761 = vsel %vm413, %v1758, 0
        %v1764 = vsel %vm413, %v1759, 0
        %1766 = vmatprep.subr.bf16.mxu0 %v1749
        %1767 = vmatpush1.bf16.msra.mxu0 %v1748
        %1768 = vmatprep.subr.bf16.mxu0 %v1751
        %1769 = vmatpush1.bf16.msra.mxu0 %v1750
        %1770 = vmatprep.subr.bf16.mxu0 0
        %1771 = vmatpush1.bf16.msra.mxu0 0
        %1772 = vmatprep.subr.bf16.mxu0 0
        %1773 = vmatpush1.bf16.msra.mxu0 0
        %1774 = vmatprep.subr.bf16.mxu0 0
        %1775 = vmatpush1.bf16.msra.mxu0 0
        %1776 = vmatprep.subr.bf16.mxu0 0
        %1777 = vmatpush1.bf16.msra.mxu0 0
        %1778 = vmatprep.subr.bf16.mxu0 0
        %1779 = vmatpush1.bf16.msra.mxu0 0
        %1780 = vmatprep.subr.bf16.mxu0 0
        %1781 = vmatpush1.bf16.msra.mxu0 0
        %1782 = vmatprep.subr.bf16.mxu0 0
        %1783 = vmatpush1.bf16.msra.mxu0 0
        %1784 = vmatprep.subr.bf16.mxu0 0
        %1785 = vmatpush1.bf16.msra.mxu0 0
        %1786 = vmatprep.subr.bf16.mxu0 0
        %1787 = vmatpush1.bf16.msra.mxu0 0
        %1788 = vmatprep.subr.bf16.mxu0 0
        %1789 = vmatpush1.bf16.msra.mxu0 0
        %1790 = vmatprep.subr.bf16.mxu0 0
        %1791 = vmatpush1.bf16.msra.mxu0 0
        %1792 = vmatprep.subr.bf16.mxu0 0
        %1793 = vmatpush1.bf16.msra.mxu0 0
        %1794 = vmatprep.subr.bf16.mxu0 0
        %1795 = vmatpush1.bf16.msra.mxu0 0
        %1796 = vmatprep.subr.bf16.mxu0 0
        %1797 = vmatpush1.bf16.msra.mxu0 0
        %1798 = vmatprep.mubr.bf16.mxu0 0
        %1799 = vmatmul.mubr.bf16.gmra.mrb[0].mxu0 %v1761
        %v1800 = vpop.f32.mrb[0].mxu0
        %v1801 = vadd.f32 0.0, %v1800
        %v1802 = vpop.f32.mrb[0].mxu0
        %v1803 = vadd.f32 0.0, %v1802
        %v1804 = vpop.f32.mrb[0].mxu0
        %v1805 = vadd.f32 0.0, %v1804
        %v1806 = vpop.f32.mrb[0].mxu0
        %v1807 = vadd.f32 0.0, %v1806
        %1808 = vmatprep.mubr.bf16.mxu0 0
        %1809 = vmatmul.mubr.bf16.gmra.mrb[0].mxu0 %v1764
        %v1810 = vpop.f32.mrb[0].mxu0
        %v1811 = vadd.f32 0.0, %v1810
        %v1812 = vpop.f32.mrb[0].mxu0
        %v1813 = vadd.f32 0.0, %v1812
        %v1814 = vpop.f32.mrb[0].mxu0
        %v1815 = vpop.f32.mrb[0].mxu0
        %1816 = vdwg.mxu0
        %v1817 = vadd.f32 %v1296, %v1801
        %v1818 = vadd.f32 %v1297, %v1803
        %v1819 = vadd.f32 %v1298, %v1805
        %v1820 = vadd.f32 %v1299, %v1807
        %v1821 = vadd.f32 %v1300, %v1811
        %v1822 = vadd.f32 %v1301, %v1813
        %s1823 = scalar_lea.vmem %s1, 48
        %v1824 = vld [vmem:[%s1823] sm:$0xf]
        %v1825 = vld [vmem:[%s1823 + $0x4] sm:$0xf]
        %v1826 = vld [vmem:[%s1823 + $0x8] sm:$0xf]
        %v1827 = vld [vmem:[%s1823 + $0xc] sm:$0xf]
        %v1828 = vpack.c.bf16 %v1819, %v1817
        %v1829 = vpack.c.bf16 %v1820, %v1818
        %s1830 = scalar_lea.vmem %s3, 384
        %v1831 = vld [vmem:[%s1830] sm:$0xff]
        %v1832 = vld [vmem:[%s1830 + $0x8] sm:$0xff]
        %v1833 = vld [vmem:[%s1830 + $0x10] sm:$0xff]
        %v1834 = vld [vmem:[%s1830 + $0x18] sm:$0xff]
        %1836 = vset.pattern.permute.xlu0 0
        %1837 = vperm.xlu0 %1836, %v1831
        %v1838 = vpop.permute.xlu0 %1837
        %1841 = vset.pattern.permute.xlu0 0
        %1842 = vperm.xlu0 %1841, %v1832
        %v1843 = vpop.permute.xlu0 %1842
        %1846 = vset.pattern.permute.xlu0 0
        %1847 = vperm.xlu0 %1846, %v1833
        %v1848 = vpop.permute.xlu0 %1847
        %1851 = vset.pattern.permute.xlu0 0
        %1852 = vperm.xlu0 %1851, %v1834
        %v1853 = vpop.permute.xlu0 %1852
        %v1859 = vunpack.c.l.b16 %v1824
        %v1860 = vunpack.c.l.b16 %v1825
        %v1861 = vunpack.c.l.b16 %v1826
        %v1862 = vunpack.c.l.b16 %v1827
        %v1863 = vpack.c.b16 %v1860, %v1859
        %v1864 = vpack.c.b16 %v1862, %v1861
        %v1866 = vsel %vm302, %v1863, 0
        %v1869 = vsel %vm302, %v1864, 0
        %1871 = vmatprep.subr.bf16.mxu0 %v1829
        %1872 = vmatpush1.bf16.msra.mxu0 %v1828
        %1873 = vmatprep.subr.bf16.mxu0 0
        %1874 = vmatpush1.bf16.msra.mxu0 0
        %1875 = vmatprep.subr.bf16.mxu0 0
        %1876 = vmatpush1.bf16.msra.mxu0 0
        %1877 = vmatprep.subr.bf16.mxu0 0
        %1878 = vmatpush1.bf16.msra.mxu0 0
        %1879 = vmatprep.subr.bf16.mxu0 0
        %1880 = vmatpush1.bf16.msra.mxu0 0
        %1881 = vmatprep.subr.bf16.mxu0 0
        %1882 = vmatpush1.bf16.msra.mxu0 0
        %1883 = vmatprep.subr.bf16.mxu0 0
        %1884 = vmatpush1.bf16.msra.mxu0 0
        %1885 = vmatprep.subr.bf16.mxu0 0
        %1886 = vmatpush1.bf16.msra.mxu0 0
        %1887 = vmatprep.subr.bf16.mxu0 0
        %1888 = vmatpush1.bf16.msra.mxu0 0
        %1889 = vmatprep.subr.bf16.mxu0 0
        %1890 = vmatpush1.bf16.msra.mxu0 0
        %1891 = vmatprep.subr.bf16.mxu0 0
        %1892 = vmatpush1.bf16.msra.mxu0 0
        %1893 = vmatprep.subr.bf16.mxu0 0
        %1894 = vmatpush1.bf16.msra.mxu0 0
        %1895 = vmatprep.subr.bf16.mxu0 0
        %1896 = vmatpush1.bf16.msra.mxu0 0
        %1897 = vmatprep.subr.bf16.mxu0 0
        %1898 = vmatpush1.bf16.msra.mxu0 0
        %1899 = vmatprep.subr.bf16.mxu0 0
        %1900 = vmatpush1.bf16.msra.mxu0 0
        %1901 = vmatprep.subr.bf16.mxu0 0
        %1902 = vmatpush1.bf16.msra.mxu0 0
        %1903 = vmatprep.mubr.bf16.mxu0 0
        %1904 = vmatmul.mubr.bf16.gmra.mrb[0].mxu0 %v1866
        %v1905 = vpop.f32.mrb[0].mxu0
        %v1906 = vadd.f32 %v1838, %v1905
        %v1907 = vpop.f32.mrb[0].mxu0
        %v1908 = vadd.f32 %v1838, %v1907
        %v1909 = vpop.f32.mrb[0].mxu0
        %v1910 = vadd.f32 %v1843, %v1909
        %v1911 = vpop.f32.mrb[0].mxu0
        %v1912 = vadd.f32 %v1843, %v1911
        %1913 = vmatprep.mubr.bf16.mxu0 0
        %1914 = vmatmul.mubr.bf16.gmra.mrb[0].mxu0 %v1869
        %v1915 = vpop.f32.mrb[0].mxu0
        %v1916 = vadd.f32 %v1848, %v1915
        %v1917 = vpop.f32.mrb[0].mxu0
        %v1918 = vadd.f32 %v1848, %v1917
        %v1919 = vpop.f32.mrb[0].mxu0
        %v1920 = vadd.f32 %v1853, %v1919
        %v1921 = vpop.f32.mrb[0].mxu0
        %v1922 = vadd.f32 %v1853, %v1921
        %1923 = vdwg.mxu0
        %v1924 = vmax.f32 %v1906, 0.0
        %v1925 = vmax.f32 %v1908, 0.0
        %v1926 = vmax.f32 %v1910, 0.0
        %v1927 = vmax.f32 %v1912, 0.0
        %v1928 = vmax.f32 %v1916, 0.0
        %v1929 = vmax.f32 %v1918, 0.0
        %v1930 = vmax.f32 %v1920, 0.0
        %v1931 = vmax.f32 %v1922, 0.0
        %s1932 = scalar_lea.vmem %s2, 144
        %v1933 = vld [vmem:[%s1932] sm:$0xf]
        %v1934 = vld [vmem:[%s1932 + $0x4] sm:$0xf]
        %v1935 = vld [vmem:[%s1932 + $0x8] sm:$0xf]
        %v1936 = vld [vmem:[%s1932 + $0xc] sm:$0xf]
        %v1937 = vpack.c.bf16 %v1926, %v1924
        %v1938 = vpack.c.bf16 %v1927, %v1925
        %v1939 = vpack.c.bf16 %v1930, %v1928
        %v1940 = vpack.c.bf16 %v1931, %v1929
        %s1941 = scalar_lea.vmem %s3, 416
        %v1942 = vld [vmem:[%s1941] sm:$0xff]
        %v1943 = vld [vmem:[%s1941 + $0x8] sm:$0xff]
        %v1944 = vld [vmem:[%s1941 + $0x10] sm:$0xff]
        %v1945 = vld [vmem:[%s1941 + $0x18] sm:$0xff]
        %1947 = vset.pattern.permute.xlu0 0
        %1948 = vperm.xlu0 %1947, %v1942
        %v1949 = vpop.permute.xlu0 %1948
        %1952 = vset.pattern.permute.xlu0 0
        %1953 = vperm.xlu0 %1952, %v1943
        %v1954 = vpop.permute.xlu0 %1953
        %1957 = vset.pattern.permute.xlu0 0
        %1958 = vperm.xlu0 %1957, %v1944
        %v1959 = vpop.permute.xlu0 %1958
        %1962 = vset.pattern.permute.xlu0 0
        %1963 = vperm.xlu0 %1962, %v1945
        %v1964 = vpop.permute.xlu0 %1963
        %v1970 = vunpack.c.l.b16 %v1933
        %v1971 = vunpack.c.l.b16 %v1934
        %v1972 = vunpack.c.l.b16 %v1935
        %v1973 = vunpack.c.l.b16 %v1936
        %v1974 = vpack.c.b16 %v1971, %v1970
        %v1975 = vpack.c.b16 %v1973, %v1972
        %v1977 = vsel %vm413, %v1974, 0
        %v1980 = vsel %vm413, %v1975, 0
        %1982 = vmatprep.subr.bf16.mxu0 %v1938
        %1983 = vmatpush1.bf16.msra.mxu0 %v1937
        %1984 = vmatprep.subr.bf16.mxu0 %v1940
        %1985 = vmatpush1.bf16.msra.mxu0 %v1939
        %1986 = vmatprep.subr.bf16.mxu0 0
        %1987 = vmatpush1.bf16.msra.mxu0 0
        %1988 = vmatprep.subr.bf16.mxu0 0
        %1989 = vmatpush1.bf16.msra.mxu0 0
        %1990 = vmatprep.subr.bf16.mxu0 0
        %1991 = vmatpush1.bf16.msra.mxu0 0
        %1992 = vmatprep.subr.bf16.mxu0 0
        %1993 = vmatpush1.bf16.msra.mxu0 0
        %1994 = vmatprep.subr.bf16.mxu0 0
        %1995 = vmatpush1.bf16.msra.mxu0 0
        %1996 = vmatprep.subr.bf16.mxu0 0
        %1997 = vmatpush1.bf16.msra.mxu0 0
        %1998 = vmatprep.subr.bf16.mxu0 0
        %1999 = vmatpush1.bf16.msra.mxu0 0
        %2000 = vmatprep.subr.bf16.mxu0 0
        %2001 = vmatpush1.bf16.msra.mxu0 0
        %2002 = vmatprep.subr.bf16.mxu0 0
        %2003 = vmatpush1.bf16.msra.mxu0 0
        %2004 = vmatprep.subr.bf16.mxu0 0
        %2005 = vmatpush1.bf16.msra.mxu0 0
        %2006 = vmatprep.subr.bf16.mxu0 0
        %2007 = vmatpush1.bf16.msra.mxu0 0
        %2008 = vmatprep.subr.bf16.mxu0 0
        %2009 = vmatpush1.bf16.msra.mxu0 0
        %2010 = vmatprep.subr.bf16.mxu0 0
        %2011 = vmatpush1.bf16.msra.mxu0 0
        %2012 = vmatprep.subr.bf16.mxu0 0
        %2013 = vmatpush1.bf16.msra.mxu0 0
        %2014 = vmatprep.mubr.bf16.mxu0 0
        %2015 = vmatmul.mubr.bf16.gmra.mrb[0].mxu0 %v1977
        %v2016 = vpop.f32.mrb[0].mxu0
        %v2017 = vadd.f32 %v1949, %v2016
        %v2018 = vpop.f32.mrb[0].mxu0
        %v2019 = vadd.f32 %v1949, %v2018
        %v2020 = vpop.f32.mrb[0].mxu0
        %v2021 = vadd.f32 %v1954, %v2020
        %v2022 = vpop.f32.mrb[0].mxu0
        %v2023 = vadd.f32 %v1954, %v2022
        %2024 = vmatprep.mubr.bf16.mxu0 0
        %2025 = vmatmul.mubr.bf16.gmra.mrb[0].mxu0 %v1980
        %v2026 = vpop.f32.mrb[0].mxu0
        %v2027 = vadd.f32 %v1959, %v2026
        %v2028 = vpop.f32.mrb[0].mxu0
        %v2029 = vadd.f32 %v1959, %v2028
        %v2030 = vpop.f32.mrb[0].mxu0
        %v2031 = vadd.f32 %v1964, %v2030
        %v2032 = vpop.f32.mrb[0].mxu0
        %v2033 = vadd.f32 %v1964, %v2032
        %2034 = vdwg.mxu0
        %v2035 = vmax.f32 %v2017, 0.0
        %v2036 = vmax.f32 %v2019, 0.0
        %v2037 = vmax.f32 %v2021, 0.0
        %v2038 = vmax.f32 %v2023, 0.0
        %v2039 = vmax.f32 %v2027, 0.0
        %v2040 = vmax.f32 %v2029, 0.0
        %v2041 = vmax.f32 %v2031, 0.0
        %v2042 = vmax.f32 %v2033, 0.0
        %s2043 = scalar_lea.vmem %s2, 160
        %v2044 = vld [vmem:[%s2043] sm:$0xf]
        %v2045 = vld [vmem:[%s2043 + $0x4] sm:$0xf]
        %v2046 = vld [vmem:[%s2043 + $0x8] sm:$0xf]
        %v2047 = vld [vmem:[%s2043 + $0xc] sm:$0xf]
        %v2048 = vpack.c.bf16 %v2037, %v2035
        %v2049 = vpack.c.bf16 %v2038, %v2036
        %v2050 = vpack.c.bf16 %v2041, %v2039
        %v2051 = vpack.c.bf16 %v2042, %v2040
        %s2052 = scalar_lea.vmem %s3, 448
        %v2053 = vld [vmem:[%s2052] sm:$0xff]
        %v2054 = vld [vmem:[%s2052 + $0x8] sm:$0xff]
        %v2055 = vld [vmem:[%s2052 + $0x10] sm:$0xff]
        %v2056 = vld [vmem:[%s2052 + $0x18] sm:$0xff]
        %2058 = vset.pattern.permute.xlu0 0
        %2059 = vperm.xlu0 %2058, %v2053
        %v2060 = vpop.permute.xlu0 %2059
        %2063 = vset.pattern.permute.xlu0 0
        %2064 = vperm.xlu0 %2063, %v2054
        %v2065 = vpop.permute.xlu0 %2064
        %2068 = vset.pattern.permute.xlu0 0
        %2069 = vperm.xlu0 %2068, %v2055
        %v2070 = vpop.permute.xlu0 %2069
        %2073 = vset.pattern.permute.xlu0 0
        %2074 = vperm.xlu0 %2073, %v2056
        %v2075 = vpop.permute.xlu0 %2074
        %v2081 = vunpack.c.l.b16 %v2044
        %v2082 = vunpack.c.l.b16 %v2045
        %v2083 = vunpack.c.l.b16 %v2046
        %v2084 = vunpack.c.l.b16 %v2047
        %v2085 = vpack.c.b16 %v2082, %v2081
        %v2086 = vpack.c.b16 %v2084, %v2083
        %v2088 = vsel %vm413, %v2085, 0
        %v2091 = vsel %vm413, %v2086, 0
        %2093 = vmatprep.subr.bf16.mxu0 %v2049
        %2094 = vmatpush1.bf16.msra.mxu0 %v2048
        %2095 = vmatprep.subr.bf16.mxu0 %v2051
        %2096 = vmatpush1.bf16.msra.mxu0 %v2050
        %2097 = vmatprep.subr.bf16.mxu0 0
        %2098 = vmatpush1.bf16.msra.mxu0 0
        %2099 = vmatprep.subr.bf16.mxu0 0
        %2100 = vmatpush1.bf16.msra.mxu0 0
        %2101 = vmatprep.subr.bf16.mxu0 0
        %2102 = vmatpush1.bf16.msra.mxu0 0
        %2103 = vmatprep.subr.bf16.mxu0 0
        %2104 = vmatpush1.bf16.msra.mxu0 0
        %2105 = vmatprep.subr.bf16.mxu0 0
        %2106 = vmatpush1.bf16.msra.mxu0 0
        %2107 = vmatprep.subr.bf16.mxu0 0
        %2108 = vmatpush1.bf16.msra.mxu0 0
        %2109 = vmatprep.subr.bf16.mxu0 0
        %2110 = vmatpush1.bf16.msra.mxu0 0
        %2111 = vmatprep.subr.bf16.mxu0 0
        %2112 = vmatpush1.bf16.msra.mxu0 0
        %2113 = vmatprep.subr.bf16.mxu0 0
        %2114 = vmatpush1.bf16.msra.mxu0 0
        %2115 = vmatprep.subr.bf16.mxu0 0
        %2116 = vmatpush1.bf16.msra.mxu0 0
        %2117 = vmatprep.subr.bf16.mxu0 0
        %2118 = vmatpush1.bf16.msra.mxu0 0
        %2119 = vmatprep.subr.bf16.mxu0 0
        %2120 = vmatpush1.bf16.msra.mxu0 0
        %2121 = vmatprep.subr.bf16.mxu0 0
        %2122 = vmatpush1.bf16.msra.mxu0 0
        %2123 = vmatprep.subr.bf16.mxu0 0
        %2124 = vmatpush1.bf16.msra.mxu0 0
        %2125 = vmatprep.mubr.bf16.mxu0 0
        %2126 = vmatmul.mubr.bf16.gmra.mrb[0].mxu0 %v2088
        %v2127 = vpop.f32.mrb[0].mxu0
        %v2128 = vadd.f32 %v2060, %v2127
        %v2129 = vpop.f32.mrb[0].mxu0
        %v2130 = vadd.f32 %v2060, %v2129
        %v2131 = vpop.f32.mrb[0].mxu0
        %v2132 = vadd.f32 %v2065, %v2131
        %v2133 = vpop.f32.mrb[0].mxu0
        %v2134 = vadd.f32 %v2065, %v2133
        %2135 = vmatprep.mubr.bf16.mxu0 0
        %2136 = vmatmul.mubr.bf16.gmra.mrb[0].mxu0 %v2091
        %v2137 = vpop.f32.mrb[0].mxu0
        %v2138 = vadd.f32 %v2070, %v2137
        %v2139 = vpop.f32.mrb[0].mxu0
        %v2140 = vadd.f32 %v2070, %v2139
        %v2141 = vpop.f32.mrb[0].mxu0
        %v2142 = vadd.f32 %v2075, %v2141
        %v2143 = vpop.f32.mrb[0].mxu0
        %v2144 = vadd.f32 %v2075, %v2143
        %2145 = vdwg.mxu0
        %v2146 = vmax.f32 %v2128, 0.0
        %v2147 = vmax.f32 %v2130, 0.0
        %v2148 = vmax.f32 %v2132, 0.0
        %v2149 = vmax.f32 %v2134, 0.0
        %v2150 = vmax.f32 %v2138, 0.0
        %v2151 = vmax.f32 %v2140, 0.0
        %v2152 = vmax.f32 %v2142, 0.0
        %v2153 = vmax.f32 %v2144, 0.0
        %s2154 = scalar_lea.vmem %s2, 176
        %v2155 = vld [vmem:[%s2154] sm:$0xf]
        %v2156 = vld [vmem:[%s2154 + $0x4] sm:$0xf]
        %v2157 = vld [vmem:[%s2154 + $0x8] sm:$0xf]
        %v2158 = vld [vmem:[%s2154 + $0xc] sm:$0xf]
        %v2159 = vpack.c.bf16 %v2148, %v2146
        %v2160 = vpack.c.bf16 %v2149, %v2147
        %v2161 = vpack.c.bf16 %v2152, %v2150
        %v2162 = vpack.c.bf16 %v2153, %v2151
        %s2163 = scalar_lea.vmem %s3, 480
        %v2164 = vld [vmem:[%s2163] sm:$0xff]
        %v2165 = vld [vmem:[%s2163 + $0x8] sm:$0xff]
        %v2166 = vld [vmem:[%s2163 + $0x10] sm:$0xff]
        %v2167 = vld [vmem:[%s2163 + $0x18] sm:$0xff]
        %2169 = vset.pattern.permute.xlu0 0
        %2170 = vperm.xlu0 %2169, %v2164
        %v2171 = vpop.permute.xlu0 %2170
        %2174 = vset.pattern.permute.xlu0 0
        %2175 = vperm.xlu0 %2174, %v2165
        %v2176 = vpop.permute.xlu0 %2175
        %2179 = vset.pattern.permute.xlu0 0
        %2180 = vperm.xlu0 %2179, %v2166
        %v2181 = vpop.permute.xlu0 %2180
        %2184 = vset.pattern.permute.xlu0 0
        %2185 = vperm.xlu0 %2184, %v2167
        %v2186 = vpop.permute.xlu0 %2185
        %v2192 = vunpack.c.l.b16 %v2155
        %v2193 = vunpack.c.l.b16 %v2156
        %v2194 = vunpack.c.l.b16 %v2157
        %v2195 = vunpack.c.l.b16 %v2158
        %v2196 = vpack.c.b16 %v2193, %v2192
        %v2197 = vpack.c.b16 %v2195, %v2194
        %v2199 = vsel %vm413, %v2196, 0
        %v2202 = vsel %vm413, %v2197, 0
        %2204 = vmatprep.subr.bf16.mxu0 %v2160
        %2205 = vmatpush1.bf16.msra.mxu0 %v2159
        %2206 = vmatprep.subr.bf16.mxu0 %v2162
        %2207 = vmatpush1.bf16.msra.mxu0 %v2161
        %2208 = vmatprep.subr.bf16.mxu0 0
        %2209 = vmatpush1.bf16.msra.mxu0 0
        %2210 = vmatprep.subr.bf16.mxu0 0
        %2211 = vmatpush1.bf16.msra.mxu0 0
        %2212 = vmatprep.subr.bf16.mxu0 0
        %2213 = vmatpush1.bf16.msra.mxu0 0
        %2214 = vmatprep.subr.bf16.mxu0 0
        %2215 = vmatpush1.bf16.msra.mxu0 0
        %2216 = vmatprep.subr.bf16.mxu0 0
        %2217 = vmatpush1.bf16.msra.mxu0 0
        %2218 = vmatprep.subr.bf16.mxu0 0
        %2219 = vmatpush1.bf16.msra.mxu0 0
        %2220 = vmatprep.subr.bf16.mxu0 0
        %2221 = vmatpush1.bf16.msra.mxu0 0
        %2222 = vmatprep.subr.bf16.mxu0 0
        %2223 = vmatpush1.bf16.msra.mxu0 0
        %2224 = vmatprep.subr.bf16.mxu0 0
        %2225 = vmatpush1.bf16.msra.mxu0 0
        %2226 = vmatprep.subr.bf16.mxu0 0
        %2227 = vmatpush1.bf16.msra.mxu0 0
        %2228 = vmatprep.subr.bf16.mxu0 0
        %2229 = vmatpush1.bf16.msra.mxu0 0
        %2230 = vmatprep.subr.bf16.mxu0 0
        %2231 = vmatpush1.bf16.msra.mxu0 0
        %2232 = vmatprep.subr.bf16.mxu0 0
        %2233 = vmatpush1.bf16.msra.mxu0 0
        %2234 = vmatprep.subr.bf16.mxu0 0
        %2235 = vmatpush1.bf16.msra.mxu0 0
        %2236 = vmatprep.mubr.bf16.mxu0 0
        %2237 = vmatmul.mubr.bf16.gmra.mrb[0].mxu0 %v2199
        %v2238 = vpop.f32.mrb[0].mxu0
        %v2239 = vadd.f32 %v2171, %v2238
        %v2240 = vpop.f32.mrb[0].mxu0
        %v2241 = vadd.f32 %v2171, %v2240
        %v2242 = vpop.f32.mrb[0].mxu0
        %v2243 = vadd.f32 %v2176, %v2242
        %v2244 = vpop.f32.mrb[0].mxu0
        %v2245 = vadd.f32 %v2176, %v2244
        %2246 = vmatprep.mubr.bf16.mxu0 0
        %2247 = vmatmul.mubr.bf16.gmra.mrb[0].mxu0 %v2202
        %v2248 = vpop.f32.mrb[0].mxu0
        %v2249 = vadd.f32 %v2181, %v2248
        %v2250 = vpop.f32.mrb[0].mxu0
        %v2251 = vadd.f32 %v2181, %v2250
        %v2252 = vpop.f32.mrb[0].mxu0
        %v2253 = vadd.f32 %v2186, %v2252
        %v2254 = vpop.f32.mrb[0].mxu0
        %v2255 = vadd.f32 %v2186, %v2254
        %2256 = vdwg.mxu0
        %v2257 = vmax.f32 %v2239, 0.0
        %v2258 = vmax.f32 %v2241, 0.0
        %v2259 = vmax.f32 %v2243, 0.0
        %v2260 = vmax.f32 %v2245, 0.0
        %v2261 = vmax.f32 %v2249, 0.0
        %v2262 = vmax.f32 %v2251, 0.0
        %v2263 = vmax.f32 %v2253, 0.0
        %v2264 = vmax.f32 %v2255, 0.0
        %s2265 = scalar_lea.vmem %s4, 36
        %v2266 = vld [vmem:[%s2265] sm:$0xf]
        %v2267 = vld [vmem:[%s2265 + $0x4] sm:$0xf]
        %v2268 = vld [vmem:[%s2265 + $0x8] sm:$0xf]
        %v2269 = vpack.c.bf16 %v2259, %v2257
        %v2270 = vpack.c.bf16 %v2260, %v2258
        %v2271 = vpack.c.bf16 %v2263, %v2261
        %v2272 = vpack.c.bf16 %v2264, %v2262
        %v2276 = vunpack.c.l.b16 %v2266
        %v2277 = vunpack.c.l.b16 %v2267
        %v2278 = vunpack.c.l.b16 %v2268
        %v2279 = vpack.c.b16 %v2277, %v2276
        %v2280 = vpack.c.b16 %v2278, %v2278
        %v2282 = vsel %vm413, %v2279, 0
        %v2285 = vsel %vm413, %v2280, 0
        %2287 = vmatprep.subr.bf16.mxu0 %v2270
        %2288 = vmatpush1.bf16.msra.mxu0 %v2269
        %2289 = vmatprep.subr.bf16.mxu0 %v2272
        %2290 = vmatpush1.bf16.msra.mxu0 %v2271
        %2291 = vmatprep.subr.bf16.mxu0 0
        %2292 = vmatpush1.bf16.msra.mxu0 0
        %2293 = vmatprep.subr.bf16.mxu0 0
        %2294 = vmatpush1.bf16.msra.mxu0 0
        %2295 = vmatprep.subr.bf16.mxu0 0
        %2296 = vmatpush1.bf16.msra.mxu0 0
        %2297 = vmatprep.subr.bf16.mxu0 0
        %2298 = vmatpush1.bf16.msra.mxu0 0
        %2299 = vmatprep.subr.bf16.mxu0 0
        %2300 = vmatpush1.bf16.msra.mxu0 0
        %2301 = vmatprep.subr.bf16.mxu0 0
        %2302 = vmatpush1.bf16.msra.mxu0 0
        %2303 = vmatprep.subr.bf16.mxu0 0
        %2304 = vmatpush1.bf16.msra.mxu0 0
        %2305 = vmatprep.subr.bf16.mxu0 0
        %2306 = vmatpush1.bf16.msra.mxu0 0
        %2307 = vmatprep.subr.bf16.mxu0 0
        %2308 = vmatpush1.bf16.msra.mxu0 0
        %2309 = vmatprep.subr.bf16.mxu0 0
        %2310 = vmatpush1.bf16.msra.mxu0 0
        %2311 = vmatprep.subr.bf16.mxu0 0
        %2312 = vmatpush1.bf16.msra.mxu0 0
        %2313 = vmatprep.subr.bf16.mxu0 0
        %2314 = vmatpush1.bf16.msra.mxu0 0
        %2315 = vmatprep.subr.bf16.mxu0 0
        %2316 = vmatpush1.bf16.msra.mxu0 0
        %2317 = vmatprep.subr.bf16.mxu0 0
        %2318 = vmatpush1.bf16.msra.mxu0 0
        %2319 = vmatprep.mubr.bf16.mxu0 0
        %2320 = vmatmul.mubr.bf16.gmra.mrb[0].mxu0 %v2282
        %v2321 = vpop.f32.mrb[0].mxu0
        %v2322 = vadd.f32 0.0, %v2321
        %v2323 = vpop.f32.mrb[0].mxu0
        %v2324 = vadd.f32 0.0, %v2323
        %v2325 = vpop.f32.mrb[0].mxu0
        %v2326 = vadd.f32 0.0, %v2325
        %v2327 = vpop.f32.mrb[0].mxu0
        %v2328 = vadd.f32 0.0, %v2327
        %2329 = vmatprep.mubr.bf16.mxu0 0
        %2330 = vmatmul.mubr.bf16.gmra.mrb[0].mxu0 %v2285
        %v2331 = vpop.f32.mrb[0].mxu0
        %v2332 = vadd.f32 0.0, %v2331
        %v2333 = vpop.f32.mrb[0].mxu0
        %v2334 = vadd.f32 0.0, %v2333
        %v2335 = vpop.f32.mrb[0].mxu0
        %v2336 = vpop.f32.mrb[0].mxu0
        %2337 = vdwg.mxu0
        %v2338 = vadd.f32 %v1817, %v2322
        %v2339 = vadd.f32 %v1818, %v2324
        %v2340 = vadd.f32 %v1819, %v2326
        %v2341 = vadd.f32 %v1820, %v2328
        %v2342 = vadd.f32 %v1821, %v2332
        %v2343 = vadd.f32 %v1822, %v2334
        %s2344 = scalar_lea.vmem %s1, 64
        %v2345 = vld [vmem:[%s2344] sm:$0xf]
        %v2346 = vld [vmem:[%s2344 + $0x4] sm:$0xf]
        %v2347 = vld [vmem:[%s2344 + $0x8] sm:$0xf]
        %v2348 = vld [vmem:[%s2344 + $0xc] sm:$0xf]
        %v2349 = vpack.c.bf16 %v2340, %v2338
        %v2350 = vpack.c.bf16 %v2341, %v2339
        %s2351 = scalar_lea.vmem %s3, 512
        %v2352 = vld [vmem:[%s2351] sm:$0xff]
        %v2353 = vld [vmem:[%s2351 + $0x8] sm:$0xff]
        %v2354 = vld [vmem:[%s2351 + $0x10] sm:$0xff]
        %v2355 = vld [vmem:[%s2351 + $0x18] sm:$0xff]
        %2357 = vset.pattern.permute.xlu0 0
        %2358 = vperm.xlu0 %2357, %v2352
        %v2359 = vpop.permute.xlu0 %2358
        %2362 = vset.pattern.permute.xlu0 0
        %2363 = vperm.xlu0 %2362, %v2353
        %v2364 = vpop.permute.xlu0 %2363
        %2367 = vset.pattern.permute.xlu0 0
        %2368 = vperm.xlu0 %2367, %v2354
        %v2369 = vpop.permute.xlu0 %2368
        %2372 = vset.pattern.permute.xlu0 0
        %2373 = vperm.xlu0 %2372, %v2355
        %v2374 = vpop.permute.xlu0 %2373
        %v2380 = vunpack.c.l.b16 %v2345
        %v2381 = vunpack.c.l.b16 %v2346
        %v2382 = vunpack.c.l.b16 %v2347
        %v2383 = vunpack.c.l.b16 %v2348
        %v2384 = vpack.c.b16 %v2381, %v2380
        %v2385 = vpack.c.b16 %v2383, %v2382
        %v2387 = vsel %vm302, %v2384, 0
        %v2390 = vsel %vm302, %v2385, 0
        %2392 = vmatprep.subr.bf16.mxu0 %v2350
        %2393 = vmatpush1.bf16.msra.mxu0 %v2349
        %2394 = vmatprep.subr.bf16.mxu0 0
        %2395 = vmatpush1.bf16.msra.mxu0 0
        %2396 = vmatprep.subr.bf16.mxu0 0
        %2397 = vmatpush1.bf16.msra.mxu0 0
        %2398 = vmatprep.subr.bf16.mxu0 0
        %2399 = vmatpush1.bf16.msra.mxu0 0
        %2400 = vmatprep.subr.bf16.mxu0 0
        %2401 = vmatpush1.bf16.msra.mxu0 0
        %2402 = vmatprep.subr.bf16.mxu0 0
        %2403 = vmatpush1.bf16.msra.mxu0 0
        %2404 = vmatprep.subr.bf16.mxu0 0
        %2405 = vmatpush1.bf16.msra.mxu0 0
        %2406 = vmatprep.subr.bf16.mxu0 0
        %2407 = vmatpush1.bf16.msra.mxu0 0
        %2408 = vmatprep.subr.bf16.mxu0 0
        %2409 = vmatpush1.bf16.msra.mxu0 0
        %2410 = vmatprep.subr.bf16.mxu0 0
        %2411 = vmatpush1.bf16.msra.mxu0 0
        %2412 = vmatprep.subr.bf16.mxu0 0
        %2413 = vmatpush1.bf16.msra.mxu0 0
        %2414 = vmatprep.subr.bf16.mxu0 0
        %2415 = vmatpush1.bf16.msra.mxu0 0
        %2416 = vmatprep.subr.bf16.mxu0 0
        %2417 = vmatpush1.bf16.msra.mxu0 0
        %2418 = vmatprep.subr.bf16.mxu0 0
        %2419 = vmatpush1.bf16.msra.mxu0 0
        %2420 = vmatprep.subr.bf16.mxu0 0
        %2421 = vmatpush1.bf16.msra.mxu0 0
        %2422 = vmatprep.subr.bf16.mxu0 0
        %2423 = vmatpush1.bf16.msra.mxu0 0
        %2424 = vmatprep.mubr.bf16.mxu0 0
        %2425 = vmatmul.mubr.bf16.gmra.mrb[0].mxu0 %v2387
        %v2426 = vpop.f32.mrb[0].mxu0
        %v2427 = vadd.f32 %v2359, %v2426
        %v2428 = vpop.f32.mrb[0].mxu0
        %v2429 = vadd.f32 %v2359, %v2428
        %v2430 = vpop.f32.mrb[0].mxu0
        %v2431 = vadd.f32 %v2364, %v2430
        %v2432 = vpop.f32.mrb[0].mxu0
        %v2433 = vadd.f32 %v2364, %v2432
        %2434 = vmatprep.mubr.bf16.mxu0 0
        %2435 = vmatmul.mubr.bf16.gmra.mrb[0].mxu0 %v2390
        %v2436 = vpop.f32.mrb[0].mxu0
        %v2437 = vadd.f32 %v2369, %v2436
        %v2438 = vpop.f32.mrb[0].mxu0
        %v2439 = vadd.f32 %v2369, %v2438
        %v2440 = vpop.f32.mrb[0].mxu0
        %v2441 = vadd.f32 %v2374, %v2440
        %v2442 = vpop.f32.mrb[0].mxu0
        %v2443 = vadd.f32 %v2374, %v2442
        %2444 = vdwg.mxu0
        %v2445 = vmax.f32 %v2427, 0.0
        %v2446 = vmax.f32 %v2429, 0.0
        %v2447 = vmax.f32 %v2431, 0.0
        %v2448 = vmax.f32 %v2433, 0.0
        %v2449 = vmax.f32 %v2437, 0.0
        %v2450 = vmax.f32 %v2439, 0.0
        %v2451 = vmax.f32 %v2441, 0.0
        %v2452 = vmax.f32 %v2443, 0.0
        %s2453 = scalar_lea.vmem %s2, 192
        %v2454 = vld [vmem:[%s2453] sm:$0xf]
        %v2455 = vld [vmem:[%s2453 + $0x4] sm:$0xf]
        %v2456 = vld [vmem:[%s2453 + $0x8] sm:$0xf]
        %v2457 = vld [vmem:[%s2453 + $0xc] sm:$0xf]
        %v2458 = vpack.c.bf16 %v2447, %v2445
        %v2459 = vpack.c.bf16 %v2448, %v2446
        %v2460 = vpack.c.bf16 %v2451, %v2449
        %v2461 = vpack.c.bf16 %v2452, %v2450
        %s2462 = scalar_lea.vmem %s3, 544
        %v2463 = vld [vmem:[%s2462] sm:$0xff]
        %v2464 = vld [vmem:[%s2462 + $0x8] sm:$0xff]
        %v2465 = vld [vmem:[%s2462 + $0x10] sm:$0xff]
        %v2466 = vld [vmem:[%s2462 + $0x18] sm:$0xff]
        %2468 = vset.pattern.permute.xlu0 0
        %2469 = vperm.xlu0 %2468, %v2463
        %v2470 = vpop.permute.xlu0 %2469
        %2473 = vset.pattern.permute.xlu0 0
        %2474 = vperm.xlu0 %2473, %v2464
        %v2475 = vpop.permute.xlu0 %2474
        %2478 = vset.pattern.permute.xlu0 0
        %2479 = vperm.xlu0 %2478, %v2465
        %v2480 = vpop.permute.xlu0 %2479
        %2483 = vset.pattern.permute.xlu0 0
        %2484 = vperm.xlu0 %2483, %v2466
        %v2485 = vpop.permute.xlu0 %2484
        %v2491 = vunpack.c.l.b16 %v2454
        %v2492 = vunpack.c.l.b16 %v2455
        %v2493 = vunpack.c.l.b16 %v2456
        %v2494 = vunpack.c.l.b16 %v2457
        %v2495 = vpack.c.b16 %v2492, %v2491
        %v2496 = vpack.c.b16 %v2494, %v2493
        %v2498 = vsel %vm413, %v2495, 0
        %v2501 = vsel %vm413, %v2496, 0
        %2503 = vmatprep.subr.bf16.mxu0 %v2459
        %2504 = vmatpush1.bf16.msra.mxu0 %v2458
        %2505 = vmatprep.subr.bf16.mxu0 %v2461
        %2506 = vmatpush1.bf16.msra.mxu0 %v2460
        %2507 = vmatprep.subr.bf16.mxu0 0
        %2508 = vmatpush1.bf16.msra.mxu0 0
        %2509 = vmatprep.subr.bf16.mxu0 0
        %2510 = vmatpush1.bf16.msra.mxu0 0
        %2511 = vmatprep.subr.bf16.mxu0 0
        %2512 = vmatpush1.bf16.msra.mxu0 0
        %2513 = vmatprep.subr.bf16.mxu0 0
        %2514 = vmatpush1.bf16.msra.mxu0 0
        %2515 = vmatprep.subr.bf16.mxu0 0
        %2516 = vmatpush1.bf16.msra.mxu0 0
        %2517 = vmatprep.subr.bf16.mxu0 0
        %2518 = vmatpush1.bf16.msra.mxu0 0
        %2519 = vmatprep.subr.bf16.mxu0 0
        %2520 = vmatpush1.bf16.msra.mxu0 0
        %2521 = vmatprep.subr.bf16.mxu0 0
        %2522 = vmatpush1.bf16.msra.mxu0 0
        %2523 = vmatprep.subr.bf16.mxu0 0
        %2524 = vmatpush1.bf16.msra.mxu0 0
        %2525 = vmatprep.subr.bf16.mxu0 0
        %2526 = vmatpush1.bf16.msra.mxu0 0
        %2527 = vmatprep.subr.bf16.mxu0 0
        %2528 = vmatpush1.bf16.msra.mxu0 0
        %2529 = vmatprep.subr.bf16.mxu0 0
        %2530 = vmatpush1.bf16.msra.mxu0 0
        %2531 = vmatprep.subr.bf16.mxu0 0
        %2532 = vmatpush1.bf16.msra.mxu0 0
        %2533 = vmatprep.subr.bf16.mxu0 0
        %2534 = vmatpush1.bf16.msra.mxu0 0
        %2535 = vmatprep.mubr.bf16.mxu0 0
        %2536 = vmatmul.mubr.bf16.gmra.mrb[0].mxu0 %v2498
        %v2537 = vpop.f32.mrb[0].mxu0
        %v2538 = vadd.f32 %v2470, %v2537
        %v2539 = vpop.f32.mrb[0].mxu0
        %v2540 = vadd.f32 %v2470, %v2539
        %v2541 = vpop.f32.mrb[0].mxu0
        %v2542 = vadd.f32 %v2475, %v2541
        %v2543 = vpop.f32.mrb[0].mxu0
        %v2544 = vadd.f32 %v2475, %v2543
        %2545 = vmatprep.mubr.bf16.mxu0 0
        %2546 = vmatmul.mubr.bf16.gmra.mrb[0].mxu0 %v2501
        %v2547 = vpop.f32.mrb[0].mxu0
        %v2548 = vadd.f32 %v2480, %v2547
        %v2549 = vpop.f32.mrb[0].mxu0
        %v2550 = vadd.f32 %v2480, %v2549
        %v2551 = vpop.f32.mrb[0].mxu0
        %v2552 = vadd.f32 %v2485, %v2551
        %v2553 = vpop.f32.mrb[0].mxu0
        %v2554 = vadd.f32 %v2485, %v2553
        %2555 = vdwg.mxu0
        %v2556 = vmax.f32 %v2538, 0.0
        %v2557 = vmax.f32 %v2540, 0.0
        %v2558 = vmax.f32 %v2542, 0.0
        %v2559 = vmax.f32 %v2544, 0.0
        %v2560 = vmax.f32 %v2548, 0.0
        %v2561 = vmax.f32 %v2550, 0.0
        %v2562 = vmax.f32 %v2552, 0.0
        %v2563 = vmax.f32 %v2554, 0.0
        %s2564 = scalar_lea.vmem %s2, 208
        %v2565 = vld [vmem:[%s2564] sm:$0xf]
        %v2566 = vld [vmem:[%s2564 + $0x4] sm:$0xf]
        %v2567 = vld [vmem:[%s2564 + $0x8] sm:$0xf]
        %v2568 = vld [vmem:[%s2564 + $0xc] sm:$0xf]
        %v2569 = vpack.c.bf16 %v2558, %v2556
        %v2570 = vpack.c.bf16 %v2559, %v2557
        %v2571 = vpack.c.bf16 %v2562, %v2560
        %v2572 = vpack.c.bf16 %v2563, %v2561
        %s2573 = scalar_lea.vmem %s3, 576
        %v2574 = vld [vmem:[%s2573] sm:$0xff]
        %v2575 = vld [vmem:[%s2573 + $0x8] sm:$0xff]
        %v2576 = vld [vmem:[%s2573 + $0x10] sm:$0xff]
        %v2577 = vld [vmem:[%s2573 + $0x18] sm:$0xff]
        %2579 = vset.pattern.permute.xlu0 0
        %2580 = vperm.xlu0 %2579, %v2574
        %v2581 = vpop.permute.xlu0 %2580
        %2584 = vset.pattern.permute.xlu0 0
        %2585 = vperm.xlu0 %2584, %v2575
        %v2586 = vpop.permute.xlu0 %2585
        %2589 = vset.pattern.permute.xlu0 0
        %2590 = vperm.xlu0 %2589, %v2576
        %v2591 = vpop.permute.xlu0 %2590
        %2594 = vset.pattern.permute.xlu0 0
        %2595 = vperm.xlu0 %2594, %v2577
        %v2596 = vpop.permute.xlu0 %2595
        %v2602 = vunpack.c.l.b16 %v2565
        %v2603 = vunpack.c.l.b16 %v2566
        %v2604 = vunpack.c.l.b16 %v2567
        %v2605 = vunpack.c.l.b16 %v2568
        %v2606 = vpack.c.b16 %v2603, %v2602
        %v2607 = vpack.c.b16 %v2605, %v2604
        %v2609 = vsel %vm413, %v2606, 0
        %v2612 = vsel %vm413, %v2607, 0
        %2614 = vmatprep.subr.bf16.mxu0 %v2570
        %2615 = vmatpush1.bf16.msra.mxu0 %v2569
        %2616 = vmatprep.subr.bf16.mxu0 %v2572
        %2617 = vmatpush1.bf16.msra.mxu0 %v2571
        %2618 = vmatprep.subr.bf16.mxu0 0
        %2619 = vmatpush1.bf16.msra.mxu0 0
        %2620 = vmatprep.subr.bf16.mxu0 0
        %2621 = vmatpush1.bf16.msra.mxu0 0
        %2622 = vmatprep.subr.bf16.mxu0 0
        %2623 = vmatpush1.bf16.msra.mxu0 0
        %2624 = vmatprep.subr.bf16.mxu0 0
        %2625 = vmatpush1.bf16.msra.mxu0 0
        %2626 = vmatprep.subr.bf16.mxu0 0
        %2627 = vmatpush1.bf16.msra.mxu0 0
        %2628 = vmatprep.subr.bf16.mxu0 0
        %2629 = vmatpush1.bf16.msra.mxu0 0
        %2630 = vmatprep.subr.bf16.mxu0 0
        %2631 = vmatpush1.bf16.msra.mxu0 0
        %2632 = vmatprep.subr.bf16.mxu0 0
        %2633 = vmatpush1.bf16.msra.mxu0 0
        %2634 = vmatprep.subr.bf16.mxu0 0
        %2635 = vmatpush1.bf16.msra.mxu0 0
        %2636 = vmatprep.subr.bf16.mxu0 0
        %2637 = vmatpush1.bf16.msra.mxu0 0
        %2638 = vmatprep.subr.bf16.mxu0 0
        %2639 = vmatpush1.bf16.msra.mxu0 0
        %2640 = vmatprep.subr.bf16.mxu0 0
        %2641 = vmatpush1.bf16.msra.mxu0 0
        %2642 = vmatprep.subr.bf16.mxu0 0
        %2643 = vmatpush1.bf16.msra.mxu0 0
        %2644 = vmatprep.subr.bf16.mxu0 0
        %2645 = vmatpush1.bf16.msra.mxu0 0
        %2646 = vmatprep.mubr.bf16.mxu0 0
        %2647 = vmatmul.mubr.bf16.gmra.mrb[0].mxu0 %v2609
        %v2648 = vpop.f32.mrb[0].mxu0
        %v2649 = vadd.f32 %v2581, %v2648
        %v2650 = vpop.f32.mrb[0].mxu0
        %v2651 = vadd.f32 %v2581, %v2650
        %v2652 = vpop.f32.mrb[0].mxu0
        %v2653 = vadd.f32 %v2586, %v2652
        %v2654 = vpop.f32.mrb[0].mxu0
        %v2655 = vadd.f32 %v2586, %v2654
        %2656 = vmatprep.mubr.bf16.mxu0 0
        %2657 = vmatmul.mubr.bf16.gmra.mrb[0].mxu0 %v2612
        %v2658 = vpop.f32.mrb[0].mxu0
        %v2659 = vadd.f32 %v2591, %v2658
        %v2660 = vpop.f32.mrb[0].mxu0
        %v2661 = vadd.f32 %v2591, %v2660
        %v2662 = vpop.f32.mrb[0].mxu0
        %v2663 = vadd.f32 %v2596, %v2662
        %v2664 = vpop.f32.mrb[0].mxu0
        %v2665 = vadd.f32 %v2596, %v2664
        %2666 = vdwg.mxu0
        %v2667 = vmax.f32 %v2649, 0.0
        %v2668 = vmax.f32 %v2651, 0.0
        %v2669 = vmax.f32 %v2653, 0.0
        %v2670 = vmax.f32 %v2655, 0.0
        %v2671 = vmax.f32 %v2659, 0.0
        %v2672 = vmax.f32 %v2661, 0.0
        %v2673 = vmax.f32 %v2663, 0.0
        %v2674 = vmax.f32 %v2665, 0.0
        %s2675 = scalar_lea.vmem %s2, 224
        %v2676 = vld [vmem:[%s2675] sm:$0xf]
        %v2677 = vld [vmem:[%s2675 + $0x4] sm:$0xf]
        %v2678 = vld [vmem:[%s2675 + $0x8] sm:$0xf]
        %v2679 = vld [vmem:[%s2675 + $0xc] sm:$0xf]
        %v2680 = vpack.c.bf16 %v2669, %v2667
        %v2681 = vpack.c.bf16 %v2670, %v2668
        %v2682 = vpack.c.bf16 %v2673, %v2671
        %v2683 = vpack.c.bf16 %v2674, %v2672
        %s2684 = scalar_lea.vmem %s3, 608
        %v2685 = vld [vmem:[%s2684] sm:$0xff]
        %v2686 = vld [vmem:[%s2684 + $0x8] sm:$0xff]
        %v2687 = vld [vmem:[%s2684 + $0x10] sm:$0xff]
        %v2688 = vld [vmem:[%s2684 + $0x18] sm:$0xff]
        %2690 = vset.pattern.permute.xlu0 0
        %2691 = vperm.xlu0 %2690, %v2685
        %v2692 = vpop.permute.xlu0 %2691
        %2695 = vset.pattern.permute.xlu0 0
        %2696 = vperm.xlu0 %2695, %v2686
        %v2697 = vpop.permute.xlu0 %2696
        %2700 = vset.pattern.permute.xlu0 0
        %2701 = vperm.xlu0 %2700, %v2687
        %v2702 = vpop.permute.xlu0 %2701
        %2705 = vset.pattern.permute.xlu0 0
        %2706 = vperm.xlu0 %2705, %v2688
        %v2707 = vpop.permute.xlu0 %2706
        %v2713 = vunpack.c.l.b16 %v2676
        %v2714 = vunpack.c.l.b16 %v2677
        %v2715 = vunpack.c.l.b16 %v2678
        %v2716 = vunpack.c.l.b16 %v2679
        %v2717 = vpack.c.b16 %v2714, %v2713
        %v2718 = vpack.c.b16 %v2716, %v2715
        %v2720 = vsel %vm413, %v2717, 0
        %v2723 = vsel %vm413, %v2718, 0
        %2725 = vmatprep.subr.bf16.mxu0 %v2681
        %2726 = vmatpush1.bf16.msra.mxu0 %v2680
        %2727 = vmatprep.subr.bf16.mxu0 %v2683
        %2728 = vmatpush1.bf16.msra.mxu0 %v2682
        %2729 = vmatprep.subr.bf16.mxu0 0
        %2730 = vmatpush1.bf16.msra.mxu0 0
        %2731 = vmatprep.subr.bf16.mxu0 0
        %2732 = vmatpush1.bf16.msra.mxu0 0
        %2733 = vmatprep.subr.bf16.mxu0 0
        %2734 = vmatpush1.bf16.msra.mxu0 0
        %2735 = vmatprep.subr.bf16.mxu0 0
        %2736 = vmatpush1.bf16.msra.mxu0 0
        %2737 = vmatprep.subr.bf16.mxu0 0
        %2738 = vmatpush1.bf16.msra.mxu0 0
        %2739 = vmatprep.subr.bf16.mxu0 0
        %2740 = vmatpush1.bf16.msra.mxu0 0
        %2741 = vmatprep.subr.bf16.mxu0 0
        %2742 = vmatpush1.bf16.msra.mxu0 0
        %2743 = vmatprep.subr.bf16.mxu0 0
        %2744 = vmatpush1.bf16.msra.mxu0 0
        %2745 = vmatprep.subr.bf16.mxu0 0
        %2746 = vmatpush1.bf16.msra.mxu0 0
        %2747 = vmatprep.subr.bf16.mxu0 0
        %2748 = vmatpush1.bf16.msra.mxu0 0
        %2749 = vmatprep.subr.bf16.mxu0 0
        %2750 = vmatpush1.bf16.msra.mxu0 0
        %2751 = vmatprep.subr.bf16.mxu0 0
        %2752 = vmatpush1.bf16.msra.mxu0 0
        %2753 = vmatprep.subr.bf16.mxu0 0
        %2754 = vmatpush1.bf16.msra.mxu0 0
        %2755 = vmatprep.subr.bf16.mxu0 0
        %2756 = vmatpush1.bf16.msra.mxu0 0
        %2757 = vmatprep.mubr.bf16.mxu0 0
        %2758 = vmatmul.mubr.bf16.gmra.mrb[0].mxu0 %v2720
        %v2759 = vpop.f32.mrb[0].mxu0
        %v2760 = vadd.f32 %v2692, %v2759
        %v2761 = vpop.f32.mrb[0].mxu0
        %v2762 = vadd.f32 %v2692, %v2761
        %v2763 = vpop.f32.mrb[0].mxu0
        %v2764 = vadd.f32 %v2697, %v2763
        %v2765 = vpop.f32.mrb[0].mxu0
        %v2766 = vadd.f32 %v2697, %v2765
        %2767 = vmatprep.mubr.bf16.mxu0 0
        %2768 = vmatmul.mubr.bf16.gmra.mrb[0].mxu0 %v2723
        %v2769 = vpop.f32.mrb[0].mxu0
        %v2770 = vadd.f32 %v2702, %v2769
        %v2771 = vpop.f32.mrb[0].mxu0
        %v2772 = vadd.f32 %v2702, %v2771
        %v2773 = vpop.f32.mrb[0].mxu0
        %v2774 = vadd.f32 %v2707, %v2773
        %v2775 = vpop.f32.mrb[0].mxu0
        %v2776 = vadd.f32 %v2707, %v2775
        %2777 = vdwg.mxu0
        %v2778 = vmax.f32 %v2760, 0.0
        %v2779 = vmax.f32 %v2762, 0.0
        %v2780 = vmax.f32 %v2764, 0.0
        %v2781 = vmax.f32 %v2766, 0.0
        %v2782 = vmax.f32 %v2770, 0.0
        %v2783 = vmax.f32 %v2772, 0.0
        %v2784 = vmax.f32 %v2774, 0.0
        %v2785 = vmax.f32 %v2776, 0.0
        %s2786 = scalar_lea.vmem %s4, 48
        %v2787 = vld [vmem:[%s2786] sm:$0xf]
        %v2788 = vld [vmem:[%s2786 + $0x4] sm:$0xf]
        %v2789 = vld [vmem:[%s2786 + $0x8] sm:$0xf]
        %v2790 = vpack.c.bf16 %v2780, %v2778
        %v2791 = vpack.c.bf16 %v2781, %v2779
        %v2792 = vpack.c.bf16 %v2784, %v2782
        %v2793 = vpack.c.bf16 %v2785, %v2783
        %v2797 = vunpack.c.l.b16 %v2787
        %v2798 = vunpack.c.l.b16 %v2788
        %v2799 = vunpack.c.l.b16 %v2789
        %v2800 = vpack.c.b16 %v2798, %v2797
        %v2801 = vpack.c.b16 %v2799, %v2799
        %v2803 = vsel %vm413, %v2800, 0
        %v2806 = vsel %vm413, %v2801, 0
        %2808 = vmatprep.subr.bf16.mxu0 %v2791
        %2809 = vmatpush1.bf16.msra.mxu0 %v2790
        %2810 = vmatprep.subr.bf16.mxu0 %v2793
        %2811 = vmatpush1.bf16.msra.mxu0 %v2792
        %2812 = vmatprep.subr.bf16.mxu0 0
        %2813 = vmatpush1.bf16.msra.mxu0 0
        %2814 = vmatprep.subr.bf16.mxu0 0
        %2815 = vmatpush1.bf16.msra.mxu0 0
        %2816 = vmatprep.subr.bf16.mxu0 0
        %2817 = vmatpush1.bf16.msra.mxu0 0
        %2818 = vmatprep.subr.bf16.mxu0 0
        %2819 = vmatpush1.bf16.msra.mxu0 0
        %2820 = vmatprep.subr.bf16.mxu0 0
        %2821 = vmatpush1.bf16.msra.mxu0 0
        %2822 = vmatprep.subr.bf16.mxu0 0
        %2823 = vmatpush1.bf16.msra.mxu0 0
        %2824 = vmatprep.subr.bf16.mxu0 0
        %2825 = vmatpush1.bf16.msra.mxu0 0
        %2826 = vmatprep.subr.bf16.mxu0 0
        %2827 = vmatpush1.bf16.msra.mxu0 0
        %2828 = vmatprep.subr.bf16.mxu0 0
        %2829 = vmatpush1.bf16.msra.mxu0 0
        %2830 = vmatprep.subr.bf16.mxu0 0
        %2831 = vmatpush1.bf16.msra.mxu0 0
        %2832 = vmatprep.subr.bf16.mxu0 0
        %2833 = vmatpush1.bf16.msra.mxu0 0
        %2834 = vmatprep.subr.bf16.mxu0 0
        %2835 = vmatpush1.bf16.msra.mxu0 0
        %2836 = vmatprep.subr.bf16.mxu0 0
        %2837 = vmatpush1.bf16.msra.mxu0 0
        %2838 = vmatprep.subr.bf16.mxu0 0
        %2839 = vmatpush1.bf16.msra.mxu0 0
        %2840 = vmatprep.mubr.bf16.mxu0 0
        %2841 = vmatmul.mubr.bf16.gmra.mrb[0].mxu0 %v2803
        %v2842 = vpop.f32.mrb[0].mxu0
        %v2843 = vadd.f32 0.0, %v2842
        %v2844 = vpop.f32.mrb[0].mxu0
        %v2845 = vadd.f32 0.0, %v2844
        %v2846 = vpop.f32.mrb[0].mxu0
        %v2847 = vadd.f32 0.0, %v2846
        %v2848 = vpop.f32.mrb[0].mxu0
        %v2849 = vadd.f32 0.0, %v2848
        %2850 = vmatprep.mubr.bf16.mxu0 0
        %2851 = vmatmul.mubr.bf16.gmra.mrb[0].mxu0 %v2806
        %v2852 = vpop.f32.mrb[0].mxu0
        %v2853 = vadd.f32 0.0, %v2852
        %v2854 = vpop.f32.mrb[0].mxu0
        %v2855 = vadd.f32 0.0, %v2854
        %v2856 = vpop.f32.mrb[0].mxu0
        %v2857 = vpop.f32.mrb[0].mxu0
        %2858 = vdwg.mxu0
        %v2859 = vadd.f32 %v2338, %v2843
        %v2860 = vadd.f32 %v2339, %v2845
        %v2861 = vadd.f32 %v2340, %v2847
        %v2862 = vadd.f32 %v2341, %v2849
        %v2863 = vadd.f32 %v2342, %v2853
        %v2864 = vadd.f32 %v2343, %v2855
        %s2865 = scalar_lea.vmem %s1, 80
        %v2866 = vld [vmem:[%s2865] sm:$0xf]
        %v2867 = vld [vmem:[%s2865 + $0x4] sm:$0xf]
        %v2868 = vld [vmem:[%s2865 + $0x8] sm:$0xf]
        %v2869 = vld [vmem:[%s2865 + $0xc] sm:$0xf]
        %v2870 = vpack.c.bf16 %v2861, %v2859
        %v2871 = vpack.c.bf16 %v2862, %v2860
        %s2872 = scalar_lea.vmem %s3, 640
        %v2873 = vld [vmem:[%s2872] sm:$0xff]
        %v2874 = vld [vmem:[%s2872 + $0x8] sm:$0xff]
        %v2875 = vld [vmem:[%s2872 + $0x10] sm:$0xff]
        %v2876 = vld [vmem:[%s2872 + $0x18] sm:$0xff]
        %2878 = vset.pattern.permute.xlu0 0
        %2879 = vperm.xlu0 %2878, %v2873
        %v2880 = vpop.permute.xlu0 %2879
        %2883 = vset.pattern.permute.xlu0 0
        %2884 = vperm.xlu0 %2883, %v2874
        %v2885 = vpop.permute.xlu0 %2884
        %2888 = vset.pattern.permute.xlu0 0
        %2889 = vperm.xlu0 %2888, %v2875
        %v2890 = vpop.permute.xlu0 %2889
        %2893 = vset.pattern.permute.xlu0 0
        %2894 = vperm.xlu0 %2893, %v2876
        %v2895 = vpop.permute.xlu0 %2894
        %v2901 = vunpack.c.l.b16 %v2866
        %v2902 = vunpack.c.l.b16 %v2867
        %v2903 = vunpack.c.l.b16 %v2868
        %v2904 = vunpack.c.l.b16 %v2869
        %v2905 = vpack.c.b16 %v2902, %v2901
        %v2906 = vpack.c.b16 %v2904, %v2903
        %v2908 = vsel %vm302, %v2905, 0
        %v2911 = vsel %vm302, %v2906, 0
        %2913 = vmatprep.subr.bf16.mxu0 %v2871
        %2914 = vmatpush1.bf16.msra.mxu0 %v2870
        %2915 = vmatprep.subr.bf16.mxu0 0
        %2916 = vmatpush1.bf16.msra.mxu0 0
        %2917 = vmatprep.subr.bf16.mxu0 0
        %2918 = vmatpush1.bf16.msra.mxu0 0
        %2919 = vmatprep.subr.bf16.mxu0 0
        %2920 = vmatpush1.bf16.msra.mxu0 0
        %2921 = vmatprep.subr.bf16.mxu0 0
        %2922 = vmatpush1.bf16.msra.mxu0 0
        %2923 = vmatprep.subr.bf16.mxu0 0
        %2924 = vmatpush1.bf16.msra.mxu0 0
        %2925 = vmatprep.subr.bf16.mxu0 0
        %2926 = vmatpush1.bf16.msra.mxu0 0
        %2927 = vmatprep.subr.bf16.mxu0 0
        %2928 = vmatpush1.bf16.msra.mxu0 0
        %2929 = vmatprep.subr.bf16.mxu0 0
        %2930 = vmatpush1.bf16.msra.mxu0 0
        %2931 = vmatprep.subr.bf16.mxu0 0
        %2932 = vmatpush1.bf16.msra.mxu0 0
        %2933 = vmatprep.subr.bf16.mxu0 0
        %2934 = vmatpush1.bf16.msra.mxu0 0
        %2935 = vmatprep.subr.bf16.mxu0 0
        %2936 = vmatpush1.bf16.msra.mxu0 0
        %2937 = vmatprep.subr.bf16.mxu0 0
        %2938 = vmatpush1.bf16.msra.mxu0 0
        %2939 = vmatprep.subr.bf16.mxu0 0
        %2940 = vmatpush1.bf16.msra.mxu0 0
        %2941 = vmatprep.subr.bf16.mxu0 0
        %2942 = vmatpush1.bf16.msra.mxu0 0
        %2943 = vmatprep.subr.bf16.mxu0 0
        %2944 = vmatpush1.bf16.msra.mxu0 0
        %2945 = vmatprep.mubr.bf16.mxu0 0
        %2946 = vmatmul.mubr.bf16.gmra.mrb[0].mxu0 %v2908
        %v2947 = vpop.f32.mrb[0].mxu0
        %v2948 = vadd.f32 %v2880, %v2947
        %v2949 = vpop.f32.mrb[0].mxu0
        %v2950 = vadd.f32 %v2880, %v2949
        %v2951 = vpop.f32.mrb[0].mxu0
        %v2952 = vadd.f32 %v2885, %v2951
        %v2953 = vpop.f32.mrb[0].mxu0
        %v2954 = vadd.f32 %v2885, %v2953
        %2955 = vmatprep.mubr.bf16.mxu0 0
        %2956 = vmatmul.mubr.bf16.gmra.mrb[0].mxu0 %v2911
        %v2957 = vpop.f32.mrb[0].mxu0
        %v2958 = vadd.f32 %v2890, %v2957
        %v2959 = vpop.f32.mrb[0].mxu0
        %v2960 = vadd.f32 %v2890, %v2959
        %v2961 = vpop.f32.mrb[0].mxu0
        %v2962 = vadd.f32 %v2895, %v2961
        %v2963 = vpop.f32.mrb[0].mxu0
        %v2964 = vadd.f32 %v2895, %v2963
        %2965 = vdwg.mxu0
        %v2966 = vmax.f32 %v2948, 0.0
        %v2967 = vmax.f32 %v2950, 0.0
        %v2968 = vmax.f32 %v2952, 0.0
        %v2969 = vmax.f32 %v2954, 0.0
        %v2970 = vmax.f32 %v2958, 0.0
        %v2971 = vmax.f32 %v2960, 0.0
        %v2972 = vmax.f32 %v2962, 0.0
        %v2973 = vmax.f32 %v2964, 0.0
        %s2974 = scalar_lea.vmem %s2, 240
        %v2975 = vld [vmem:[%s2974] sm:$0xf]
        %v2976 = vld [vmem:[%s2974 + $0x4] sm:$0xf]
        %v2977 = vld [vmem:[%s2974 + $0x8] sm:$0xf]
        %v2978 = vld [vmem:[%s2974 + $0xc] sm:$0xf]
        %v2979 = vpack.c.bf16 %v2968, %v2966
        %v2980 = vpack.c.bf16 %v2969, %v2967
        %v2981 = vpack.c.bf16 %v2972, %v2970
        %v2982 = vpack.c.bf16 %v2973, %v2971
        %s2983 = scalar_lea.vmem %s3, 672
        %v2984 = vld [vmem:[%s2983] sm:$0xff]
        %v2985 = vld [vmem:[%s2983 + $0x8] sm:$0xff]
        %v2986 = vld [vmem:[%s2983 + $0x10] sm:$0xff]
        %v2987 = vld [vmem:[%s2983 + $0x18] sm:$0xff]
        %2989 = vset.pattern.permute.xlu0 0
        %2990 = vperm.xlu0 %2989, %v2984
        %v2991 = vpop.permute.xlu0 %2990
        %2994 = vset.pattern.permute.xlu0 0
        %2995 = vperm.xlu0 %2994, %v2985
        %v2996 = vpop.permute.xlu0 %2995
        %2999 = vset.pattern.permute.xlu0 0
        %3000 = vperm.xlu0 %2999, %v2986
        %v3001 = vpop.permute.xlu0 %3000
        %3004 = vset.pattern.permute.xlu0 0
        %3005 = vperm.xlu0 %3004, %v2987
        %v3006 = vpop.permute.xlu0 %3005
        %v3012 = vunpack.c.l.b16 %v2975
        %v3013 = vunpack.c.l.b16 %v2976
        %v3014 = vunpack.c.l.b16 %v2977
        %v3015 = vunpack.c.l.b16 %v2978
        %v3016 = vpack.c.b16 %v3013, %v3012
        %v3017 = vpack.c.b16 %v3015, %v3014
        %v3019 = vsel %vm413, %v3016, 0
        %v3022 = vsel %vm413, %v3017, 0
        %3024 = vmatprep.subr.bf16.mxu0 %v2980
        %3025 = vmatpush1.bf16.msra.mxu0 %v2979
        %3026 = vmatprep.subr.bf16.mxu0 %v2982
        %3027 = vmatpush1.bf16.msra.mxu0 %v2981
        %3028 = vmatprep.subr.bf16.mxu0 0
        %3029 = vmatpush1.bf16.msra.mxu0 0
        %3030 = vmatprep.subr.bf16.mxu0 0
        %3031 = vmatpush1.bf16.msra.mxu0 0
        %3032 = vmatprep.subr.bf16.mxu0 0
        %3033 = vmatpush1.bf16.msra.mxu0 0
        %3034 = vmatprep.subr.bf16.mxu0 0
        %3035 = vmatpush1.bf16.msra.mxu0 0
        %3036 = vmatprep.subr.bf16.mxu0 0
        %3037 = vmatpush1.bf16.msra.mxu0 0
        %3038 = vmatprep.subr.bf16.mxu0 0
        %3039 = vmatpush1.bf16.msra.mxu0 0
        %3040 = vmatprep.subr.bf16.mxu0 0
        %3041 = vmatpush1.bf16.msra.mxu0 0
        %3042 = vmatprep.subr.bf16.mxu0 0
        %3043 = vmatpush1.bf16.msra.mxu0 0
        %3044 = vmatprep.subr.bf16.mxu0 0
        %3045 = vmatpush1.bf16.msra.mxu0 0
        %3046 = vmatprep.subr.bf16.mxu0 0
        %3047 = vmatpush1.bf16.msra.mxu0 0
        %3048 = vmatprep.subr.bf16.mxu0 0
        %3049 = vmatpush1.bf16.msra.mxu0 0
        %3050 = vmatprep.subr.bf16.mxu0 0
        %3051 = vmatpush1.bf16.msra.mxu0 0
        %3052 = vmatprep.subr.bf16.mxu0 0
        %3053 = vmatpush1.bf16.msra.mxu0 0
        %3054 = vmatprep.subr.bf16.mxu0 0
        %3055 = vmatpush1.bf16.msra.mxu0 0
        %3056 = vmatprep.mubr.bf16.mxu0 0
        %3057 = vmatmul.mubr.bf16.gmra.mrb[0].mxu0 %v3019
        %v3058 = vpop.f32.mrb[0].mxu0
        %v3059 = vadd.f32 %v2991, %v3058
        %v3060 = vpop.f32.mrb[0].mxu0
        %v3061 = vadd.f32 %v2991, %v3060
        %v3062 = vpop.f32.mrb[0].mxu0
        %v3063 = vadd.f32 %v2996, %v3062
        %v3064 = vpop.f32.mrb[0].mxu0
        %v3065 = vadd.f32 %v2996, %v3064
        %3066 = vmatprep.mubr.bf16.mxu0 0
        %3067 = vmatmul.mubr.bf16.gmra.mrb[0].mxu0 %v3022
        %v3068 = vpop.f32.mrb[0].mxu0
        %v3069 = vadd.f32 %v3001, %v3068
        %v3070 = vpop.f32.mrb[0].mxu0
        %v3071 = vadd.f32 %v3001, %v3070
        %v3072 = vpop.f32.mrb[0].mxu0
        %v3073 = vadd.f32 %v3006, %v3072
        %v3074 = vpop.f32.mrb[0].mxu0
        %v3075 = vadd.f32 %v3006, %v3074
        %3076 = vdwg.mxu0
        %v3077 = vmax.f32 %v3059, 0.0
        %v3078 = vmax.f32 %v3061, 0.0
        %v3079 = vmax.f32 %v3063, 0.0
        %v3080 = vmax.f32 %v3065, 0.0
        %v3081 = vmax.f32 %v3069, 0.0
        %v3082 = vmax.f32 %v3071, 0.0
        %v3083 = vmax.f32 %v3073, 0.0
        %v3084 = vmax.f32 %v3075, 0.0
        %s3085 = scalar_lea.vmem %s2, 256
        %v3086 = vld [vmem:[%s3085] sm:$0xf]
        %v3087 = vld [vmem:[%s3085 + $0x4] sm:$0xf]
        %v3088 = vld [vmem:[%s3085 + $0x8] sm:$0xf]
        %v3089 = vld [vmem:[%s3085 + $0xc] sm:$0xf]
        %v3090 = vpack.c.bf16 %v3079, %v3077
        %v3091 = vpack.c.bf16 %v3080, %v3078
        %v3092 = vpack.c.bf16 %v3083, %v3081
        %v3093 = vpack.c.bf16 %v3084, %v3082
        %s3094 = scalar_lea.vmem %s3, 704
        %v3095 = vld [vmem:[%s3094] sm:$0xff]
        %v3096 = vld [vmem:[%s3094 + $0x8] sm:$0xff]
        %v3097 = vld [vmem:[%s3094 + $0x10] sm:$0xff]
        %v3098 = vld [vmem:[%s3094 + $0x18] sm:$0xff]
        %3100 = vset.pattern.permute.xlu0 0
        %3101 = vperm.xlu0 %3100, %v3095
        %v3102 = vpop.permute.xlu0 %3101
        %3105 = vset.pattern.permute.xlu0 0
        %3106 = vperm.xlu0 %3105, %v3096
        %v3107 = vpop.permute.xlu0 %3106
        %3110 = vset.pattern.permute.xlu0 0
        %3111 = vperm.xlu0 %3110, %v3097
        %v3112 = vpop.permute.xlu0 %3111
        %3115 = vset.pattern.permute.xlu0 0
        %3116 = vperm.xlu0 %3115, %v3098
        %v3117 = vpop.permute.xlu0 %3116
        %v3123 = vunpack.c.l.b16 %v3086
        %v3124 = vunpack.c.l.b16 %v3087
        %v3125 = vunpack.c.l.b16 %v3088
        %v3126 = vunpack.c.l.b16 %v3089
        %v3127 = vpack.c.b16 %v3124, %v3123
        %v3128 = vpack.c.b16 %v3126, %v3125
        %v3130 = vsel %vm413, %v3127, 0
        %v3133 = vsel %vm413, %v3128, 0
        %3135 = vmatprep.subr.bf16.mxu0 %v3091
        %3136 = vmatpush1.bf16.msra.mxu0 %v3090
        %3137 = vmatprep.subr.bf16.mxu0 %v3093
        %3138 = vmatpush1.bf16.msra.mxu0 %v3092
        %3139 = vmatprep.subr.bf16.mxu0 0
        %3140 = vmatpush1.bf16.msra.mxu0 0
        %3141 = vmatprep.subr.bf16.mxu0 0
        %3142 = vmatpush1.bf16.msra.mxu0 0
        %3143 = vmatprep.subr.bf16.mxu0 0
        %3144 = vmatpush1.bf16.msra.mxu0 0
        %3145 = vmatprep.subr.bf16.mxu0 0
        %3146 = vmatpush1.bf16.msra.mxu0 0
        %3147 = vmatprep.subr.bf16.mxu0 0
        %3148 = vmatpush1.bf16.msra.mxu0 0
        %3149 = vmatprep.subr.bf16.mxu0 0
        %3150 = vmatpush1.bf16.msra.mxu0 0
        %3151 = vmatprep.subr.bf16.mxu0 0
        %3152 = vmatpush1.bf16.msra.mxu0 0
        %3153 = vmatprep.subr.bf16.mxu0 0
        %3154 = vmatpush1.bf16.msra.mxu0 0
        %3155 = vmatprep.subr.bf16.mxu0 0
        %3156 = vmatpush1.bf16.msra.mxu0 0
        %3157 = vmatprep.subr.bf16.mxu0 0
        %3158 = vmatpush1.bf16.msra.mxu0 0
        %3159 = vmatprep.subr.bf16.mxu0 0
        %3160 = vmatpush1.bf16.msra.mxu0 0
        %3161 = vmatprep.subr.bf16.mxu0 0
        %3162 = vmatpush1.bf16.msra.mxu0 0
        %3163 = vmatprep.subr.bf16.mxu0 0
        %3164 = vmatpush1.bf16.msra.mxu0 0
        %3165 = vmatprep.subr.bf16.mxu0 0
        %3166 = vmatpush1.bf16.msra.mxu0 0
        %3167 = vmatprep.mubr.bf16.mxu0 0
        %3168 = vmatmul.mubr.bf16.gmra.mrb[0].mxu0 %v3130
        %v3169 = vpop.f32.mrb[0].mxu0
        %v3170 = vadd.f32 %v3102, %v3169
        %v3171 = vpop.f32.mrb[0].mxu0
        %v3172 = vadd.f32 %v3102, %v3171
        %v3173 = vpop.f32.mrb[0].mxu0
        %v3174 = vadd.f32 %v3107, %v3173
        %v3175 = vpop.f32.mrb[0].mxu0
        %v3176 = vadd.f32 %v3107, %v3175
        %3177 = vmatprep.mubr.bf16.mxu0 0
        %3178 = vmatmul.mubr.bf16.gmra.mrb[0].mxu0 %v3133
        %v3179 = vpop.f32.mrb[0].mxu0
        %v3180 = vadd.f32 %v3112, %v3179
        %v3181 = vpop.f32.mrb[0].mxu0
        %v3182 = vadd.f32 %v3112, %v3181
        %v3183 = vpop.f32.mrb[0].mxu0
        %v3184 = vadd.f32 %v3117, %v3183
        %v3185 = vpop.f32.mrb[0].mxu0
        %v3186 = vadd.f32 %v3117, %v3185
        %3187 = vdwg.mxu0
        %v3188 = vmax.f32 %v3170, 0.0
        %v3189 = vmax.f32 %v3172, 0.0
        %v3190 = vmax.f32 %v3174, 0.0
        %v3191 = vmax.f32 %v3176, 0.0
        %v3192 = vmax.f32 %v3180, 0.0
        %v3193 = vmax.f32 %v3182, 0.0
        %v3194 = vmax.f32 %v3184, 0.0
        %v3195 = vmax.f32 %v3186, 0.0
        %s3196 = scalar_lea.vmem %s2, 272
        %v3197 = vld [vmem:[%s3196] sm:$0xf]
        %v3198 = vld [vmem:[%s3196 + $0x4] sm:$0xf]
        %v3199 = vld [vmem:[%s3196 + $0x8] sm:$0xf]
        %v3200 = vld [vmem:[%s3196 + $0xc] sm:$0xf]
        %v3201 = vpack.c.bf16 %v3190, %v3188
        %v3202 = vpack.c.bf16 %v3191, %v3189
        %v3203 = vpack.c.bf16 %v3194, %v3192
        %v3204 = vpack.c.bf16 %v3195, %v3193
        %s3205 = scalar_lea.vmem %s3, 736
        %v3206 = vld [vmem:[%s3205] sm:$0xff]
        %v3207 = vld [vmem:[%s3205 + $0x8] sm:$0xff]
        %v3208 = vld [vmem:[%s3205 + $0x10] sm:$0xff]
        %v3209 = vld [vmem:[%s3205 + $0x18] sm:$0xff]
        %3211 = vset.pattern.permute.xlu0 0
        %3212 = vperm.xlu0 %3211, %v3206
        %v3213 = vpop.permute.xlu0 %3212
        %3216 = vset.pattern.permute.xlu0 0
        %3217 = vperm.xlu0 %3216, %v3207
        %v3218 = vpop.permute.xlu0 %3217
        %3221 = vset.pattern.permute.xlu0 0
        %3222 = vperm.xlu0 %3221, %v3208
        %v3223 = vpop.permute.xlu0 %3222
        %3226 = vset.pattern.permute.xlu0 0
        %3227 = vperm.xlu0 %3226, %v3209
        %v3228 = vpop.permute.xlu0 %3227
        %v3234 = vunpack.c.l.b16 %v3197
        %v3235 = vunpack.c.l.b16 %v3198
        %v3236 = vunpack.c.l.b16 %v3199
        %v3237 = vunpack.c.l.b16 %v3200
        %v3238 = vpack.c.b16 %v3235, %v3234
        %v3239 = vpack.c.b16 %v3237, %v3236
        %v3241 = vsel %vm413, %v3238, 0
        %v3244 = vsel %vm413, %v3239, 0
        %3246 = vmatprep.subr.bf16.mxu0 %v3202
        %3247 = vmatpush1.bf16.msra.mxu0 %v3201
        %3248 = vmatprep.subr.bf16.mxu0 %v3204
        %3249 = vmatpush1.bf16.msra.mxu0 %v3203
        %3250 = vmatprep.subr.bf16.mxu0 0
        %3251 = vmatpush1.bf16.msra.mxu0 0
        %3252 = vmatprep.subr.bf16.mxu0 0
        %3253 = vmatpush1.bf16.msra.mxu0 0
        %3254 = vmatprep.subr.bf16.mxu0 0
        %3255 = vmatpush1.bf16.msra.mxu0 0
        %3256 = vmatprep.subr.bf16.mxu0 0
        %3257 = vmatpush1.bf16.msra.mxu0 0
        %3258 = vmatprep.subr.bf16.mxu0 0
        %3259 = vmatpush1.bf16.msra.mxu0 0
        %3260 = vmatprep.subr.bf16.mxu0 0
        %3261 = vmatpush1.bf16.msra.mxu0 0
        %3262 = vmatprep.subr.bf16.mxu0 0
        %3263 = vmatpush1.bf16.msra.mxu0 0
        %3264 = vmatprep.subr.bf16.mxu0 0
        %3265 = vmatpush1.bf16.msra.mxu0 0
        %3266 = vmatprep.subr.bf16.mxu0 0
        %3267 = vmatpush1.bf16.msra.mxu0 0
        %3268 = vmatprep.subr.bf16.mxu0 0
        %3269 = vmatpush1.bf16.msra.mxu0 0
        %3270 = vmatprep.subr.bf16.mxu0 0
        %3271 = vmatpush1.bf16.msra.mxu0 0
        %3272 = vmatprep.subr.bf16.mxu0 0
        %3273 = vmatpush1.bf16.msra.mxu0 0
        %3274 = vmatprep.subr.bf16.mxu0 0
        %3275 = vmatpush1.bf16.msra.mxu0 0
        %3276 = vmatprep.subr.bf16.mxu0 0
        %3277 = vmatpush1.bf16.msra.mxu0 0
        %3278 = vmatprep.mubr.bf16.mxu0 0
        %3279 = vmatmul.mubr.bf16.gmra.mrb[0].mxu0 %v3241
        %v3280 = vpop.f32.mrb[0].mxu0
        %v3281 = vadd.f32 %v3213, %v3280
        %v3282 = vpop.f32.mrb[0].mxu0
        %v3283 = vadd.f32 %v3213, %v3282
        %v3284 = vpop.f32.mrb[0].mxu0
        %v3285 = vadd.f32 %v3218, %v3284
        %v3286 = vpop.f32.mrb[0].mxu0
        %v3287 = vadd.f32 %v3218, %v3286
        %3288 = vmatprep.mubr.bf16.mxu0 0
        %3289 = vmatmul.mubr.bf16.gmra.mrb[0].mxu0 %v3244
        %v3290 = vpop.f32.mrb[0].mxu0
        %v3291 = vadd.f32 %v3223, %v3290
        %v3292 = vpop.f32.mrb[0].mxu0
        %v3293 = vadd.f32 %v3223, %v3292
        %v3294 = vpop.f32.mrb[0].mxu0
        %v3295 = vadd.f32 %v3228, %v3294
        %v3296 = vpop.f32.mrb[0].mxu0
        %v3297 = vadd.f32 %v3228, %v3296
        %3298 = vdwg.mxu0
        %v3299 = vmax.f32 %v3281, 0.0
        %v3300 = vmax.f32 %v3283, 0.0
        %v3301 = vmax.f32 %v3285, 0.0
        %v3302 = vmax.f32 %v3287, 0.0
        %v3303 = vmax.f32 %v3291, 0.0
        %v3304 = vmax.f32 %v3293, 0.0
        %v3305 = vmax.f32 %v3295, 0.0
        %v3306 = vmax.f32 %v3297, 0.0
        %s3307 = scalar_lea.vmem %s4, 60
        %v3308 = vld [vmem:[%s3307] sm:$0xf]
        %v3309 = vld [vmem:[%s3307 + $0x4] sm:$0xf]
        %v3310 = vld [vmem:[%s3307 + $0x8] sm:$0xf]
        %v3311 = vpack.c.bf16 %v3301, %v3299
        %v3312 = vpack.c.bf16 %v3302, %v3300
        %v3313 = vpack.c.bf16 %v3305, %v3303
        %v3314 = vpack.c.bf16 %v3306, %v3304
        %v3318 = vunpack.c.l.b16 %v3308
        %v3319 = vunpack.c.l.b16 %v3309
        %v3320 = vunpack.c.l.b16 %v3310
        %v3321 = vpack.c.b16 %v3319, %v3318
        %v3322 = vpack.c.b16 %v3320, %v3320
        %v3324 = vsel %vm413, %v3321, 0
        %v3327 = vsel %vm413, %v3322, 0
        %3329 = vmatprep.subr.bf16.mxu0 %v3312
        %3330 = vmatpush1.bf16.msra.mxu0 %v3311
        %3331 = vmatprep.subr.bf16.mxu0 %v3314
        %3332 = vmatpush1.bf16.msra.mxu0 %v3313
        %3333 = vmatprep.subr.bf16.mxu0 0
        %3334 = vmatpush1.bf16.msra.mxu0 0
        %3335 = vmatprep.subr.bf16.mxu0 0
        %3336 = vmatpush1.bf16.msra.mxu0 0
        %3337 = vmatprep.subr.bf16.mxu0 0
        %3338 = vmatpush1.bf16.msra.mxu0 0
        %3339 = vmatprep.subr.bf16.mxu0 0
        %3340 = vmatpush1.bf16.msra.mxu0 0
        %3341 = vmatprep.subr.bf16.mxu0 0
        %3342 = vmatpush1.bf16.msra.mxu0 0
        %3343 = vmatprep.subr.bf16.mxu0 0
        %3344 = vmatpush1.bf16.msra.mxu0 0
        %3345 = vmatprep.subr.bf16.mxu0 0
        %3346 = vmatpush1.bf16.msra.mxu0 0
        %3347 = vmatprep.subr.bf16.mxu0 0
        %3348 = vmatpush1.bf16.msra.mxu0 0
        %3349 = vmatprep.subr.bf16.mxu0 0
        %3350 = vmatpush1.bf16.msra.mxu0 0
        %3351 = vmatprep.subr.bf16.mxu0 0
        %3352 = vmatpush1.bf16.msra.mxu0 0
        %3353 = vmatprep.subr.bf16.mxu0 0
        %3354 = vmatpush1.bf16.msra.mxu0 0
        %3355 = vmatprep.subr.bf16.mxu0 0
        %3356 = vmatpush1.bf16.msra.mxu0 0
        %3357 = vmatprep.subr.bf16.mxu0 0
        %3358 = vmatpush1.bf16.msra.mxu0 0
        %3359 = vmatprep.subr.bf16.mxu0 0
        %3360 = vmatpush1.bf16.msra.mxu0 0
        %3361 = vmatprep.mubr.bf16.mxu0 0
        %3362 = vmatmul.mubr.bf16.gmra.mrb[0].mxu0 %v3324
        %v3363 = vpop.f32.mrb[0].mxu0
        %v3364 = vadd.f32 0.0, %v3363
        %v3365 = vpop.f32.mrb[0].mxu0
        %v3366 = vadd.f32 0.0, %v3365
        %v3367 = vpop.f32.mrb[0].mxu0
        %v3368 = vadd.f32 0.0, %v3367
        %v3369 = vpop.f32.mrb[0].mxu0
        %v3370 = vadd.f32 0.0, %v3369
        %3371 = vmatprep.mubr.bf16.mxu0 0
        %3372 = vmatmul.mubr.bf16.gmra.mrb[0].mxu0 %v3327
        %v3373 = vpop.f32.mrb[0].mxu0
        %v3374 = vadd.f32 0.0, %v3373
        %v3375 = vpop.f32.mrb[0].mxu0
        %v3376 = vadd.f32 0.0, %v3375
        %v3377 = vpop.f32.mrb[0].mxu0
        %v3378 = vpop.f32.mrb[0].mxu0
        %3379 = vdwg.mxu0
        %v3380 = vadd.f32 %v2859, %v3364
        %v3381 = vadd.f32 %v2860, %v3366
        %v3382 = vadd.f32 %v2861, %v3368
        %v3383 = vadd.f32 %v2862, %v3370
        %v3384 = vadd.f32 %v2863, %v3374
        %v3385 = vadd.f32 %v2864, %v3376
        %3386 = vst [vmem:[%s252] sm:$0xff] %v3380
        %3387 = vst [vmem:[%s252 + $0x8] sm:$0xff] %v3381
        %3388 = vst [vmem:[%s252 + $0x10] sm:$0xff] %v3382
        %3389 = vst [vmem:[%s252 + $0x18] sm:$0xff] %v3383
        %3390 = vst [vmem:[%s252 + $0x20] sm:$0xff] %v3384
        %3391 = vst [vmem:[%s252 + $0x28] sm:$0xff] %v3385
        %s3392 = sand.u32 %s137, 1
        %s3393 = scalar_lea.sflag [#allocation4], %s3392
        %s3394 = sand.u32 %s137, 1
        %s3395 = smul.addr %s3394, 48
        %s3396 = scalar_lea.vmem [#allocation3], %s3395
        // Predicated region
        $region64: #{tpu_custom_call.1} parent=58 // pred_check
          %p3397 = pneg %p147
        $region65: #{tpu_custom_call.1} parent=58 // pred_check_branch
          %3399 = sbr.rel (%p3397) target = $region67
        $region66: #{tpu_custom_call.1} parent=58 // pred_region
          %s3400 = smul.u32 2, %s19
          %s3402 = ssub.s32 768, 768
          %3403 = vsyncadd %s3393, %s3402
          %s3404 = smul.addr %s3400, 128
          %s3405 = scalar_lea.hbm %s5, %s3404
          %s3406 = sshll.u32 %s3396, 4
          %s3407 = int_to_ptr.vmem [resolvable:$true] %s3406
          %3412 = dma.vmem_to_hbm [thread:$0]  %s3407, 768, %s3405, %s3393, 256, 512, 16
        $region67: #{tpu_custom_call.1} parent=58 // pred_fallthru
          _
      $region59: #{tpu_custom_call.1} parent=5 // pred_fallthru
        _
      %p3413 = scmp.le.s32.totalorder 2, %s14
      // Predicated region
      $region68: #{tpu_custom_call.1} parent=5 // pred_check
        %p3414 = pneg %p3413
      $region69: #{tpu_custom_call.1} parent=5 // pred_check_branch
        %3416 = sbr.rel (%p3414) target = $region71
      $region70: #{tpu_custom_call.1} parent=5 // pred_region
        %s3417 = ssub.s32 %s14, 2
        // Predicated region
        $region72: #{tpu_custom_call.1} parent=70 // pred_check
          %p3418 = pneg %p153
        $region73: #{tpu_custom_call.1} parent=70 // pred_check_branch
          %3420 = sbr.rel (%p3418) target = $region75
        $region74: #{tpu_custom_call.1} parent=70 // pred_region
          %s3421 = sand.u32 %s138, 1
          %s3422 = scalar_lea.sflag [#allocation4], %s3421
          %s3423 = sand.u32 %s138, 1
          %s3424 = smul.addr %s3423, 48
          %s3425 = scalar_lea.vmem [#allocation3], %s3424
          %3426 = dma.done %s3422, 768
        $region75: #{tpu_custom_call.1} parent=70 // pred_fallthru
          _
      $region71: #{tpu_custom_call.1} parent=5 // pred_fallthru
        _
    $region6: #{tpu_custom_call.1} parent=1 // loop_footer
      %s18 = sadd.s32 1, %s14
    $region7: #{tpu_custom_call.1} parent=1 // loop_footer_branch
      %13 = sbr.rel target = $region3
    $region8: #{tpu_custom_call.1} parent=1 // loop_exit
      _
    %3427 = vsyncpa [#allocation4], 1
    %s3428 = scalar_lea.sflag [#allocation4], 1
    %3429 = vsyncpa %s3428, 1

</llo_original>
